<compile_context>
chip_gen: v5e
topology: v5e:2x2
jax: 0.10.0
libtpu: 0.0.40
codegen_flags: <defaults>
</compile_context>

<pallas_src>
import jax
import jax.numpy as jnp
from jax.experimental import pallas as pl
from jax.experimental.pallas import tpu as pltpu


def _round_up(n, m):
    return ((n + m - 1) // m) * m


def _pick_strip_rows(H, W):
    """Row-strip height TH: divides H, keeps the output strip lane-dense
    (TH*W a multiple of 128) and the 2-row halo recompute small."""
    cands = [th for th in range(1, H + 1)
             if H % th == 0 and (th * W) % 128 == 0]
    if not cands:
        return H  # single full-image strip; full-extent block stays legal
    for min_th in (8, 4, 1):
        good = [th for th in cands if th >= min_th]
        if good:
            return good[0]
    return cands[-1]


# ----------------------------------------------------------------------------
# Fused kernel: conv3x3+bias+ReLU -> conv3x3+bias+ReLU for one row strip of one
# batch element.
# ----------------------------------------------------------------------------
def _fused_backbone_kernel(x_ref, w1_ref, b1_ref, w2_ref, b2_ref, o_ref, h_ref):
    # x_ref : (1, H+4, W+2, Cin)   bf16, input padded by (2,2) rows / (1,1) cols
    # w1_ref: (9*Cin, Chp)         bf16, im2col-folded layer-1 weights (tap-major)
    # b1_ref: (1, Chp)             f32
    # w2_ref: (9, Chp, Cop)        bf16, tap-major (k = kh*3 + kw)
    # b2_ref: (1, Cop)             f32
    # o_ref : (1, Cout, TH*W)      f32, channel-major flattened output strip
    # h_ref : (TH+2, W+2, Chp)     bf16 scratch: hidden strip + zero ring
    Wp, Cin = x_ref.shape[2], x_ref.shape[3]
    W = Wp - 2
    TH = h_ref.shape[0] - 2
    Chp = w1_ref.shape[-1]
    Cop = w2_ref.shape[-1]
    Cout = o_ref.shape[1]

    s = pl.program_id(1)
    row0 = pl.multiple_of(s * TH, TH)

    # ---- layer 1: single MXU dot with K = 9*Cin over an in-VMEM im2col tile.
    # xs covers padded rows [row0, row0+TH+4) -> hidden rows [row0-1, row0+TH].
    xs = x_ref[:, pl.ds(row0, TH + 4), :, :]              # (1, TH+4, W+2, Cin) bf16
    taps = []
    for kh in range(3):
        for kw in range(3):
            taps.append(
                xs[:, kh:kh + TH + 2, kw:kw + W, :].reshape((TH + 2) * W, Cin))
    im2col = jnp.concatenate(taps, axis=-1)               # ((TH+2)*W, 9*Cin) bf16
    y1 = jnp.dot(im2col, w1_ref[...], preferred_element_type=jnp.float32)
    y1 = jnp.maximum(y1 + b1_ref[...], 0.0).astype(jnp.bfloat16)
    y1 = y1.reshape(TH + 2, W, Chp)

    # ---- stage hidden strip in bf16 VMEM; zero W-border columns come from the
    # concat, so the full store covers the scratch (no memset).
    zcol = jnp.zeros((TH + 2, 1, Chp), jnp.bfloat16)
    h_ref[...] = jnp.concatenate([zcol, y1, zcol], axis=1)

    # Halo rows outside the image (conv2's SAME padding) must be exactly zero.
    @pl.when(s == 0)
    def _():
        h_ref[0:1] = jnp.zeros((1, Wp, Chp), jnp.bfloat16)

    @pl.when(s == pl.num_programs(1) - 1)
    def _():
        h_ref[TH + 1:TH + 2] = jnp.zeros((1, Wp, Chp), jnp.bfloat16)

    # ---- layer 2: 9 full-K (=Chp) MXU dots over the staged bf16 hidden strip.
    acc = jnp.zeros((TH * W, Cop), jnp.float32)
    for kh in range(3):
        for kw in range(3):
            tap = h_ref[kh:kh + TH, kw:kw + W, :].reshape(TH * W, Chp)
            acc = acc + jnp.dot(tap, w2_ref[kh * 3 + kw],
                                preferred_element_type=jnp.float32)
    out = jnp.maximum(acc + b2_ref[...], 0.0)             # (TH*W, Cop) f32

    # Compact channel-major store: XLU transpose, then only the REAL output
    # channels go to HBM (lane dim TH*W stays dense).
    o_ref[...] = (jnp.transpose(out)[:Cout, :]
                  .reshape(1, Cout, TH * W).astype(o_ref.dtype))


def _fused_backbone_call(xp, w1f, b1p, w2p, b2p, *, th, cout):
    """xp: (B, H+4, W+2, Cin) bf16 pre-padded NHWC. Returns (B, Cout, H*W) f32."""
    B, Hp4, Wp, Cin = xp.shape
    H, W = Hp4 - 4, Wp - 2
    Chp = w1f.shape[-1]
    Cop = w2p.shape[-1]
    S = H // th

    flops = 2 * B * S * ((th + 2) * W * (9 * Cin) * Chp + 9 * th * W * Chp * Cop)
    bytes_accessed = (xp.size * 2 + w1f.size * 2 + w2p.size * 2
                      + b1p.size * 4 + b2p.size * 4 + B * cout * H * W * 4)

    return pl.pallas_call(
        _fused_backbone_kernel,
        out_shape=jax.ShapeDtypeStruct((B, cout, H * W), jnp.float32),
        grid=(B, S),
        in_specs=[
            # full padded image, constant over the strip axis -> DMA'd once per image
            pl.BlockSpec((1, Hp4, Wp, Cin), lambda b, s: (b, 0, 0, 0)),
            pl.BlockSpec((9 * Cin, Chp), lambda b, s: (0, 0)),     # weights resident
            pl.BlockSpec((1, Chp), lambda b, s: (0, 0)),
            pl.BlockSpec((9, Chp, Cop), lambda b, s: (0, 0, 0)),
            pl.BlockSpec((1, Cop), lambda b, s: (0, 0)),
        ],
        out_specs=pl.BlockSpec((1, cout, th * W), lambda b, s: (b, 0, s)),
        scratch_shapes=[pltpu.VMEM((th + 2, Wp, Chp), jnp.bfloat16)],
        compiler_params=pltpu.CompilerParams(
            dimension_semantics=("parallel", "parallel")),
        cost_estimate=pl.CostEstimate(
            flops=flops, transcendentals=0, bytes_accessed=bytes_accessed),
    )(xp, w1f, b1p, w2p, b2p)


# ----------------------------------------------------------------------------
# Backbone wrapper — mirrors the PyTorch module's forward() semantics:
#   out = self._model(x); check out.shape[1:] == self.output_shape(x.shape[1:])
# ----------------------------------------------------------------------------
class Backbone:
    def __init__(self, input_shape, hidden_channels, out_channels, key):
        # TODO(synk): restore_path / torch.load checkpoint restore has no Pallas
        # equivalent here — params are initialized synthetically.
        self._input_shape = tuple(input_shape)        # (C, H, W)
        cin, _, _ = self._input_shape
        self._hidden_channels = hidden_channels
        self._out_channels = out_channels

        k1, k2, k3, k4 = jax.random.split(key, 4)
        s1 = 1.0 / jnp.sqrt(9.0 * cin)
        s2 = 1.0 / jnp.sqrt(9.0 * hidden_channels)
        self.w1 = jax.random.normal(k1, (3, 3, cin, hidden_channels), jnp.float32) * s1
        self.b1 = jax.random.normal(k2, (hidden_channels,), jnp.float32) * s1
        self.w2 = jax.random.normal(k3, (3, 3, hidden_channels, out_channels), jnp.float32) * s2
        self.b2 = jax.random.normal(k4, (out_channels,), jnp.float32) * s2

        # Pre-pack params: channel dims zero-padded to a lane-dense multiple of
        # 128, layer-1 weights folded to the im2col layout (K = 9*Cin), bf16.
        chp = _round_up(max(hidden_channels, 1), 128)
        cop = _round_up(max(out_channels, 1), 128)
        w1p = jnp.zeros((3, 3, cin, chp), jnp.float32)
        w1p = w1p.at[..., :hidden_channels].set(self.w1)
        self._w1f = w1p.reshape(9 * cin, chp).astype(jnp.bfloat16)
        w2p = jnp.zeros((3, 3, chp, cop), jnp.float32)
        w2p = w2p.at[:, :, :hidden_channels, :out_channels].set(self.w2)
        self._w2p = w2p.reshape(9, chp, cop).astype(jnp.bfloat16)
        self._b1p = jnp.zeros((1, chp), jnp.float32).at[0, :hidden_channels].set(self.b1)
        self._b2p = jnp.zeros((1, cop), jnp.float32).at[0, :out_channels].set(self.b2)

        self._model_jit = jax.jit(self._model)

    def output_shape(self, input_shape=None):
        if input_shape is None:
            input_shape = self._input_shape
        c, h, w = input_shape
        # both convs are 3x3 / stride 1 / pad 1 -> spatial preserved
        return (self._out_channels, h, w)

    def _model(self, x_nchw):
        B, _, H, W = x_nchw.shape
        # single NCHW -> NHWC layout pass + bf16 cast + spatial zero-pad
        x = jnp.transpose(x_nchw, (0, 2, 3, 1)).astype(jnp.bfloat16)
        xp = jnp.pad(x, ((0, 0), (2, 2), (1, 1), (0, 0)))
        th = _pick_strip_rows(H, W)
        y = _fused_backbone_call(xp, self._w1f, self._b1p, self._w2p, self._b2p,
                                 th=th, cout=self._out_channels)
        # kernel output is already channel-major; just un-flatten the spatial dim
        return y.reshape(B, self._out_channels, H, W)

    def forward(self, x):
        out = self._model_jit(x)
        expect = list(self.output_shape(list(x.shape)[1:]))
        got = list(out.shape)[1:]
        if expect != got:
            raise ValueError(
                f"Size mismatch: expect size {expect}, but got size {got}")
        return out

    __call__ = forward


# ----------------------------------------------------------------------------
# Pure-XLA reference (no Pallas) matching the kernel's bf16-operand / f32-acc
# matmul numerics, for a tight correctness check.
# ----------------------------------------------------------------------------
def _ref_conv3x3_bias_relu(x_nhwc, w_taps, bias):
    B, H, W, _ = x_nhwc.shape
    cout = w_taps.shape[-1]
    xp = jnp.pad(x_nhwc, ((0, 0), (1, 1), (1, 1), (0, 0)))
    xb = xp.astype(jnp.bfloat16).astype(jnp.float32)
    wb = w_taps.astype(jnp.bfloat16).astype(jnp.float32)
    y = jnp.zeros((B, H, W, cout), jnp.float32)
    for kh in range(3):
        for kw in range(3):
            y = y + jnp.einsum("bhwc,cd->bhwd",
                               xb[:, kh:kh + H, kw:kw + W, :], wb[kh, kw],
                               precision=jax.lax.Precision.HIGHEST)
    return jnp.maximum(y + bias, 0.0)


if __name__ == "__main__":
    key = jax.random.PRNGKey(0)
    k_in, k_params = jax.random.split(key)

    B, C, H, W = 2, 4, 16, 16          # small NCHW input
    hidden, cout = 8, 8

    x = jax.random.normal(k_in, (B, C, H, W), jnp.float32)
    backbone = Backbone((C, H, W), hidden, cout, k_params)

    out = jax.block_until_ready(backbone(x))

    # reference check
    xr = jnp.transpose(x, (0, 2, 3, 1))
    r = _ref_conv3x3_bias_relu(xr, backbone.w1, backbone.b1)
    r = _ref_conv3x3_bias_relu(r, backbone.w2, backbone.b2)
    ref = jnp.transpose(r, (0, 3, 1, 2))

    assert out.shape == (B, cout, H, W), out.shape
    err = float(jnp.max(jnp.abs(out - ref)))
    assert err < 2e-2, f"max abs err {err}"
    print("KERNEL_OK")
</pallas_src>

<mosaic_0001>
module attributes {stable_mosaic.version = 11 : i64} {
  func.func @_fused_backbone_kernel(%arg0: i32, %arg1: i32, %arg2: memref<1x20x18x4xbf16, #tpu.memory_space<vmem>>, %arg3: memref<36x128xbf16, #tpu.memory_space<vmem>>, %arg4: memref<1x128xf32, #tpu.memory_space<vmem>>, %arg5: memref<9x128x128xbf16, #tpu.memory_space<vmem>>, %arg6: memref<1x128xf32, #tpu.memory_space<vmem>>, %arg7: memref<1x8x128xf32, #tpu.memory_space<vmem>>, %arg8: memref<10x18x128xbf16, #tpu.memory_space<vmem>>) attributes {dimension_semantics = [#tpu.dimension_semantics<parallel>, #tpu.dimension_semantics<parallel>], iteration_bounds = array<i64: 2, 2>, scalar_prefetch = 0 : i64, scratch_operands = 1 : i64, tpu.core_type = #tpu.core_type<tc>, window_params = [{transform_indices = @transform_0, window_bounds = array<i64: 1, 20, 18, 4>}, {pipeline_mode = #tpu.pipeline_mode<synchronous>, transform_indices = @transform_1, window_bounds = array<i64: 36, 128>}, {pipeline_mode = #tpu.pipeline_mode<synchronous>, transform_indices = @transform_2, window_bounds = array<i64: 1, 128>}, {pipeline_mode = #tpu.pipeline_mode<synchronous>, transform_indices = @transform_3, window_bounds = array<i64: 9, 128, 128>}, {pipeline_mode = #tpu.pipeline_mode<synchronous>, transform_indices = @transform_4, window_bounds = array<i64: 1, 128>}, {transform_indices = @transform_5, window_bounds = array<i64: 1, 8, 128>}]} {
    %c8_i32 = arith.constant 8 : i32
    %0 = arith.muli %arg1, %c8_i32 : i32
    %1 = tpu.assume_multiple %0, 8 : i32
    %c0 = arith.constant 0 : index
    %2 = arith.index_cast %1 : i32 to index
    %c0_0 = arith.constant 0 : index
    %c0_1 = arith.constant 0 : index
    %3 = vector.load %arg2[%c0, %2, %c0_0, %c0_1] : memref<1x20x18x4xbf16, #tpu.memory_space<vmem>>, vector<1x12x18x4xbf16>
    %4 = vector.extract_strided_slice %3 {offsets = [0, 0, 0, 0], sizes = [1, 10, 16, 4], strides = [1, 1, 1, 1]} : vector<1x12x18x4xbf16> to vector<1x10x16x4xbf16>
    %5 = vector.shape_cast %4 : vector<1x10x16x4xbf16> to vector<160x4xbf16>
    %6 = vector.extract_strided_slice %3 {offsets = [0, 0, 1, 0], sizes = [1, 10, 16, 4], strides = [1, 1, 1, 1]} : vector<1x12x18x4xbf16> to vector<1x10x16x4xbf16>
    %7 = vector.shape_cast %6 : vector<1x10x16x4xbf16> to vector<160x4xbf16>
    %8 = vector.extract_strided_slice %3 {offsets = [0, 0, 2, 0], sizes = [1, 10, 16, 4], strides = [1, 1, 1, 1]} : vector<1x12x18x4xbf16> to vector<1x10x16x4xbf16>
    %9 = vector.shape_cast %8 : vector<1x10x16x4xbf16> to vector<160x4xbf16>
    %10 = vector.extract_strided_slice %3 {offsets = [0, 1, 0, 0], sizes = [1, 10, 16, 4], strides = [1, 1, 1, 1]} : vector<1x12x18x4xbf16> to vector<1x10x16x4xbf16>
    %11 = vector.shape_cast %10 : vector<1x10x16x4xbf16> to vector<160x4xbf16>
    %12 = vector.extract_strided_slice %3 {offsets = [0, 1, 1, 0], sizes = [1, 10, 16, 4], strides = [1, 1, 1, 1]} : vector<1x12x18x4xbf16> to vector<1x10x16x4xbf16>
    %13 = vector.shape_cast %12 : vector<1x10x16x4xbf16> to vector<160x4xbf16>
    %14 = vector.extract_strided_slice %3 {offsets = [0, 1, 2, 0], sizes = [1, 10, 16, 4], strides = [1, 1, 1, 1]} : vector<1x12x18x4xbf16> to vector<1x10x16x4xbf16>
    %15 = vector.shape_cast %14 : vector<1x10x16x4xbf16> to vector<160x4xbf16>
    %16 = vector.extract_strided_slice %3 {offsets = [0, 2, 0, 0], sizes = [1, 10, 16, 4], strides = [1, 1, 1, 1]} : vector<1x12x18x4xbf16> to vector<1x10x16x4xbf16>
    %17 = vector.shape_cast %16 : vector<1x10x16x4xbf16> to vector<160x4xbf16>
    %18 = vector.extract_strided_slice %3 {offsets = [0, 2, 1, 0], sizes = [1, 10, 16, 4], strides = [1, 1, 1, 1]} : vector<1x12x18x4xbf16> to vector<1x10x16x4xbf16>
    %19 = vector.shape_cast %18 : vector<1x10x16x4xbf16> to vector<160x4xbf16>
    %20 = vector.extract_strided_slice %3 {offsets = [0, 2, 2, 0], sizes = [1, 10, 16, 4], strides = [1, 1, 1, 1]} : vector<1x12x18x4xbf16> to vector<1x10x16x4xbf16>
    %21 = vector.shape_cast %20 : vector<1x10x16x4xbf16> to vector<160x4xbf16>
    %22 = tpu.concatenate %5, %7, %9, %11, %13, %15, %17, %19, %21 in 1 : vector<160x4xbf16>, vector<160x4xbf16>, vector<160x4xbf16>, vector<160x4xbf16>, vector<160x4xbf16>, vector<160x4xbf16>, vector<160x4xbf16>, vector<160x4xbf16>, vector<160x4xbf16> -> vector<160x36xbf16>
    %c0_2 = arith.constant 0 : index
    %c0_3 = arith.constant 0 : index
    %23 = vector.load %arg3[%c0_2, %c0_3] : memref<36x128xbf16, #tpu.memory_space<vmem>>, vector<36x128xbf16>
    %cst = arith.constant dense<0.000000e+00> : vector<160x128xf32>
    %24 = tpu.matmul %22, %23, %cst {dimension_numbers = #tpu.dot_dimension_numbers<[1], [0], [0], [1], [0, 0, 1, 1], [], []>} : vector<160x36xbf16>, vector<36x128xbf16>, vector<160x128xf32> -> vector<160x128xf32>
    %c0_4 = arith.constant 0 : index
    %c0_5 = arith.constant 0 : index
    %25 = vector.load %arg4[%c0_4, %c0_5] : memref<1x128xf32, #tpu.memory_space<vmem>>, vector<1x128xf32>
    %26 = vector.broadcast %25 : vector<1x128xf32> to vector<160x128xf32>
    %27 = arith.addf %24, %26 : vector<160x128xf32>
    %cst_6 = arith.constant 0.000000e+00 : f32
    %28 = vector.broadcast %cst_6 : f32 to vector<160x128xf32>
    %29 = arith.maximumf %27, %28 : vector<160x128xf32>
    %30 = arith.truncf %29 : vector<160x128xf32> to vector<160x128xbf16>
    %31 = vector.shape_cast %30 : vector<160x128xbf16> to vector<10x16x128xbf16>
    %cst_7 = arith.constant 0.000000e+00 : bf16
    %32 = vector.broadcast %cst_7 : bf16 to vector<10x1x128xbf16>
    %33 = tpu.concatenate %32, %31, %32 in 1 : vector<10x1x128xbf16>, vector<10x16x128xbf16>, vector<10x1x128xbf16> -> vector<10x18x128xbf16>
    %c0_8 = arith.constant 0 : index
    %c0_9 = arith.constant 0 : index
    %c0_10 = arith.constant 0 : index
    %34 = vector.load %arg8[%c0_8, %c0_9, %c0_10] : memref<10x18x128xbf16, #tpu.memory_space<vmem>>, vector<10x18x128xbf16>
    tpu.vector_store %arg8[%c0_8, %c0_9, %c0_10], %33 {strides = array<i32>} : memref<10x18x128xbf16, #tpu.memory_space<vmem>>, vector<10x18x128xbf16>,
    %c0_i32 = arith.constant 0 : i32
    %35 = arith.cmpi eq, %arg1, %c0_i32 : i32
    %36 = arith.extui %35 : i1 to i32
    %c0_i32_11 = arith.constant 0 : i32
    %37 = arith.cmpi ne, %36, %c0_i32_11 : i32
    scf.if %37 {
      %cst_75 = arith.constant 0.000000e+00 : bf16
      %105 = vector.broadcast %cst_75 : bf16 to vector<1x18x128xbf16>
      %c0_76 = arith.constant 0 : index
      %c0_77 = arith.constant 0 : index
      %c0_78 = arith.constant 0 : index
      %106 = vector.load %arg8[%c0_76, %c0_77, %c0_78] : memref<10x18x128xbf16, #tpu.memory_space<vmem>>, vector<1x18x128xbf16>
      tpu.vector_store %arg8[%c0_76, %c0_77, %c0_78], %105 {strides = array<i32>} : memref<10x18x128xbf16, #tpu.memory_space<vmem>>, vector<1x18x128xbf16>,
    } else {
    }
    %c1_i32 = arith.constant 1 : i32
    %38 = arith.cmpi eq, %arg1, %c1_i32 : i32
    %39 = arith.extui %38 : i1 to i32
    %c0_i32_12 = arith.constant 0 : i32
    %40 = arith.cmpi ne, %39, %c0_i32_12 : i32
    scf.if %40 {
      %cst_75 = arith.constant 0.000000e+00 : bf16
      %105 = vector.broadcast %cst_75 : bf16 to vector<1x18x128xbf16>
      %c9 = arith.constant 9 : index
      %c0_76 = arith.constant 0 : index
      %c0_77 = arith.constant 0 : index
      %106 = vector.load %arg8[%c9, %c0_76, %c0_77] : memref<10x18x128xbf16, #tpu.memory_space<vmem>>, vector<1x18x128xbf16>
      tpu.vector_store %arg8[%c9, %c0_76, %c0_77], %105 {strides = array<i32>} : memref<10x18x128xbf16, #tpu.memory_space<vmem>>, vector<1x18x128xbf16>,
    } else {
    }
    %cst_13 = arith.constant 0.000000e+00 : f32
    %41 = vector.broadcast %cst_13 : f32 to vector<128x128xf32>
    %c0_14 = arith.constant 0 : index
    %c0_15 = arith.constant 0 : index
    %c0_16 = arith.constant 0 : index
    %42 = vector.load %arg8[%c0_14, %c0_15, %c0_16] : memref<10x18x128xbf16, #tpu.memory_space<vmem>>, vector<8x16x128xbf16>
    %43 = vector.shape_cast %42 : vector<8x16x128xbf16> to vector<128x128xbf16>
    %c0_17 = arith.constant 0 : index
    %c0_18 = arith.constant 0 : index
    %c0_19 = arith.constant 0 : index
    %44 = vector.load %arg5[%c0_17, %c0_18, %c0_19] : memref<9x128x128xbf16, #tpu.memory_space<vmem>>, vector<1x128x128xbf16>
    %45 = vector.shape_cast %44 : vector<1x128x128xbf16> to vector<128x128xbf16>
    %cst_20 = arith.constant dense<0.000000e+00> : vector<128x128xf32>
    %46 = tpu.matmul %43, %45, %cst_20 {dimension_numbers = #tpu.dot_dimension_numbers<[1], [0], [0], [1], [0, 0, 1, 1], [], []>} : vector<128x128xbf16>, vector<128x128xbf16>, vector<128x128xf32> -> vector<128x128xf32>
    %47 = arith.addf %41, %46 : vector<128x128xf32>
    %c0_21 = arith.constant 0 : index
    %c1 = arith.constant 1 : index
    %c0_22 = arith.constant 0 : index
    %48 = vector.load %arg8[%c0_21, %c1, %c0_22] : memref<10x18x128xbf16, #tpu.memory_space<vmem>>, vector<8x16x128xbf16>
    %49 = vector.shape_cast %48 : vector<8x16x128xbf16> to vector<128x128xbf16>
    %c1_23 = arith.constant 1 : index
    %c0_24 = arith.constant 0 : index
    %c0_25 = arith.constant 0 : index
    %50 = vector.load %arg5[%c1_23, %c0_24, %c0_25] : memref<9x128x128xbf16, #tpu.memory_space<vmem>>, vector<1x128x128xbf16>
    %51 = vector.shape_cast %50 : vector<1x128x128xbf16> to vector<128x128xbf16>
    %cst_26 = arith.constant dense<0.000000e+00> : vector<128x128xf32>
    %52 = tpu.matmul %49, %51, %cst_26 {dimension_numbers = #tpu.dot_dimension_numbers<[1], [0], [0], [1], [0, 0, 1, 1], [], []>} : vector<128x128xbf16>, vector<128x128xbf16>, vector<128x128xf32> -> vector<128x128xf32>
    %53 = arith.addf %47, %52 : vector<128x128xf32>
    %c0_27 = arith.constant 0 : index
    %c2 = arith.constant 2 : index
    %c0_28 = arith.constant 0 : index
    %54 = vector.load %arg8[%c0_27, %c2, %c0_28] : memref<10x18x128xbf16, #tpu.memory_space<vmem>>, vector<8x16x128xbf16>
    %55 = vector.shape_cast %54 : vector<8x16x128xbf16> to vector<128x128xbf16>
    %c2_29 = arith.constant 2 : index
    %c0_30 = arith.constant 0 : index
    %c0_31 = arith.constant 0 : index
    %56 = vector.load %arg5[%c2_29, %c0_30, %c0_31] : memref<9x128x128xbf16, #tpu.memory_space<vmem>>, vector<1x128x128xbf16>
    %57 = vector.shape_cast %56 : vector<1x128x128xbf16> to vector<128x128xbf16>
    %cst_32 = arith.constant dense<0.000000e+00> : vector<128x128xf32>
    %58 = tpu.matmul %55, %57, %cst_32 {dimension_numbers = #tpu.dot_dimension_numbers<[1], [0], [0], [1], [0, 0, 1, 1], [], []>} : vector<128x128xbf16>, vector<128x128xbf16>, vector<128x128xf32> -> vector<128x128xf32>
    %59 = arith.addf %53, %58 : vector<128x128xf32>
    %c1_33 = arith.constant 1 : index
    %c0_34 = arith.constant 0 : index
    %c0_35 = arith.constant 0 : index
    %60 = vector.load %arg8[%c1_33, %c0_34, %c0_35] : memref<10x18x128xbf16, #tpu.memory_space<vmem>>, vector<8x16x128xbf16>
    %61 = vector.shape_cast %60 : vector<8x16x128xbf16> to vector<128x128xbf16>
    %c3 = arith.constant 3 : index
    %c0_36 = arith.constant 0 : index
    %c0_37 = arith.constant 0 : index
    %62 = vector.load %arg5[%c3, %c0_36, %c0_37] : memref<9x128x128xbf16, #tpu.memory_space<vmem>>, vector<1x128x128xbf16>
    %63 = vector.shape_cast %62 : vector<1x128x128xbf16> to vector<128x128xbf16>
    %cst_38 = arith.constant dense<0.000000e+00> : vector<128x128xf32>
    %64 = tpu.matmul %61, %63, %cst_38 {dimension_numbers = #tpu.dot_dimension_numbers<[1], [0], [0], [1], [0, 0, 1, 1], [], []>} : vector<128x128xbf16>, vector<128x128xbf16>, vector<128x128xf32> -> vector<128x128xf32>
    %65 = arith.addf %59, %64 : vector<128x128xf32>
    %c1_39 = arith.constant 1 : index
    %c1_40 = arith.constant 1 : index
    %c0_41 = arith.constant 0 : index
    %66 = vector.load %arg8[%c1_39, %c1_40, %c0_41] : memref<10x18x128xbf16, #tpu.memory_space<vmem>>, vector<8x16x128xbf16>
    %67 = vector.shape_cast %66 : vector<8x16x128xbf16> to vector<128x128xbf16>
    %c4 = arith.constant 4 : index
    %c0_42 = arith.constant 0 : index
    %c0_43 = arith.constant 0 : index
    %68 = vector.load %arg5[%c4, %c0_42, %c0_43] : memref<9x128x128xbf16, #tpu.memory_space<vmem>>, vector<1x128x128xbf16>
    %69 = vector.shape_cast %68 : vector<1x128x128xbf16> to vector<128x128xbf16>
    %cst_44 = arith.constant dense<0.000000e+00> : vector<128x128xf32>
    %70 = tpu.matmul %67, %69, %cst_44 {dimension_numbers = #tpu.dot_dimension_numbers<[1], [0], [0], [1], [0, 0, 1, 1], [], []>} : vector<128x128xbf16>, vector<128x128xbf16>, vector<128x128xf32> -> vector<128x128xf32>
    %71 = arith.addf %65, %70 : vector<128x128xf32>
    %c1_45 = arith.constant 1 : index
    %c2_46 = arith.constant 2 : index
    %c0_47 = arith.constant 0 : index
    %72 = vector.load %arg8[%c1_45, %c2_46, %c0_47] : memref<10x18x128xbf16, #tpu.memory_space<vmem>>, vector<8x16x128xbf16>
    %73 = vector.shape_cast %72 : vector<8x16x128xbf16> to vector<128x128xbf16>
    %c5 = arith.constant 5 : index
    %c0_48 = arith.constant 0 : index
    %c0_49 = arith.constant 0 : index
    %74 = vector.load %arg5[%c5, %c0_48, %c0_49] : memref<9x128x128xbf16, #tpu.memory_space<vmem>>, vector<1x128x128xbf16>
    %75 = vector.shape_cast %74 : vector<1x128x128xbf16> to vector<128x128xbf16>
    %cst_50 = arith.constant dense<0.000000e+00> : vector<128x128xf32>
    %76 = tpu.matmul %73, %75, %cst_50 {dimension_numbers = #tpu.dot_dimension_numbers<[1], [0], [0], [1], [0, 0, 1, 1], [], []>} : vector<128x128xbf16>, vector<128x128xbf16>, vector<128x128xf32> -> vector<128x128xf32>
    %77 = arith.addf %71, %76 : vector<128x128xf32>
    %c2_51 = arith.constant 2 : index
    %c0_52 = arith.constant 0 : index
    %c0_53 = arith.constant 0 : index
    %78 = vector.load %arg8[%c2_51, %c0_52, %c0_53] : memref<10x18x128xbf16, #tpu.memory_space<vmem>>, vector<8x16x128xbf16>
    %79 = vector.shape_cast %78 : vector<8x16x128xbf16> to vector<128x128xbf16>
    %c6 = arith.constant 6 : index
    %c0_54 = arith.constant 0 : index
    %c0_55 = arith.constant 0 : index
    %80 = vector.load %arg5[%c6, %c0_54, %c0_55] : memref<9x128x128xbf16, #tpu.memory_space<vmem>>, vector<1x128x128xbf16>
    %81 = vector.shape_cast %80 : vector<1x128x128xbf16> to vector<128x128xbf16>
    %cst_56 = arith.constant dense<0.000000e+00> : vector<128x128xf32>
    %82 = tpu.matmul %79, %81, %cst_56 {dimension_numbers = #tpu.dot_dimension_numbers<[1], [0], [0], [1], [0, 0, 1, 1], [], []>} : vector<128x128xbf16>, vector<128x128xbf16>, vector<128x128xf32> -> vector<128x128xf32>
    %83 = arith.addf %77, %82 : vector<128x128xf32>
    %c2_57 = arith.constant 2 : index
    %c1_58 = arith.constant 1 : index
    %c0_59 = arith.constant 0 : index
    %84 = vector.load %arg8[%c2_57, %c1_58, %c0_59] : memref<10x18x128xbf16, #tpu.memory_space<vmem>>, vector<8x16x128xbf16>
    %85 = vector.shape_cast %84 : vector<8x16x128xbf16> to vector<128x128xbf16>
    %c7 = arith.constant 7 : index
    %c0_60 = arith.constant 0 : index
    %c0_61 = arith.constant 0 : index
    %86 = vector.load %arg5[%c7, %c0_60, %c0_61] : memref<9x128x128xbf16, #tpu.memory_space<vmem>>, vector<1x128x128xbf16>
    %87 = vector.shape_cast %86 : vector<1x128x128xbf16> to vector<128x128xbf16>
    %cst_62 = arith.constant dense<0.000000e+00> : vector<128x128xf32>
    %88 = tpu.matmul %85, %87, %cst_62 {dimension_numbers = #tpu.dot_dimension_numbers<[1], [0], [0], [1], [0, 0, 1, 1], [], []>} : vector<128x128xbf16>, vector<128x128xbf16>, vector<128x128xf32> -> vector<128x128xf32>
    %89 = arith.addf %83, %88 : vector<128x128xf32>
    %c2_63 = arith.constant 2 : index
    %c2_64 = arith.constant 2 : index
    %c0_65 = arith.constant 0 : index
    %90 = vector.load %arg8[%c2_63, %c2_64, %c0_65] : memref<10x18x128xbf16, #tpu.memory_space<vmem>>, vector<8x16x128xbf16>
    %91 = vector.shape_cast %90 : vector<8x16x128xbf16> to vector<128x128xbf16>
    %c8 = arith.constant 8 : index
    %c0_66 = arith.constant 0 : index
    %c0_67 = arith.constant 0 : index
    %92 = vector.load %arg5[%c8, %c0_66, %c0_67] : memref<9x128x128xbf16, #tpu.memory_space<vmem>>, vector<1x128x128xbf16>
    %93 = vector.shape_cast %92 : vector<1x128x128xbf16> to vector<128x128xbf16>
    %cst_68 = arith.constant dense<0.000000e+00> : vector<128x128xf32>
    %94 = tpu.matmul %91, %93, %cst_68 {dimension_numbers = #tpu.dot_dimension_numbers<[1], [0], [0], [1], [0, 0, 1, 1], [], []>} : vector<128x128xbf16>, vector<128x128xbf16>, vector<128x128xf32> -> vector<128x128xf32>
    %95 = arith.addf %89, %94 : vector<128x128xf32>
    %c0_69 = arith.constant 0 : index
    %c0_70 = arith.constant 0 : index
    %96 = vector.load %arg6[%c0_69, %c0_70] : memref<1x128xf32, #tpu.memory_space<vmem>>, vector<1x128xf32>
    %97 = vector.broadcast %96 : vector<1x128xf32> to vector<128x128xf32>
    %98 = arith.addf %95, %97 : vector<128x128xf32>
    %cst_71 = arith.constant 0.000000e+00 : f32
    %99 = vector.broadcast %cst_71 : f32 to vector<128x128xf32>
    %100 = arith.maximumf %98, %99 : vector<128x128xf32>
    %101 = tpu.transpose %100, [1, 0] : vector<128x128xf32> -> vector<128x128xf32>
    %102 = vector.extract_strided_slice %101 {offsets = [0, 0], sizes = [8, 128], strides = [1, 1]} : vector<128x128xf32> to vector<8x128xf32>
    %103 = vector.shape_cast %102 : vector<8x128xf32> to vector<1x8x128xf32>
    %c0_72 = arith.constant 0 : index
    %c0_73 = arith.constant 0 : index
    %c0_74 = arith.constant 0 : index
    %104 = vector.load %arg7[%c0_72, %c0_73, %c0_74] : memref<1x8x128xf32, #tpu.memory_space<vmem>>, vector<1x8x128xf32>
    tpu.vector_store %arg7[%c0_72, %c0_73, %c0_74], %103 {strides = array<i32>} : memref<1x8x128xf32, #tpu.memory_space<vmem>>, vector<1x8x128xf32>,
    return
  }
  func.func @transform_0(%arg0: i32, %arg1: i32) -> (i32, i32, i32, i32) {
    %c0_i32 = arith.constant 0 : i32
    %c0_i32_0 = arith.constant 0 : i32
    %c0_i32_1 = arith.constant 0 : i32
    %c0_i32_2 = arith.constant 0 : i32
    return %arg0, %c0_i32, %c0_i32_0, %c0_i32_1 : i32, i32, i32, i32
  }
  func.func @transform_1(%arg0: i32, %arg1: i32) -> (i32, i32) {
    %c0_i32 = arith.constant 0 : i32
    %c0_i32_0 = arith.constant 0 : i32
    %c0_i32_1 = arith.constant 0 : i32
    return %c0_i32, %c0_i32_0 : i32, i32
  }
  func.func @transform_2(%arg0: i32, %arg1: i32) -> (i32, i32) {
    %c0_i32 = arith.constant 0 : i32
    %c0_i32_0 = arith.constant 0 : i32
    %c0_i32_1 = arith.constant 0 : i32
    return %c0_i32, %c0_i32_0 : i32, i32
  }
  func.func @transform_3(%arg0: i32, %arg1: i32) -> (i32, i32, i32) {
    %c0_i32 = arith.constant 0 : i32
    %c0_i32_0 = arith.constant 0 : i32
    %c0_i32_1 = arith.constant 0 : i32
    %c0_i32_2 = arith.constant 0 : i32
    return %c0_i32, %c0_i32_0, %c0_i32_1 : i32, i32, i32
  }
  func.func @transform_4(%arg0: i32, %arg1: i32) -> (i32, i32) {
    %c0_i32 = arith.constant 0 : i32
    %c0_i32_0 = arith.constant 0 : i32
    %c0_i32_1 = arith.constant 0 : i32
    return %c0_i32, %c0_i32_0 : i32, i32
  }
  func.func @transform_5(%arg0: i32, %arg1: i32) -> (i32, i32, i32) {
    %c0_i32 = arith.constant 0 : i32
    %c0_i32_0 = arith.constant 0 : i32
    return %arg0, %c0_i32, %arg1 : i32, i32, i32
  }
}

</mosaic_0001>

<llo_original>
// kernel: _model.1
$region0: #{_model.1}
  #allocation0 [shape = 'u32[]', space=smem, size = 0x4, offset = 0x4, fixed_abs, tag = 'smem constant byte address 0x4 - core index']
  #allocation1 [shape = 'u32[72,128]{1,0:T(1,128)}', space=vmem, size = 0x9000, scoped, tag = 'internal scratch']
  #allocation2 [shape = 'bf16[10,18,128]{2,1,0:T(8,128)(2,1)}', space=vmem, size = 0xf000, scoped, tag = 'scratch operand']
  %s0 = inlined_call_operand.vmem [shape: bf16[2,20,18,4], index: 0, kind: input, shape index: {}]
  %s1 = inlined_call_operand.vmem [shape: bf16[36,128], index: 1, kind: input, shape index: {}]
  %s2 = inlined_call_operand.vmem [shape: f32[1,128], index: 2, kind: input, shape index: {}]
  %s3 = inlined_call_operand.vmem [shape: bf16[9,128,128], index: 3, kind: input, shape index: {}]
  %s4 = inlined_call_operand.vmem [shape: f32[1,128], index: 4, kind: input, shape index: {}]
  %s5 = inlined_call_operand.vmem [shape: f32[2,8,256], index: 5, kind: output, shape index: {}]
  %s6 = sld [smem:[#allocation0]]
  $region61: #{_model.1} parent=0
    _
  %s8 = ssub.s32 1, %s6
  %s9 = scalar_select 0, %s8, %s6
  loop: start=0, step=1, limit=6
  $region2: #{_model.1} parent=0 // loop_pre_header
    _
  $region3: #{_model.1} parent=0 // loop_header
    %s11 = sphi 0, %s15
    %p12 = scmp.ge.s32.totalorder %s11, 6
    %s18 = sphi 0, %s30
    %s19 = sphi 0, %s26
    %s20 = sphi 0, %s18
    %s21 = sphi 0, %s19
    %s22 = sphi 0, %s20
    %s23 = sphi 0, %s21
    %s33 = sphi 0, %s35
    %s36 = sphi 0, %s33
    %s37 = sphi 0, %s36
    %s53 = sphi 0, %s37
    %s57 = sphi 0, %s57
    %s59 = sphi 0, %s57
    %s60 = sphi 0, %s59
    %s74 = sphi 0, %s60
    %s78 = sphi 0, %s78
    %s80 = sphi 0, %s78
    %s81 = sphi 0, %s80
    %s95 = sphi 0, %s81
    %s99 = sphi 0, %s99
    %s101 = sphi 0, %s99
    %s102 = sphi 0, %s101
    %s116 = sphi 0, %s102
    %s120 = sphi 0, %s120
    %s122 = sphi 0, %s120
    %s123 = sphi 0, %s122
    %s137 = sphi 0, %s123
    %s145 = sphi 0, %s147
    %s148 = sphi 0, %s145
    %s149 = sphi 0, %s148
    %s165 = sphi 0, %s149
  $region4: #{_model.1} parent=0 // loop_header_branch
    %14 = sbr.rel (%p12) target = $region8
  $region5: #{_model.1} parent=0 // loop_body
    %s16 = ssub.s32 %s11, 1
    %s17 = ssub.s32 %s11, 2
    %s24 = sadd.s32 1, %s19
    %p25 = scmp.ge.s32.totalorder %s24, 2
    %s26 = scalar_select %p25, 0, %s24
    %s27 = sadd.s32 1, %s18
    %s28 = scalar_select %p25, %s27, %s18
    %p29 = scmp.ge.s32.totalorder %s28, 2
    %s30 = scalar_select %p29, 0, %s28
    %s31 = ssub.s32 %s18, %s30
    %p32 = scmp.eq.s32.totalorder %s31, 0
    %s34 = sadd.s32 %s33, 1
    %s35 = scalar_select %p32, %s33, %s34
    %p38 = pneg %p32
    %p39 = scmp.eq.s32.totalorder %s11, 3
    %p40 = por %p38, %p39
    %p41 = scmp.ne.s32.totalorder %s33, %s36
    %p42 = scmp.eq.s32.totalorder %s11, 0
    %p43 = por %p41, %p42
    %p44 = scmp.ne.s32.totalorder %s33, %s36
    %p45 = scmp.eq.s32.totalorder %s16, 3
    %p46 = por %p44, %p45
    %p47 = scmp.ne.s32.totalorder %s36, %s37
    %p48 = scmp.eq.s32.totalorder %s16, 0
    %p49 = por %p47, %p48
    %p50 = scmp.ne.s32.totalorder %s36, %s37
    %p51 = scmp.eq.s32.totalorder %s17, 3
    %p52 = por %p50, %p51
    %p54 = scmp.ne.s32.totalorder %s37, %s53
    %p55 = scmp.eq.s32.totalorder %s17, 0
    %p56 = por %p54, %p55
    %s58 = sadd.s32 %s57, 1
    %p61 = scmp.eq.s32.totalorder %s11, 3
    %p62 = scmp.ne.s32.totalorder %s57, %s59
    %p63 = scmp.eq.s32.totalorder %s11, 0
    %p64 = por %p62, %p63
    %p65 = scmp.ne.s32.totalorder %s57, %s59
    %p66 = scmp.eq.s32.totalorder %s16, 3
    %p67 = por %p65, %p66
    %p68 = scmp.ne.s32.totalorder %s59, %s60
    %p69 = scmp.eq.s32.totalorder %s16, 0
    %p70 = por %p68, %p69
    %p71 = scmp.ne.s32.totalorder %s59, %s60
    %p72 = scmp.eq.s32.totalorder %s17, 3
    %p73 = por %p71, %p72
    %p75 = scmp.ne.s32.totalorder %s60, %s74
    %p76 = scmp.eq.s32.totalorder %s17, 0
    %p77 = por %p75, %p76
    %s79 = sadd.s32 %s78, 1
    %p82 = scmp.eq.s32.totalorder %s11, 3
    %p83 = scmp.ne.s32.totalorder %s78, %s80
    %p84 = scmp.eq.s32.totalorder %s11, 0
    %p85 = por %p83, %p84
    %p86 = scmp.ne.s32.totalorder %s78, %s80
    %p87 = scmp.eq.s32.totalorder %s16, 3
    %p88 = por %p86, %p87
    %p89 = scmp.ne.s32.totalorder %s80, %s81
    %p90 = scmp.eq.s32.totalorder %s16, 0
    %p91 = por %p89, %p90
    %p92 = scmp.ne.s32.totalorder %s80, %s81
    %p93 = scmp.eq.s32.totalorder %s17, 3
    %p94 = por %p92, %p93
    %p96 = scmp.ne.s32.totalorder %s81, %s95
    %p97 = scmp.eq.s32.totalorder %s17, 0
    %p98 = por %p96, %p97
    %s100 = sadd.s32 %s99, 1
    %p103 = scmp.eq.s32.totalorder %s11, 3
    %p104 = scmp.ne.s32.totalorder %s99, %s101
    %p105 = scmp.eq.s32.totalorder %s11, 0
    %p106 = por %p104, %p105
    %p107 = scmp.ne.s32.totalorder %s99, %s101
    %p108 = scmp.eq.s32.totalorder %s16, 3
    %p109 = por %p107, %p108
    %p110 = scmp.ne.s32.totalorder %s101, %s102
    %p111 = scmp.eq.s32.totalorder %s16, 0
    %p112 = por %p110, %p111
    %p113 = scmp.ne.s32.totalorder %s101, %s102
    %p114 = scmp.eq.s32.totalorder %s17, 3
    %p115 = por %p113, %p114
    %p117 = scmp.ne.s32.totalorder %s102, %s116
    %p118 = scmp.eq.s32.totalorder %s17, 0
    %p119 = por %p117, %p118
    %s121 = sadd.s32 %s120, 1
    %p124 = scmp.eq.s32.totalorder %s11, 3
    %p125 = scmp.ne.s32.totalorder %s120, %s122
    %p126 = scmp.eq.s32.totalorder %s11, 0
    %p127 = por %p125, %p126
    %p128 = scmp.ne.s32.totalorder %s120, %s122
    %p129 = scmp.eq.s32.totalorder %s16, 3
    %p130 = por %p128, %p129
    %p131 = scmp.ne.s32.totalorder %s122, %s123
    %p132 = scmp.eq.s32.totalorder %s16, 0
    %p133 = por %p131, %p132
    %p134 = scmp.ne.s32.totalorder %s122, %s123
    %p135 = scmp.eq.s32.totalorder %s17, 3
    %p136 = por %p134, %p135
    %p138 = scmp.ne.s32.totalorder %s123, %s137
    %p139 = scmp.eq.s32.totalorder %s17, 0
    %p140 = por %p138, %p139
    %s141 = ssub.s32 %s18, %s30
    %s142 = ssub.s32 %s19, %s26
    %s143 = sor.u32 %s141, %s142
    %p144 = scmp.eq.s32.totalorder %s143, 0
    %s146 = sadd.s32 %s145, 1
    %s147 = scalar_select %p144, %s145, %s146
    %p150 = pneg %p144
    %p151 = scmp.eq.s32.totalorder %s11, 3
    %p152 = por %p150, %p151
    %p153 = scmp.ne.s32.totalorder %s145, %s148
    %p154 = scmp.eq.s32.totalorder %s11, 0
    %p155 = por %p153, %p154
    %p156 = scmp.ne.s32.totalorder %s145, %s148
    %p157 = scmp.eq.s32.totalorder %s16, 3
    %p158 = por %p156, %p157
    %p159 = scmp.ne.s32.totalorder %s148, %s149
    %p160 = scmp.eq.s32.totalorder %s16, 0
    %p161 = por %p159, %p160
    %p162 = scmp.ne.s32.totalorder %s148, %s149
    %p163 = scmp.eq.s32.totalorder %s17, 3
    %p164 = por %p162, %p163
    %p166 = scmp.ne.s32.totalorder %s149, %s165
    %p167 = scmp.eq.s32.totalorder %s17, 0
    %p168 = por %p166, %p167
    %p169 = scmp.le.s32.totalorder 1, %s11
    %p170 = scmp.lt.s32.totalorder %s11, 5
    %p171 = pnand %p169, %p170
    %p172 = pneg %p171
    // Predicated region
    $region9: #{_model.1} parent=5 // pred_check
      _
    $region10: #{_model.1} parent=5 // pred_check_branch
      %174 = sbr.rel (%p171) target = $region12
    $region11: #{_model.1} parent=5 // pred_region
      %s175 = ssub.s32 %s11, 1
      // Predicated region
      $region13: #{_model.1} parent=11 // pred_check
        %p176 = pneg %p70
      $region14: #{_model.1} parent=11 // pred_check_branch
        %178 = sbr.rel (%p176) target = $region16
      $region15: #{_model.1} parent=11 // pred_region
        _
      $region16: #{_model.1} parent=11 // pred_fallthru
        _
      // Predicated region
      $region17: #{_model.1} parent=11 // pred_check
        %p179 = pneg %p91
      $region18: #{_model.1} parent=11 // pred_check_branch
        %181 = sbr.rel (%p179) target = $region20
      $region19: #{_model.1} parent=11 // pred_region
        _
      $region20: #{_model.1} parent=11 // pred_fallthru
        _
      // Predicated region
      $region21: #{_model.1} parent=11 // pred_check
        %p182 = pneg %p112
      $region22: #{_model.1} parent=11 // pred_check_branch
        %184 = sbr.rel (%p182) target = $region24
      $region23: #{_model.1} parent=11 // pred_region
        _
      $region24: #{_model.1} parent=11 // pred_fallthru
        _
      // Predicated region
      $region25: #{_model.1} parent=11 // pred_check
        %p185 = pneg %p133
      $region26: #{_model.1} parent=11 // pred_check_branch
        %187 = sbr.rel (%p185) target = $region28
      $region27: #{_model.1} parent=11 // pred_region
        _
      $region28: #{_model.1} parent=11 // pred_fallthru
        _
    $region12: #{_model.1} parent=5 // pred_fallthru
      _
    %p188 = scmp.lt.s32.totalorder %s11, 4
    // Predicated region
    $region29: #{_model.1} parent=5 // pred_check
      %p189 = pneg %p188
    $region30: #{_model.1} parent=5 // pred_check_branch
      %191 = sbr.rel (%p189) target = $region32
    $region31: #{_model.1} parent=5 // pred_region
      // Predicated region
      $region33: #{_model.1} parent=31 // pred_check
        %p192 = pneg %p43
      $region34: #{_model.1} parent=31 // pred_check_branch
        %194 = sbr.rel (%p192) target = $region36
      $region35: #{_model.1} parent=31 // pred_region
        %p195 = scmp.lt.s32.totalorder %s18, 1
        %s196 = scalar_select %p195, %s18, 1
        %s197 = smul.addr %s196, 60
        %s198 = smul.addr %s197, 4
        %s199 = scalar_lea.vmem %s0, %s198
      $region36: #{_model.1} parent=31 // pred_fallthru
        _
    $region32: #{_model.1} parent=5 // pred_fallthru
      _
    %p200 = scmp.le.s32.totalorder 1, %s11
    %p201 = scmp.lt.s32.totalorder %s11, 5
    %p202 = pnand %p200, %p201
    %p203 = pneg %p202
    // Predicated region
    $region37: #{_model.1} parent=5 // pred_check
      _
    $region38: #{_model.1} parent=5 // pred_check_branch
      %205 = sbr.rel (%p202) target = $region40
    $region39: #{_model.1} parent=5 // pred_region
      %s206 = ssub.s32 %s11, 1
      %p207 = scmp.lt.s32.totalorder %s20, 1
      %s208 = scalar_select %p207, %s20, 1
      %s209 = smul.addr %s208, 60
      %s210 = smul.addr %s209, 4
      %s211 = scalar_lea.vmem %s0, %s210
      %p212 = pneg %p49
      %p213 = pneg %p46
      %p214 = pneg %p70
      %p215 = pneg %p67
      %p216 = pneg %p91
      %p217 = pneg %p88
      %p218 = pneg %p112
      %p219 = pneg %p109
      %p220 = pneg %p133
      %p221 = pneg %p130
      %p222 = pneg %p161
      %p223 = pneg %p158
      %p224 = scmp.lt.s32.totalorder %s20, 1
      %s225 = scalar_select %p224, %s20, 1
      %p226 = scmp.lt.s32.totalorder %s21, 1
      %s227 = scalar_select %p226, %s21, 1
      %s228 = smul.addr %s225, 2
      %s229 = sadd.s32 %s227, %s228
      %s230 = smul.addr %s229, 8
      %s231 = scalar_lea.vmem %s5, %s230
      %p232 = scmp.lt.s32.totalorder %s20, 1
      %s233 = scalar_select %p232, %s20, 1
      %s234 = smul.addr %s233, 60
      %s235 = smul.addr %s234, 4
      %s236 = scalar_lea.vmem %s0, %s235
      %p237 = scmp.lt.s32.totalorder %s20, 1
      %s238 = scalar_select %p237, %s20, 1
      %p239 = scmp.lt.s32.totalorder %s21, 1
      %s240 = scalar_select %p239, %s21, 1
      %s241 = smul.addr %s238, 2
      %s242 = sadd.s32 %s240, %s241
      %s243 = smul.addr %s242, 8
      %s244 = scalar_lea.vmem %s5, %s243
      %s246 = smul.u32 %s21, 8
      %s247 = smul.u32 %s246, 3
      %s248 = smul.addr %s247, 4
      %s249 = scalar_lea.vmem %s236, %s248
      %v250 = vld [vmem:[%s249] sm:$0xf]
      %v251 = vld [vmem:[%s249 + $0x4] sm:$0xf]
      %v252 = vld [vmem:[%s249 + $0x8] sm:$0x1]
      %v253 = vld [vmem:[%s249 + $0xc] sm:$0xf]
      %v254 = vld [vmem:[%s249 + $0x10] sm:$0xf]
      %v255 = vld [vmem:[%s249 + $0x14] sm:$0x1]
      %v256 = vld [vmem:[%s249 + $0x18] sm:$0xf]
      %v257 = vld [vmem:[%s249 + $0x1c] sm:$0xf]
      %v258 = vld [vmem:[%s249 + $0x20] sm:$0x1]
      %v259 = vld [vmem:[%s249 + $0x24] sm:$0xf]
      %v260 = vld [vmem:[%s249 + $0x28] sm:$0xf]
      %v261 = vld [vmem:[%s249 + $0x2c] sm:$0x1]
      %v262 = vld [vmem:[%s249 + $0x30] sm:$0xf]
      %v263 = vld [vmem:[%s249 + $0x34] sm:$0xf]
      %v264 = vld [vmem:[%s249 + $0x38] sm:$0x1]
      %v265 = vld [vmem:[%s249 + $0x3c] sm:$0xf]
      %v266 = vld [vmem:[%s249 + $0x40] sm:$0xf]
      %v267 = vld [vmem:[%s249 + $0x44] sm:$0x1]
      %v268 = vld [vmem:[%s249 + $0x48] sm:$0xf]
      %v269 = vld [vmem:[%s249 + $0x4c] sm:$0xf]
      %v270 = vld [vmem:[%s249 + $0x50] sm:$0x1]
      %v271 = vld [vmem:[%s249 + $0x54] sm:$0xf]
      %v272 = vld [vmem:[%s249 + $0x58] sm:$0xf]
      %v273 = vld [vmem:[%s249 + $0x5c] sm:$0x1]
      %v274 = vld [vmem:[%s249 + $0x60] sm:$0xf]
      %v275 = vld [vmem:[%s249 + $0x64] sm:$0xf]
      %v276 = vld [vmem:[%s249 + $0x68] sm:$0x1]
      %v277 = vld [vmem:[%s249 + $0x6c] sm:$0xf]
      %v278 = vld [vmem:[%s249 + $0x70] sm:$0xf]
      %v279 = vld [vmem:[%s249 + $0x74] sm:$0x1]
      %v280 = vld [vmem:[%s249 + $0x78] sm:$0xf]
      %v281 = vld [vmem:[%s249 + $0x7c] sm:$0xf]
      %v282 = vld [vmem:[%s249 + $0x80] sm:$0x1]
      %v283 = vld [vmem:[%s249 + $0x84] sm:$0xf]
      %v284 = vld [vmem:[%s249 + $0x88] sm:$0xf]
      %v285 = vld [vmem:[%s249 + $0x8c] sm:$0x1]
      %vm286 = vsmask.f32 3328
      %vm287 = vsmask.f32 7440
      %vm288 = vmor %vm286, %vm287
      %v290 = vshrl.u32 %v250, 16
      %v292 = vrot.slane %v290, 4
      %v293 = vshll.u32 %v250, 16
      %v295 = vrot.slane %v293, 5
      %v296 = vor.u32 %v292, %v295
      %v297 = vrot.slane %v296, 4
      %v299 = vshll.u32 %v251, 16
      %v301 = vrot.slane %v299, 5
      %v302 = vsel %vm288, %v297, %v301
      %v303 = vshrl.u32 %v251, 16
      %v305 = vrot.slane %v303, 4
      %v306 = vor.u32 %v305, %v301
      %v307 = vrot.slane %v306, 4
      %v309 = vshll.u32 %v252, 16
      %v311 = vrot.slane %v309, 5
      %v312 = vsel %vm288, %v307, %v311
      %v314 = vshrl.u32 %v253, 16
      %v316 = vrot.slane %v314, 4
      %v317 = vshll.u32 %v253, 16
      %v319 = vrot.slane %v317, 5
      %v320 = vor.u32 %v316, %v319
      %v321 = vrot.slane %v320, 4
      %v323 = vshll.u32 %v254, 16
      %v325 = vrot.slane %v323, 5
      %v326 = vsel %vm288, %v321, %v325
      %v327 = vshrl.u32 %v254, 16
      %v329 = vrot.slane %v327, 4
      %v330 = vor.u32 %v329, %v325
      %v331 = vrot.slane %v330, 4
      %v333 = vshll.u32 %v255, 16
      %v335 = vrot.slane %v333, 5
      %v336 = vsel %vm288, %v331, %v335
      %v338 = vshrl.u32 %v256, 16
      %v340 = vrot.slane %v338, 4
      %v341 = vshll.u32 %v256, 16
      %v343 = vrot.slane %v341, 5
      %v344 = vor.u32 %v340, %v343
      %v345 = vrot.slane %v344, 4
      %v347 = vshll.u32 %v257, 16
      %v349 = vrot.slane %v347, 5
      %v350 = vsel %vm288, %v345, %v349
      %v351 = vshrl.u32 %v257, 16
      %v353 = vrot.slane %v351, 4
      %v354 = vor.u32 %v353, %v349
      %v355 = vrot.slane %v354, 4
      %v357 = vshll.u32 %v258, 16
      %v359 = vrot.slane %v357, 5
      %v360 = vsel %vm288, %v355, %v359
      %v362 = vshrl.u32 %v259, 16
      %v364 = vrot.slane %v362, 4
      %v365 = vshll.u32 %v259, 16
      %v367 = vrot.slane %v365, 5
      %v368 = vor.u32 %v364, %v367
      %v369 = vrot.slane %v368, 4
      %v371 = vshll.u32 %v260, 16
      %v373 = vrot.slane %v371, 5
      %v374 = vsel %vm288, %v369, %v373
      %v375 = vshrl.u32 %v260, 16
      %v377 = vrot.slane %v375, 4
      %v378 = vor.u32 %v377, %v373
      %v379 = vrot.slane %v378, 4
      %v381 = vshll.u32 %v261, 16
      %v383 = vrot.slane %v381, 5
      %v384 = vsel %vm288, %v379, %v383
      %v386 = vshrl.u32 %v262, 16
      %v388 = vrot.slane %v386, 4
      %v389 = vshll.u32 %v262, 16
      %v391 = vrot.slane %v389, 5
      %v392 = vor.u32 %v388, %v391
      %v393 = vrot.slane %v392, 4
      %v395 = vshll.u32 %v263, 16
      %v397 = vrot.slane %v395, 5
      %v398 = vsel %vm288, %v393, %v397
      %v399 = vshrl.u32 %v263, 16
      %v401 = vrot.slane %v399, 4
      %v402 = vor.u32 %v401, %v397
      %v403 = vrot.slane %v402, 4
      %v405 = vshll.u32 %v264, 16
      %v407 = vrot.slane %v405, 5
      %v408 = vsel %vm288, %v403, %v407
      %v410 = vshrl.u32 %v265, 16
      %v412 = vrot.slane %v410, 4
      %v413 = vshll.u32 %v265, 16
      %v415 = vrot.slane %v413, 5
      %v416 = vor.u32 %v412, %v415
      %v417 = vrot.slane %v416, 4
      %v419 = vshll.u32 %v266, 16
      %v421 = vrot.slane %v419, 5
      %v422 = vsel %vm288, %v417, %v421
      %v423 = vshrl.u32 %v266, 16
      %v425 = vrot.slane %v423, 4
      %v426 = vor.u32 %v425, %v421
      %v427 = vrot.slane %v426, 4
      %v429 = vshll.u32 %v267, 16
      %v431 = vrot.slane %v429, 5
      %v432 = vsel %vm288, %v427, %v431
      %v434 = vshrl.u32 %v268, 16
      %v436 = vrot.slane %v434, 4
      %v437 = vshll.u32 %v268, 16
      %v439 = vrot.slane %v437, 5
      %v440 = vor.u32 %v436, %v439
      %v441 = vrot.slane %v440, 4
      %v443 = vshll.u32 %v269, 16
      %v445 = vrot.slane %v443, 5
      %v446 = vsel %vm288, %v441, %v445
      %v447 = vshrl.u32 %v269, 16
      %v449 = vrot.slane %v447, 4
      %v450 = vor.u32 %v449, %v445
      %v451 = vrot.slane %v450, 4
      %v453 = vshll.u32 %v270, 16
      %v455 = vrot.slane %v453, 5
      %v456 = vsel %vm288, %v451, %v455
      %v458 = vshrl.u32 %v271, 16
      %v460 = vrot.slane %v458, 4
      %v461 = vshll.u32 %v271, 16
      %v463 = vrot.slane %v461, 5
      %v464 = vor.u32 %v460, %v463
      %v465 = vrot.slane %v464, 4
      %v467 = vshll.u32 %v272, 16
      %v469 = vrot.slane %v467, 5
      %v470 = vsel %vm288, %v465, %v469
      %v471 = vshrl.u32 %v272, 16
      %v473 = vrot.slane %v471, 4
      %v474 = vor.u32 %v473, %v469
      %v475 = vrot.slane %v474, 4
      %v477 = vshll.u32 %v273, 16
      %v479 = vrot.slane %v477, 5
      %v480 = vsel %vm288, %v475, %v479
      %v482 = vshrl.u32 %v274, 16
      %v484 = vrot.slane %v482, 4
      %v485 = vshll.u32 %v274, 16
      %v487 = vrot.slane %v485, 5
      %v488 = vor.u32 %v484, %v487
      %v489 = vrot.slane %v488, 4
      %v491 = vshll.u32 %v275, 16
      %v493 = vrot.slane %v491, 5
      %v494 = vsel %vm288, %v489, %v493
      %v495 = vshrl.u32 %v275, 16
      %v497 = vrot.slane %v495, 4
      %v498 = vor.u32 %v497, %v493
      %v499 = vrot.slane %v498, 4
      %v501 = vshll.u32 %v276, 16
      %v503 = vrot.slane %v501, 5
      %v504 = vsel %vm288, %v499, %v503
      %v506 = vshrl.u32 %v277, 16
      %v508 = vrot.slane %v506, 4
      %v509 = vshll.u32 %v277, 16
      %v511 = vrot.slane %v509, 5
      %v512 = vor.u32 %v508, %v511
      %v513 = vrot.slane %v512, 4
      %v515 = vshll.u32 %v278, 16
      %v517 = vrot.slane %v515, 5
      %v518 = vsel %vm288, %v513, %v517
      %v519 = vshrl.u32 %v278, 16
      %v521 = vrot.slane %v519, 4
      %v522 = vor.u32 %v521, %v517
      %v523 = vrot.slane %v522, 4
      %v525 = vshll.u32 %v279, 16
      %v527 = vrot.slane %v525, 5
      %v528 = vsel %vm288, %v523, %v527
      %vm559 = vcmask 1042432
      %vm560 = vcmask 1046532
      %vm561 = vmor %vm559, %vm560
      %v562 = vrot.slane %v250, 5
      %v563 = vrot.slane %v562, 4
      %v564 = vrot.slane %v251, 5
      %v565 = vsel %vm561, %v563, %v564
      %v566 = vrot.slane %v564, 4
      %v567 = vrot.slane %v252, 5
      %v568 = vsel %vm561, %v566, %v567
      %v569 = vrot.slane %v253, 5
      %v570 = vrot.slane %v569, 4
      %v571 = vrot.slane %v254, 5
      %v572 = vsel %vm561, %v570, %v571
      %v573 = vrot.slane %v571, 4
      %v574 = vrot.slane %v255, 5
      %v575 = vsel %vm561, %v573, %v574
      %v576 = vrot.slane %v256, 5
      %v577 = vrot.slane %v576, 4
      %v578 = vrot.slane %v257, 5
      %v579 = vsel %vm561, %v577, %v578
      %v580 = vrot.slane %v578, 4
      %v581 = vrot.slane %v258, 5
      %v582 = vsel %vm561, %v580, %v581
      %v583 = vrot.slane %v259, 5
      %v584 = vrot.slane %v583, 4
      %v585 = vrot.slane %v260, 5
      %v586 = vsel %vm561, %v584, %v585
      %v587 = vrot.slane %v585, 4
      %v588 = vrot.slane %v261, 5
      %v589 = vsel %vm561, %v587, %v588
      %v590 = vrot.slane %v262, 5
      %v591 = vrot.slane %v590, 4
      %v592 = vrot.slane %v263, 5
      %v593 = vsel %vm561, %v591, %v592
      %v594 = vrot.slane %v592, 4
      %v595 = vrot.slane %v264, 5
      %v596 = vsel %vm561, %v594, %v595
      %v597 = vrot.slane %v265, 5
      %v598 = vrot.slane %v597, 4
      %v599 = vrot.slane %v266, 5
      %v600 = vsel %vm561, %v598, %v599
      %v601 = vrot.slane %v599, 4
      %v602 = vrot.slane %v267, 5
      %v603 = vsel %vm561, %v601, %v602
      %v604 = vrot.slane %v268, 5
      %v605 = vrot.slane %v604, 4
      %v606 = vrot.slane %v269, 5
      %v607 = vsel %vm561, %v605, %v606
      %v608 = vrot.slane %v606, 4
      %v609 = vrot.slane %v270, 5
      %v610 = vsel %vm561, %v608, %v609
      %v611 = vrot.slane %v271, 5
      %v612 = vrot.slane %v611, 4
      %v613 = vrot.slane %v272, 5
      %v614 = vsel %vm561, %v612, %v613
      %v615 = vrot.slane %v613, 4
      %v616 = vrot.slane %v273, 5
      %v617 = vsel %vm561, %v615, %v616
      %v618 = vrot.slane %v274, 5
      %v619 = vrot.slane %v618, 4
      %v620 = vrot.slane %v275, 5
      %v621 = vsel %vm561, %v619, %v620
      %v622 = vrot.slane %v620, 4
      %v623 = vrot.slane %v276, 5
      %v624 = vsel %vm561, %v622, %v623
      %v625 = vrot.slane %v277, 5
      %v626 = vrot.slane %v625, 4
      %v627 = vrot.slane %v278, 5
      %v628 = vsel %vm561, %v626, %v627
      %v629 = vrot.slane %v627, 4
      %v630 = vrot.slane %v279, 5
      %v631 = vsel %vm561, %v629, %v630
      %v633 = vshrl.u32 %v280, 16
      %v635 = vrot.slane %v633, 4
      %v636 = vshll.u32 %v280, 16
      %v638 = vrot.slane %v636, 5
      %v639 = vor.u32 %v635, %v638
      %v640 = vrot.slane %v639, 4
      %v642 = vshll.u32 %v281, 16
      %v644 = vrot.slane %v642, 5
      %v645 = vsel %vm288, %v640, %v644
      %v646 = vshrl.u32 %v281, 16
      %v648 = vrot.slane %v646, 4
      %v649 = vor.u32 %v648, %v644
      %v650 = vrot.slane %v649, 4
      %v652 = vshll.u32 %v282, 16
      %v654 = vrot.slane %v652, 5
      %v655 = vsel %vm288, %v650, %v654
      %v659 = vrot.slane %v280, 5
      %v660 = vrot.slane %v659, 4
      %v661 = vrot.slane %v281, 5
      %v662 = vsel %vm561, %v660, %v661
      %v663 = vrot.slane %v661, 4
      %v664 = vrot.slane %v282, 5
      %v665 = vsel %vm561, %v663, %v664
      %v667 = vshrl.u32 %v283, 16
      %v669 = vrot.slane %v667, 4
      %v670 = vshll.u32 %v283, 16
      %v672 = vrot.slane %v670, 5
      %v673 = vor.u32 %v669, %v672
      %v674 = vrot.slane %v673, 4
      %v676 = vshll.u32 %v284, 16
      %v678 = vrot.slane %v676, 5
      %v679 = vsel %vm288, %v674, %v678
      %v680 = vshrl.u32 %v284, 16
      %v682 = vrot.slane %v680, 4
      %v683 = vor.u32 %v682, %v678
      %v684 = vrot.slane %v683, 4
      %v686 = vshll.u32 %v285, 16
      %v688 = vrot.slane %v686, 5
      %v689 = vsel %vm288, %v684, %v688
      %v693 = vrot.slane %v283, 5
      %v694 = vrot.slane %v693, 4
      %v695 = vrot.slane %v284, 5
      %v696 = vsel %vm561, %v694, %v695
      %v697 = vrot.slane %v695, 4
      %v698 = vrot.slane %v285, 5
      %v699 = vsel %vm561, %v697, %v698
      %v700 = vunpack.c.l.b16 %v250
      %v701 = vunpack.c.l.b16 %v251
      %v702 = vunpack.c.l.b16 %v253
      %v703 = vunpack.c.l.b16 %v254
      %v704 = vunpack.c.l.b16 %v256
      %v705 = vunpack.c.l.b16 %v257
      %v706 = vunpack.c.l.b16 %v259
      %v707 = vunpack.c.l.b16 %v260
      %v708 = vunpack.c.l.b16 %v262
      %v709 = vunpack.c.l.b16 %v263
      %v710 = vunpack.c.l.b16 %v265
      %v711 = vunpack.c.l.b16 %v266
      %v712 = vunpack.c.l.b16 %v268
      %v713 = vunpack.c.l.b16 %v269
      %v714 = vunpack.c.l.b16 %v271
      %v715 = vunpack.c.l.b16 %v272
      %v716 = vunpack.c.l.b16 %v274
      %v717 = vunpack.c.l.b16 %v275
      %v718 = vunpack.c.l.b16 %v277
      %v719 = vunpack.c.l.b16 %v278
      %v720 = vpack.c.b16 %v701, %v700
      %v721 = vpack.c.b16 %v703, %v702
      %v722 = vpack.c.b16 %v705, %v704
      %v723 = vpack.c.b16 %v707, %v706
      %v724 = vpack.c.b16 %v709, %v708
      %v725 = vpack.c.b16 %v711, %v710
      %v726 = vpack.c.b16 %v713, %v712
      %v727 = vpack.c.b16 %v715, %v714
      %v728 = vpack.c.b16 %v717, %v716
      %v729 = vpack.c.b16 %v719, %v718
      %v730 = vunpack.c.l.b16 %v302
      %v731 = vunpack.c.l.b16 %v312
      %v732 = vunpack.c.l.b16 %v326
      %v733 = vunpack.c.l.b16 %v336
      %v734 = vunpack.c.l.b16 %v350
      %v735 = vunpack.c.l.b16 %v360
      %v736 = vunpack.c.l.b16 %v374
      %v737 = vunpack.c.l.b16 %v384
      %v738 = vunpack.c.l.b16 %v398
      %v739 = vunpack.c.l.b16 %v408
      %v740 = vunpack.c.l.b16 %v422
      %v741 = vunpack.c.l.b16 %v432
      %v742 = vunpack.c.l.b16 %v446
      %v743 = vunpack.c.l.b16 %v456
      %v744 = vunpack.c.l.b16 %v470
      %v745 = vunpack.c.l.b16 %v480
      %v746 = vunpack.c.l.b16 %v494
      %v747 = vunpack.c.l.b16 %v504
      %v748 = vunpack.c.l.b16 %v518
      %v749 = vunpack.c.l.b16 %v528
      %v750 = vpack.c.b16 %v731, %v730
      %v751 = vpack.c.b16 %v733, %v732
      %v752 = vpack.c.b16 %v735, %v734
      %v753 = vpack.c.b16 %v737, %v736
      %v754 = vpack.c.b16 %v739, %v738
      %v755 = vpack.c.b16 %v741, %v740
      %v756 = vpack.c.b16 %v743, %v742
      %v757 = vpack.c.b16 %v745, %v744
      %v758 = vpack.c.b16 %v747, %v746
      %v759 = vpack.c.b16 %v749, %v748
      %760 = vrot.lane.b32.xlu0 %v750, 4
      %v761 = vpop.permute.xlu0 %760
      %762 = vrot.lane.b32.xlu0 %v751, 4
      %v763 = vpop.permute.xlu0 %762
      %764 = vrot.lane.b32.xlu0 %v752, 4
      %v765 = vpop.permute.xlu0 %764
      %766 = vrot.lane.b32.xlu0 %v753, 4
      %v767 = vpop.permute.xlu0 %766
      %768 = vrot.lane.b32.xlu0 %v754, 4
      %v769 = vpop.permute.xlu0 %768
      %770 = vrot.lane.b32.xlu0 %v755, 4
      %v771 = vpop.permute.xlu0 %770
      %772 = vrot.lane.b32.xlu0 %v756, 4
      %v773 = vpop.permute.xlu0 %772
      %774 = vrot.lane.b32.xlu0 %v757, 4
      %v775 = vpop.permute.xlu0 %774
      %776 = vrot.lane.b32.xlu0 %v758, 4
      %v777 = vpop.permute.xlu0 %776
      %778 = vrot.lane.b32.xlu0 %v759, 4
      %v779 = vpop.permute.xlu0 %778
      %v780 = vunpack.c.l.b16 %v565
      %v781 = vunpack.c.l.b16 %v568
      %v782 = vunpack.c.l.b16 %v572
      %v783 = vunpack.c.l.b16 %v575
      %v784 = vunpack.c.l.b16 %v579
      %v785 = vunpack.c.l.b16 %v582
      %v786 = vunpack.c.l.b16 %v586
      %v787 = vunpack.c.l.b16 %v589
      %v788 = vunpack.c.l.b16 %v593
      %v789 = vunpack.c.l.b16 %v596
      %v790 = vunpack.c.l.b16 %v600
      %v791 = vunpack.c.l.b16 %v603
      %v792 = vunpack.c.l.b16 %v607
      %v793 = vunpack.c.l.b16 %v610
      %v794 = vunpack.c.l.b16 %v614
      %v795 = vunpack.c.l.b16 %v617
      %v796 = vunpack.c.l.b16 %v621
      %v797 = vunpack.c.l.b16 %v624
      %v798 = vunpack.c.l.b16 %v628
      %v799 = vunpack.c.l.b16 %v631
      %v800 = vpack.c.b16 %v781, %v780
      %v801 = vpack.c.b16 %v783, %v782
      %v802 = vpack.c.b16 %v785, %v784
      %v803 = vpack.c.b16 %v787, %v786
      %v804 = vpack.c.b16 %v789, %v788
      %v805 = vpack.c.b16 %v791, %v790
      %v806 = vpack.c.b16 %v793, %v792
      %v807 = vpack.c.b16 %v795, %v794
      %v808 = vpack.c.b16 %v797, %v796
      %v809 = vpack.c.b16 %v799, %v798
      %810 = vrot.lane.b32.xlu0 %v800, 8
      %v811 = vpop.permute.xlu0 %810
      %812 = vrot.lane.b32.xlu0 %v801, 8
      %v813 = vpop.permute.xlu0 %812
      %814 = vrot.lane.b32.xlu0 %v802, 8
      %v815 = vpop.permute.xlu0 %814
      %816 = vrot.lane.b32.xlu0 %v803, 8
      %v817 = vpop.permute.xlu0 %816
      %818 = vrot.lane.b32.xlu0 %v804, 8
      %v819 = vpop.permute.xlu0 %818
      %820 = vrot.lane.b32.xlu0 %v805, 8
      %v821 = vpop.permute.xlu0 %820
      %822 = vrot.lane.b32.xlu0 %v806, 8
      %v823 = vpop.permute.xlu0 %822
      %824 = vrot.lane.b32.xlu0 %v807, 8
      %v825 = vpop.permute.xlu0 %824
      %826 = vrot.lane.b32.xlu0 %v808, 8
      %v827 = vpop.permute.xlu0 %826
      %828 = vrot.lane.b32.xlu0 %v809, 8
      %v829 = vpop.permute.xlu0 %828
      %v830 = vunpack.c.l.b16 %v280
      %v831 = vunpack.c.l.b16 %v281
      %v832 = vpack.c.b16 %v831, %v830
      %833 = vrot.lane.b32.xlu0 %v721, 12
      %v834 = vpop.permute.xlu0 %833
      %835 = vrot.lane.b32.xlu0 %v722, 12
      %v836 = vpop.permute.xlu0 %835
      %837 = vrot.lane.b32.xlu0 %v723, 12
      %v838 = vpop.permute.xlu0 %837
      %839 = vrot.lane.b32.xlu0 %v724, 12
      %v840 = vpop.permute.xlu0 %839
      %841 = vrot.lane.b32.xlu0 %v725, 12
      %v842 = vpop.permute.xlu0 %841
      %843 = vrot.lane.b32.xlu0 %v726, 12
      %v844 = vpop.permute.xlu0 %843
      %845 = vrot.lane.b32.xlu0 %v727, 12
      %v846 = vpop.permute.xlu0 %845
      %847 = vrot.lane.b32.xlu0 %v728, 12
      %v848 = vpop.permute.xlu0 %847
      %849 = vrot.lane.b32.xlu0 %v729, 12
      %v850 = vpop.permute.xlu0 %849
      %851 = vrot.lane.b32.xlu0 %v832, 12
      %v852 = vpop.permute.xlu0 %851
      %v853 = vunpack.c.l.b16 %v645
      %v854 = vunpack.c.l.b16 %v655
      %v855 = vpack.c.b16 %v854, %v853
      %856 = vrot.lane.b32.xlu0 %v751, 16
      %v857 = vpop.permute.xlu0 %856
      %858 = vrot.lane.b32.xlu0 %v752, 16
      %v859 = vpop.permute.xlu0 %858
      %860 = vrot.lane.b32.xlu0 %v753, 16
      %v861 = vpop.permute.xlu0 %860
      %862 = vrot.lane.b32.xlu0 %v754, 16
      %v863 = vpop.permute.xlu0 %862
      %864 = vrot.lane.b32.xlu0 %v755, 16
      %v865 = vpop.permute.xlu0 %864
      %866 = vrot.lane.b32.xlu0 %v756, 16
      %v867 = vpop.permute.xlu0 %866
      %868 = vrot.lane.b32.xlu0 %v757, 16
      %v869 = vpop.permute.xlu0 %868
      %870 = vrot.lane.b32.xlu0 %v758, 16
      %v871 = vpop.permute.xlu0 %870
      %872 = vrot.lane.b32.xlu0 %v759, 16
      %v873 = vpop.permute.xlu0 %872
      %874 = vrot.lane.b32.xlu0 %v855, 16
      %v875 = vpop.permute.xlu0 %874
      %v876 = vunpack.c.l.b16 %v662
      %v877 = vunpack.c.l.b16 %v665
      %v878 = vpack.c.b16 %v877, %v876
      %879 = vrot.lane.b32.xlu0 %v801, 20
      %v880 = vpop.permute.xlu0 %879
      %881 = vrot.lane.b32.xlu0 %v802, 20
      %v882 = vpop.permute.xlu0 %881
      %883 = vrot.lane.b32.xlu0 %v803, 20
      %v884 = vpop.permute.xlu0 %883
      %885 = vrot.lane.b32.xlu0 %v804, 20
      %v886 = vpop.permute.xlu0 %885
      %887 = vrot.lane.b32.xlu0 %v805, 20
      %v888 = vpop.permute.xlu0 %887
      %889 = vrot.lane.b32.xlu0 %v806, 20
      %v890 = vpop.permute.xlu0 %889
      %891 = vrot.lane.b32.xlu0 %v807, 20
      %v892 = vpop.permute.xlu0 %891
      %893 = vrot.lane.b32.xlu0 %v808, 20
      %v894 = vpop.permute.xlu0 %893
      %895 = vrot.lane.b32.xlu0 %v809, 20
      %v896 = vpop.permute.xlu0 %895
      %897 = vrot.lane.b32.xlu0 %v878, 20
      %v898 = vpop.permute.xlu0 %897
      %v899 = vunpack.c.l.b16 %v283
      %v900 = vunpack.c.l.b16 %v284
      %v901 = vpack.c.b16 %v900, %v899
      %902 = vrot.lane.b32.xlu0 %v722, 24
      %v903 = vpop.permute.xlu0 %902
      %904 = vrot.lane.b32.xlu0 %v723, 24
      %v905 = vpop.permute.xlu0 %904
      %906 = vrot.lane.b32.xlu0 %v724, 24
      %v907 = vpop.permute.xlu0 %906
      %908 = vrot.lane.b32.xlu0 %v725, 24
      %v909 = vpop.permute.xlu0 %908
      %910 = vrot.lane.b32.xlu0 %v726, 24
      %v911 = vpop.permute.xlu0 %910
      %912 = vrot.lane.b32.xlu0 %v727, 24
      %v913 = vpop.permute.xlu0 %912
      %914 = vrot.lane.b32.xlu0 %v728, 24
      %v915 = vpop.permute.xlu0 %914
      %916 = vrot.lane.b32.xlu0 %v729, 24
      %v917 = vpop.permute.xlu0 %916
      %918 = vrot.lane.b32.xlu0 %v832, 24
      %v919 = vpop.permute.xlu0 %918
      %920 = vrot.lane.b32.xlu0 %v901, 24
      %v921 = vpop.permute.xlu0 %920
      %v922 = vunpack.c.l.b16 %v679
      %v923 = vunpack.c.l.b16 %v689
      %v924 = vpack.c.b16 %v923, %v922
      %925 = vrot.lane.b32.xlu0 %v752, 28
      %v926 = vpop.permute.xlu0 %925
      %927 = vrot.lane.b32.xlu0 %v753, 28
      %v928 = vpop.permute.xlu0 %927
      %929 = vrot.lane.b32.xlu0 %v754, 28
      %v930 = vpop.permute.xlu0 %929
      %931 = vrot.lane.b32.xlu0 %v755, 28
      %v932 = vpop.permute.xlu0 %931
      %933 = vrot.lane.b32.xlu0 %v756, 28
      %v934 = vpop.permute.xlu0 %933
      %935 = vrot.lane.b32.xlu0 %v757, 28
      %v936 = vpop.permute.xlu0 %935
      %937 = vrot.lane.b32.xlu0 %v758, 28
      %v938 = vpop.permute.xlu0 %937
      %939 = vrot.lane.b32.xlu0 %v759, 28
      %v940 = vpop.permute.xlu0 %939
      %941 = vrot.lane.b32.xlu0 %v855, 28
      %v942 = vpop.permute.xlu0 %941
      %943 = vrot.lane.b32.xlu0 %v924, 28
      %v944 = vpop.permute.xlu0 %943
      %v945 = vunpack.c.l.b16 %v696
      %v946 = vunpack.c.l.b16 %v699
      %v947 = vpack.c.b16 %v946, %v945
      %948 = vrot.lane.b32.xlu0 %v802, 32
      %v949 = vpop.permute.xlu0 %948
      %950 = vrot.lane.b32.xlu0 %v803, 32
      %v951 = vpop.permute.xlu0 %950
      %952 = vrot.lane.b32.xlu0 %v804, 32
      %v953 = vpop.permute.xlu0 %952
      %954 = vrot.lane.b32.xlu0 %v805, 32
      %v955 = vpop.permute.xlu0 %954
      %956 = vrot.lane.b32.xlu0 %v806, 32
      %v957 = vpop.permute.xlu0 %956
      %958 = vrot.lane.b32.xlu0 %v807, 32
      %v959 = vpop.permute.xlu0 %958
      %960 = vrot.lane.b32.xlu0 %v808, 32
      %v961 = vpop.permute.xlu0 %960
      %962 = vrot.lane.b32.xlu0 %v809, 32
      %v963 = vpop.permute.xlu0 %962
      %964 = vrot.lane.b32.xlu0 %v878, 32
      %v965 = vpop.permute.xlu0 %964
      %966 = vrot.lane.b32.xlu0 %v947, 32
      %v967 = vpop.permute.xlu0 %966
      %vm968 = vcmask 31744
      %v971 = vsel %vm968, %v720, %v761
      %v974 = vsel %vm968, %v721, %v763
      %v977 = vsel %vm968, %v722, %v765
      %v980 = vsel %vm968, %v723, %v767
      %v983 = vsel %vm968, %v724, %v769
      %v986 = vsel %vm968, %v725, %v771
      %v989 = vsel %vm968, %v726, %v773
      %v992 = vsel %vm968, %v727, %v775
      %v995 = vsel %vm968, %v728, %v777
      %v998 = vsel %vm968, %v729, %v779
      %vm999 = vcmask 64512
      %v1001 = vsel %vm999, %v971, %v811
      %v1003 = vsel %vm999, %v974, %v813
      %v1005 = vsel %vm999, %v977, %v815
      %v1007 = vsel %vm999, %v980, %v817
      %v1009 = vsel %vm999, %v983, %v819
      %v1011 = vsel %vm999, %v986, %v821
      %v1013 = vsel %vm999, %v989, %v823
      %v1015 = vsel %vm999, %v992, %v825
      %v1017 = vsel %vm999, %v995, %v827
      %v1019 = vsel %vm999, %v998, %v829
      %vm1020 = vcmask 97280
      %v1022 = vsel %vm1020, %v1001, %v834
      %v1024 = vsel %vm1020, %v1003, %v836
      %v1026 = vsel %vm1020, %v1005, %v838
      %v1028 = vsel %vm1020, %v1007, %v840
      %v1030 = vsel %vm1020, %v1009, %v842
      %v1032 = vsel %vm1020, %v1011, %v844
      %v1034 = vsel %vm1020, %v1013, %v846
      %v1036 = vsel %vm1020, %v1015, %v848
      %v1038 = vsel %vm1020, %v1017, %v850
      %v1040 = vsel %vm1020, %v1019, %v852
      %vm1041 = vcmask 130048
      %v1043 = vsel %vm1041, %v1022, %v857
      %v1045 = vsel %vm1041, %v1024, %v859
      %v1047 = vsel %vm1041, %v1026, %v861
      %v1049 = vsel %vm1041, %v1028, %v863
      %v1051 = vsel %vm1041, %v1030, %v865
      %v1053 = vsel %vm1041, %v1032, %v867
      %v1055 = vsel %vm1041, %v1034, %v869
      %v1057 = vsel %vm1041, %v1036, %v871
      %v1059 = vsel %vm1041, %v1038, %v873
      %v1061 = vsel %vm1041, %v1040, %v875
      %vm1062 = vcmask 162816
      %v1064 = vsel %vm1062, %v1043, %v880
      %v1066 = vsel %vm1062, %v1045, %v882
      %v1068 = vsel %vm1062, %v1047, %v884
      %v1070 = vsel %vm1062, %v1049, %v886
      %v1072 = vsel %vm1062, %v1051, %v888
      %v1074 = vsel %vm1062, %v1053, %v890
      %v1076 = vsel %vm1062, %v1055, %v892
      %v1078 = vsel %vm1062, %v1057, %v894
      %v1080 = vsel %vm1062, %v1059, %v896
      %v1082 = vsel %vm1062, %v1061, %v898
      %vm1083 = vcmask 195584
      %v1085 = vsel %vm1083, %v1064, %v903
      %v1087 = vsel %vm1083, %v1066, %v905
      %v1089 = vsel %vm1083, %v1068, %v907
      %v1091 = vsel %vm1083, %v1070, %v909
      %v1093 = vsel %vm1083, %v1072, %v911
      %v1095 = vsel %vm1083, %v1074, %v913
      %v1097 = vsel %vm1083, %v1076, %v915
      %v1099 = vsel %vm1083, %v1078, %v917
      %v1101 = vsel %vm1083, %v1080, %v919
      %v1103 = vsel %vm1083, %v1082, %v921
      %vm1104 = vcmask 228352
      %v1106 = vsel %vm1104, %v1085, %v926
      %v1108 = vsel %vm1104, %v1087, %v928
      %v1110 = vsel %vm1104, %v1089, %v930
      %v1112 = vsel %vm1104, %v1091, %v932
      %v1114 = vsel %vm1104, %v1093, %v934
      %v1116 = vsel %vm1104, %v1095, %v936
      %v1118 = vsel %vm1104, %v1097, %v938
      %v1120 = vsel %vm1104, %v1099, %v940
      %v1122 = vsel %vm1104, %v1101, %v942
      %v1124 = vsel %vm1104, %v1103, %v944
      %vm1125 = vcmask 261120
      %v1127 = vsel %vm1125, %v1106, %v949
      %v1129 = vsel %vm1125, %v1108, %v951
      %v1131 = vsel %vm1125, %v1110, %v953
      %v1133 = vsel %vm1125, %v1112, %v955
      %v1135 = vsel %vm1125, %v1114, %v957
      %v1137 = vsel %vm1125, %v1116, %v959
      %v1139 = vsel %vm1125, %v1118, %v961
      %v1141 = vsel %vm1125, %v1120, %v963
      %v1143 = vsel %vm1125, %v1122, %v965
      %v1145 = vsel %vm1125, %v1124, %v967
      %v1146 = vld [vmem:[%s1] sm:$0xf]
      %v1147 = vld [vmem:[%s1 + $0x4] sm:$0xf]
      %v1148 = vld [vmem:[%s1 + $0x8] sm:$0xf]
      %v1149 = vld [vmem:[%s1 + $0xc] sm:$0xf]
      %v1150 = vld [vmem:[%s1 + $0x10] sm:$0x3]
      %v1151 = vld [vmem:[%s2] sm:$0x1]
      %v1153 = vperm.slane %v1151, 0
      %v1160 = vunpack.c.l.b16 %v1146
      %v1161 = vunpack.c.l.b16 %v1147
      %v1162 = vunpack.c.l.b16 %v1148
      %v1163 = vunpack.c.l.b16 %v1149
      %v1164 = vunpack.c.l.b16 %v1150
      %v1165 = vpack.c.b16 %v1161, %v1160
      %v1166 = vpack.c.b16 %v1163, %v1162
      %v1167 = vpack.c.b16 %v1164, %v1164
      %vm1170 = vcmask 293888
      %v1171 = vsel %vm1170, %v1127, 0
      %v1173 = vsel %vm1170, %v1129, 0
      %v1175 = vsel %vm1170, %v1131, 0
      %v1177 = vsel %vm1170, %v1133, 0
      %v1179 = vsel %vm1170, %v1135, 0
      %v1181 = vsel %vm1170, %v1137, 0
      %v1183 = vsel %vm1170, %v1139, 0
      %v1185 = vsel %vm1170, %v1141, 0
      %v1187 = vsel %vm1170, %v1143, 0
      %v1189 = vsel %vm1170, %v1145, 0
      %vm1191 = vcmask 1041408
      %v1193 = vsel %vm1191, %v1167, 0
      %1195 = vmatpush.bf16.msra.mxu0 0
      %1196 = vmatpush.bf16.msra.mxu0 0
      %1197 = vmatpush.bf16.msra.mxu0 0
      %1198 = vmatpush.bf16.msra.mxu0 0
      %1199 = vmatpush.bf16.msra.mxu0 0
      %1200 = vmatpush.bf16.msra.mxu0 %v1193
      %1201 = vmatpush.bf16.msra.mxu0 %v1166
      %1202 = vmatpush.bf16.msra.mxu0 %v1165
      %1203 = vmatmul.bf16.gmra.mxu0 %v1171
      %v1204 = vpop.f32.mrf.mxu0
      %v1205 = vadd.f32 %v1153, %v1204
      %v1206 = vpop.f32.mrf.mxu0
      %v1207 = vadd.f32 %v1153, %v1206
      %1208 = vmatmul.bf16.gmra.mxu0 %v1173
      %v1209 = vpop.f32.mrf.mxu0
      %v1210 = vadd.f32 %v1153, %v1209
      %v1211 = vpop.f32.mrf.mxu0
      %v1212 = vadd.f32 %v1153, %v1211
      %1213 = vmatmul.bf16.gmra.mxu0 %v1175
      %v1214 = vpop.f32.mrf.mxu0
      %v1215 = vadd.f32 %v1153, %v1214
      %v1216 = vpop.f32.mrf.mxu0
      %v1217 = vadd.f32 %v1153, %v1216
      %1218 = vmatmul.bf16.gmra.mxu0 %v1177
      %v1219 = vpop.f32.mrf.mxu0
      %v1220 = vadd.f32 %v1153, %v1219
      %v1221 = vpop.f32.mrf.mxu0
      %v1222 = vadd.f32 %v1153, %v1221
      %1223 = vmatmul.bf16.gmra.mxu0 %v1179
      %v1224 = vpop.f32.mrf.mxu0
      %v1225 = vadd.f32 %v1153, %v1224
      %v1226 = vpop.f32.mrf.mxu0
      %v1227 = vadd.f32 %v1153, %v1226
      %1228 = vmatmul.bf16.gmra.mxu0 %v1181
      %v1229 = vpop.f32.mrf.mxu0
      %v1230 = vadd.f32 %v1153, %v1229
      %v1231 = vpop.f32.mrf.mxu0
      %v1232 = vadd.f32 %v1153, %v1231
      %1233 = vmatmul.bf16.gmra.mxu0 %v1183
      %v1234 = vpop.f32.mrf.mxu0
      %v1235 = vadd.f32 %v1153, %v1234
      %v1236 = vpop.f32.mrf.mxu0
      %v1237 = vadd.f32 %v1153, %v1236
      %1238 = vmatmul.bf16.gmra.mxu0 %v1185
      %v1239 = vpop.f32.mrf.mxu0
      %v1240 = vadd.f32 %v1153, %v1239
      %v1241 = vpop.f32.mrf.mxu0
      %v1242 = vadd.f32 %v1153, %v1241
      %1243 = vmatmul.bf16.gmra.mxu0 %v1187
      %v1244 = vpop.f32.mrf.mxu0
      %v1245 = vadd.f32 %v1153, %v1244
      %v1246 = vpop.f32.mrf.mxu0
      %v1247 = vadd.f32 %v1153, %v1246
      %1248 = vmatmul.bf16.gmra.mxu0 %v1189
      %v1249 = vpop.f32.mrf.mxu0
      %v1250 = vadd.f32 %v1153, %v1249
      %v1251 = vpop.f32.mrf.mxu0
      %v1252 = vadd.f32 %v1153, %v1251
      %1253 = vdwg.mxu0
      %v1254 = vmax.f32 %v1205, 0.0
      %v1255 = vmax.f32 %v1207, 0.0
      %v1256 = vmax.f32 %v1210, 0.0
      %v1257 = vmax.f32 %v1212, 0.0
      %v1258 = vmax.f32 %v1215, 0.0
      %v1259 = vmax.f32 %v1217, 0.0
      %v1260 = vmax.f32 %v1220, 0.0
      %v1261 = vmax.f32 %v1222, 0.0
      %v1262 = vmax.f32 %v1225, 0.0
      %v1263 = vmax.f32 %v1227, 0.0
      %v1264 = vmax.f32 %v1230, 0.0
      %v1265 = vmax.f32 %v1232, 0.0
      %v1266 = vmax.f32 %v1235, 0.0
      %v1267 = vmax.f32 %v1237, 0.0
      %v1268 = vmax.f32 %v1240, 0.0
      %v1269 = vmax.f32 %v1242, 0.0
      %v1270 = vmax.f32 %v1245, 0.0
      %v1271 = vmax.f32 %v1247, 0.0
      %v1272 = vmax.f32 %v1250, 0.0
      %v1273 = vmax.f32 %v1252, 0.0
      %v1274 = vpack.c.bf16 %v1254, %v1254
      %v1275 = vpack.c.bf16 %v1255, %v1255
      %v1276 = vpack.c.bf16 %v1256, %v1256
      %v1277 = vpack.c.bf16 %v1257, %v1257
      %v1278 = vpack.c.bf16 %v1258, %v1258
      %v1279 = vpack.c.bf16 %v1259, %v1259
      %v1280 = vpack.c.bf16 %v1260, %v1260
      %v1281 = vpack.c.bf16 %v1261, %v1261
      %v1282 = vpack.c.bf16 %v1262, %v1262
      %v1283 = vpack.c.bf16 %v1263, %v1263
      %v1284 = vpack.c.bf16 %v1264, %v1264
      %v1285 = vpack.c.bf16 %v1265, %v1265
      %v1286 = vpack.c.bf16 %v1266, %v1266
      %v1287 = vpack.c.bf16 %v1267, %v1267
      %v1288 = vpack.c.bf16 %v1268, %v1268
      %v1289 = vpack.c.bf16 %v1269, %v1269
      %v1290 = vpack.c.bf16 %v1270, %v1270
      %v1291 = vpack.c.bf16 %v1271, %v1271
      %v1292 = vpack.c.bf16 %v1272, %v1272
      %v1293 = vpack.c.bf16 %v1273, %v1273
      %v1314 = vunpack.c.l.b16 %v1274
      %v1315 = vunpack.c.l.b16 %v1275
      %v1316 = vunpack.c.l.b16 %v1276
      %v1317 = vunpack.c.l.b16 %v1277
      %v1318 = vunpack.c.l.b16 %v1278
      %v1319 = vunpack.c.l.b16 %v1279
      %v1320 = vunpack.c.l.b16 %v1280
      %v1321 = vunpack.c.l.b16 %v1281
      %v1322 = vunpack.c.l.b16 %v1282
      %v1323 = vunpack.c.l.b16 %v1283
      %v1324 = vunpack.c.l.b16 %v1284
      %v1325 = vunpack.c.l.b16 %v1285
      %v1326 = vunpack.c.l.b16 %v1286
      %v1327 = vunpack.c.l.b16 %v1287
      %v1328 = vunpack.c.l.b16 %v1288
      %v1329 = vunpack.c.l.b16 %v1289
      %v1330 = vunpack.c.l.b16 %v1290
      %v1331 = vunpack.c.l.b16 %v1291
      %v1332 = vunpack.c.l.b16 %v1292
      %v1333 = vunpack.c.l.b16 %v1293
      %v1334 = vpack.c.b16 %v1315, %v1314
      %v1335 = vpack.c.b16 %v1317, %v1316
      %v1336 = vpack.c.b16 %v1319, %v1318
      %v1337 = vpack.c.b16 %v1321, %v1320
      %v1338 = vpack.c.b16 %v1323, %v1322
      %v1339 = vpack.c.b16 %v1325, %v1324
      %v1340 = vpack.c.b16 %v1327, %v1326
      %v1341 = vpack.c.b16 %v1329, %v1328
      %v1342 = vpack.c.b16 %v1331, %v1330
      %v1343 = vpack.c.b16 %v1333, %v1332
      %v1345 = vshrl.u32 %v1334, 16
      %v1347 = vrot.slane %v1345, 7
      %v1348 = vshll.u32 %v1334, 16
      %v1350 = vor.u32 %v1347, %v1348
      %v1352 = vshrl.u32 %v1335, 16
      %v1354 = vrot.slane %v1352, 7
      %v1355 = vshll.u32 %v1335, 16
      %v1357 = vor.u32 %v1354, %v1355
      %v1359 = vshrl.u32 %v1336, 16
      %v1361 = vrot.slane %v1359, 7
      %v1362 = vshll.u32 %v1336, 16
      %v1364 = vor.u32 %v1361, %v1362
      %v1366 = vshrl.u32 %v1337, 16
      %v1368 = vrot.slane %v1366, 7
      %v1369 = vshll.u32 %v1337, 16
      %v1371 = vor.u32 %v1368, %v1369
      %v1373 = vshrl.u32 %v1338, 16
      %v1375 = vrot.slane %v1373, 7
      %v1376 = vshll.u32 %v1338, 16
      %v1378 = vor.u32 %v1375, %v1376
      %v1380 = vshrl.u32 %v1339, 16
      %v1382 = vrot.slane %v1380, 7
      %v1383 = vshll.u32 %v1339, 16
      %v1385 = vor.u32 %v1382, %v1383
      %v1387 = vshrl.u32 %v1340, 16
      %v1389 = vrot.slane %v1387, 7
      %v1390 = vshll.u32 %v1340, 16
      %v1392 = vor.u32 %v1389, %v1390
      %v1394 = vshrl.u32 %v1341, 16
      %v1396 = vrot.slane %v1394, 7
      %v1397 = vshll.u32 %v1341, 16
      %v1399 = vor.u32 %v1396, %v1397
      %v1401 = vshrl.u32 %v1342, 16
      %v1403 = vrot.slane %v1401, 7
      %v1404 = vshll.u32 %v1342, 16
      %v1406 = vor.u32 %v1403, %v1404
      %v1408 = vshrl.u32 %v1343, 16
      %v1410 = vrot.slane %v1408, 7
      %v1411 = vshll.u32 %v1343, 16
      %v1413 = vor.u32 %v1410, %v1411
      %vm1434 = vcmask 1040384
      %vm1435 = vsmask.f32 256
      %vm1436 = vmand %vm1434, %vm1435
      %v1437 = vsel %vm1436, 0, %v1350
      %v1438 = vsel %vm1436, 0, %v1357
      %v1439 = vsel %vm1436, 0, %v1364
      %v1440 = vsel %vm1436, 0, %v1371
      %v1441 = vsel %vm1436, 0, %v1378
      %v1442 = vsel %vm1436, 0, %v1385
      %v1443 = vsel %vm1436, 0, %v1392
      %v1444 = vsel %vm1436, 0, %v1399
      %v1445 = vsel %vm1436, 0, %v1406
      %v1446 = vsel %vm1436, 0, %v1413
      %v1447 = vsel %vm1436, %v1347, 0
      %v1448 = vsel %vm1436, %v1354, 0
      %v1449 = vsel %vm1436, %v1361, 0
      %v1450 = vsel %vm1436, %v1368, 0
      %v1451 = vsel %vm1436, %v1375, 0
      %v1452 = vsel %vm1436, %v1382, 0
      %v1453 = vsel %vm1436, %v1389, 0
      %v1454 = vsel %vm1436, %v1396, 0
      %v1455 = vsel %vm1436, %v1403, 0
      %v1456 = vsel %vm1436, %v1410, 0
      %v1477 = vunpack.c.l.b16 %v1437
      %v1478 = vunpack.c.h.b16 %v1437
      %v1479 = vunpack.c.l.b16 %v1447
      %v1480 = vunpack.c.l.b16 %v1438
      %v1481 = vunpack.c.h.b16 %v1438
      %v1482 = vunpack.c.l.b16 %v1448
      %v1483 = vunpack.c.l.b16 %v1439
      %v1484 = vunpack.c.h.b16 %v1439
      %v1485 = vunpack.c.l.b16 %v1449
      %v1486 = vunpack.c.l.b16 %v1440
      %v1487 = vunpack.c.h.b16 %v1440
      %v1488 = vunpack.c.l.b16 %v1450
      %v1489 = vunpack.c.l.b16 %v1441
      %v1490 = vunpack.c.h.b16 %v1441
      %v1491 = vunpack.c.l.b16 %v1451
      %v1492 = vunpack.c.l.b16 %v1442
      %v1493 = vunpack.c.h.b16 %v1442
      %v1494 = vunpack.c.l.b16 %v1452
      %v1495 = vunpack.c.l.b16 %v1443
      %v1496 = vunpack.c.h.b16 %v1443
      %v1497 = vunpack.c.l.b16 %v1453
      %v1498 = vunpack.c.l.b16 %v1444
      %v1499 = vunpack.c.h.b16 %v1444
      %v1500 = vunpack.c.l.b16 %v1454
      %v1501 = vunpack.c.l.b16 %v1445
      %v1502 = vunpack.c.h.b16 %v1445
      %v1503 = vunpack.c.l.b16 %v1455
      %v1504 = vunpack.c.l.b16 %v1446
      %v1505 = vunpack.c.h.b16 %v1446
      %v1506 = vunpack.c.l.b16 %v1456
      %v1507 = vpack.c.b16 %v1477, %v1477
      %v1508 = vpack.c.b16 %v1478, %v1478
      %v1509 = vpack.c.b16 %v1479, %v1479
      %v1510 = vpack.c.b16 %v1480, %v1480
      %v1511 = vpack.c.b16 %v1481, %v1481
      %v1512 = vpack.c.b16 %v1482, %v1482
      %v1513 = vpack.c.b16 %v1483, %v1483
      %v1514 = vpack.c.b16 %v1484, %v1484
      %v1515 = vpack.c.b16 %v1485, %v1485
      %v1516 = vpack.c.b16 %v1486, %v1486
      %v1517 = vpack.c.b16 %v1487, %v1487
      %v1518 = vpack.c.b16 %v1488, %v1488
      %v1519 = vpack.c.b16 %v1489, %v1489
      %v1520 = vpack.c.b16 %v1490, %v1490
      %v1521 = vpack.c.b16 %v1491, %v1491
      %v1522 = vpack.c.b16 %v1492, %v1492
      %v1523 = vpack.c.b16 %v1493, %v1493
      %v1524 = vpack.c.b16 %v1494, %v1494
      %v1525 = vpack.c.b16 %v1495, %v1495
      %v1526 = vpack.c.b16 %v1496, %v1496
      %v1527 = vpack.c.b16 %v1497, %v1497
      %v1528 = vpack.c.b16 %v1498, %v1498
      %v1529 = vpack.c.b16 %v1499, %v1499
      %v1530 = vpack.c.b16 %v1500, %v1500
      %v1531 = vpack.c.b16 %v1501, %v1501
      %v1532 = vpack.c.b16 %v1502, %v1502
      %v1533 = vpack.c.b16 %v1503, %v1503
      %v1534 = vpack.c.b16 %v1504, %v1504
      %v1535 = vpack.c.b16 %v1505, %v1505
      %v1536 = vpack.c.b16 %v1506, %v1506
      %1567 = vst [vmem:[#allocation2] sm:$0xf] %v1507
      %1568 = vst [vmem:[#allocation2 + $0x4] sm:$0xf] %v1508
      %1569 = vst [vmem:[#allocation2 + $0x8] sm:$0x1] %v1509
      %1570 = vst [vmem:[#allocation2 + $0xc] sm:$0xf] %v1510
      %1571 = vst [vmem:[#allocation2 + $0x10] sm:$0xf] %v1511
      %1572 = vst [vmem:[#allocation2 + $0x14] sm:$0x1] %v1512
      %1573 = vst [vmem:[#allocation2 + $0x18] sm:$0xf] %v1513
      %1574 = vst [vmem:[#allocation2 + $0x1c] sm:$0xf] %v1514
      %1575 = vst [vmem:[#allocation2 + $0x20] sm:$0x1] %v1515
      %1576 = vst [vmem:[#allocation2 + $0x24] sm:$0xf] %v1516
      %1577 = vst [vmem:[#allocation2 + $0x28] sm:$0xf] %v1517
      %1578 = vst [vmem:[#allocation2 + $0x2c] sm:$0x1] %v1518
      %1579 = vst [vmem:[#allocation2 + $0x30] sm:$0xf] %v1519
      %1580 = vst [vmem:[#allocation2 + $0x34] sm:$0xf] %v1520
      %1581 = vst [vmem:[#allocation2 + $0x38] sm:$0x1] %v1521
      %1582 = vst [vmem:[#allocation2 + $0x3c] sm:$0xf] %v1522
      %1583 = vst [vmem:[#allocation2 + $0x40] sm:$0xf] %v1523
      %1584 = vst [vmem:[#allocation2 + $0x44] sm:$0x1] %v1524
      %1585 = vst [vmem:[#allocation2 + $0x48] sm:$0xf] %v1525
      %1586 = vst [vmem:[#allocation2 + $0x4c] sm:$0xf] %v1526
      %1587 = vst [vmem:[#allocation2 + $0x50] sm:$0x1] %v1527
      %1588 = vst [vmem:[#allocation2 + $0x54] sm:$0xf] %v1528
      %1589 = vst [vmem:[#allocation2 + $0x58] sm:$0xf] %v1529
      %1590 = vst [vmem:[#allocation2 + $0x5c] sm:$0x1] %v1530
      %1591 = vst [vmem:[#allocation2 + $0x60] sm:$0xf] %v1531
      %1592 = vst [vmem:[#allocation2 + $0x64] sm:$0xf] %v1532
      %1593 = vst [vmem:[#allocation2 + $0x68] sm:$0x1] %v1533
      %1594 = vst [vmem:[#allocation2 + $0x6c] sm:$0xf] %v1534
      %1595 = vst [vmem:[#allocation2 + $0x70] sm:$0xf] %v1535
      %1596 = vst [vmem:[#allocation2 + $0x74] sm:$0x1] %v1536
      %p1597 = scmp.eq.s32.totalorder %s21, 0
      // Predicated region
      $region41: #{_model.1} parent=39 // pred_check
        %p1598 = pneg %p1597
      $region42: #{_model.1} parent=39 // pred_check_branch
        %1600 = sbr.rel (%p1598) target = $region44
      $region43: #{_model.1} parent=39 // pred_region
        %1601 = vst [vmem:[#allocation2] sm:$0xf] 0
        %1602 = vst [vmem:[#allocation2 + $0x4] sm:$0xf] 0
        %1603 = vst [vmem:[#allocation2 + $0x8] sm:$0x1] 0
      $region44: #{_model.1} parent=39 // pred_fallthru
        _
      %p1604 = scmp.eq.s32.totalorder %s21, 1
      // Predicated region
      $region45: #{_model.1} parent=39 // pred_check
        %p1605 = pneg %p1604
      $region46: #{_model.1} parent=39 // pred_check_branch
        %1607 = sbr.rel (%p1605) target = $region48
      $region47: #{_model.1} parent=39 // pred_region
        %s1608 = scalar_lea.vmem [#allocation2], 108
        %1609 = vst [vmem:[%s1608] sm:$0xf] 0
        %1610 = vst [vmem:[%s1608 + $0x4] sm:$0xf] 0
        %1611 = vst [vmem:[%s1608 + $0x8] sm:$0x1] 0
      $region48: #{_model.1} parent=39 // pred_fallthru
        _
      %v1612 = vld [vmem:[#allocation2] sm:$0xf]
      %v1613 = vld [vmem:[#allocation2 + $0x4] sm:$0xf]
      %v1614 = vld [vmem:[#allocation2 + $0xc] sm:$0xf]
      %v1615 = vld [vmem:[#allocation2 + $0x10] sm:$0xf]
      %v1616 = vld [vmem:[#allocation2 + $0x18] sm:$0xf]
      %v1617 = vld [vmem:[#allocation2 + $0x1c] sm:$0xf]
      %v1618 = vld [vmem:[#allocation2 + $0x24] sm:$0xf]
      %v1619 = vld [vmem:[#allocation2 + $0x28] sm:$0xf]
      %v1620 = vld [vmem:[#allocation2 + $0x30] sm:$0xf]
      %v1621 = vld [vmem:[#allocation2 + $0x34] sm:$0xf]
      %v1622 = vld [vmem:[#allocation2 + $0x3c] sm:$0xf]
      %v1623 = vld [vmem:[#allocation2 + $0x40] sm:$0xf]
      %v1624 = vld [vmem:[#allocation2 + $0x48] sm:$0xf]
      %v1625 = vld [vmem:[#allocation2 + $0x4c] sm:$0xf]
      %v1626 = vld [vmem:[#allocation2 + $0x54] sm:$0xf]
      %v1627 = vld [vmem:[#allocation2 + $0x58] sm:$0xf]
      %v1628 = vld [vmem:[%s3] sm:$0xf]
      %v1629 = vld [vmem:[%s3 + $0x4] sm:$0xf]
      %v1630 = vld [vmem:[%s3 + $0x8] sm:$0xf]
      %v1631 = vld [vmem:[%s3 + $0xc] sm:$0xf]
      %v1632 = vld [vmem:[%s3 + $0x10] sm:$0xf]
      %v1633 = vld [vmem:[%s3 + $0x14] sm:$0xf]
      %v1634 = vld [vmem:[%s3 + $0x18] sm:$0xf]
      %v1635 = vld [vmem:[%s3 + $0x1c] sm:$0xf]
      %v1636 = vld [vmem:[%s3 + $0x20] sm:$0xf]
      %v1637 = vld [vmem:[%s3 + $0x24] sm:$0xf]
      %v1638 = vld [vmem:[%s3 + $0x28] sm:$0xf]
      %v1639 = vld [vmem:[%s3 + $0x2c] sm:$0xf]
      %v1640 = vld [vmem:[%s3 + $0x30] sm:$0xf]
      %v1641 = vld [vmem:[%s3 + $0x34] sm:$0xf]
      %v1642 = vld [vmem:[%s3 + $0x38] sm:$0xf]
      %v1643 = vld [vmem:[%s3 + $0x3c] sm:$0xf]
      %v1644 = vld [vmem:[#allocation2 + $0x8] sm:$0x1]
      %v1645 = vld [vmem:[#allocation2 + $0x14] sm:$0x1]
      %v1646 = vld [vmem:[#allocation2 + $0x20] sm:$0x1]
      %v1647 = vld [vmem:[#allocation2 + $0x2c] sm:$0x1]
      %v1648 = vld [vmem:[#allocation2 + $0x38] sm:$0x1]
      %v1649 = vld [vmem:[#allocation2 + $0x44] sm:$0x1]
      %v1650 = vld [vmem:[#allocation2 + $0x50] sm:$0x1]
      %v1651 = vld [vmem:[#allocation2 + $0x5c] sm:$0x1]
      %v1653 = vshrl.u32 %v1612, 16
      %v1655 = vrot.slane %v1653, 4
      %v1656 = vshll.u32 %v1612, 16
      %v1658 = vrot.slane %v1656, 5
      %v1659 = vor.u32 %v1655, %v1658
      %v1660 = vrot.slane %v1659, 4
      %v1662 = vshll.u32 %v1613, 16
      %v1664 = vrot.slane %v1662, 5
      %v1665 = vsel %vm288, %v1660, %v1664
      %v1666 = vshrl.u32 %v1613, 16
      %v1668 = vrot.slane %v1666, 4
      %v1669 = vor.u32 %v1668, %v1664
      %v1670 = vrot.slane %v1669, 4
      %v1672 = vshll.u32 %v1644, 16
      %v1674 = vrot.slane %v1672, 5
      %v1675 = vsel %vm288, %v1670, %v1674
      %v1677 = vshrl.u32 %v1614, 16
      %v1679 = vrot.slane %v1677, 4
      %v1680 = vshll.u32 %v1614, 16
      %v1682 = vrot.slane %v1680, 5
      %v1683 = vor.u32 %v1679, %v1682
      %v1684 = vrot.slane %v1683, 4
      %v1686 = vshll.u32 %v1615, 16
      %v1688 = vrot.slane %v1686, 5
      %v1689 = vsel %vm288, %v1684, %v1688
      %v1690 = vshrl.u32 %v1615, 16
      %v1692 = vrot.slane %v1690, 4
      %v1693 = vor.u32 %v1692, %v1688
      %v1694 = vrot.slane %v1693, 4
      %v1696 = vshll.u32 %v1645, 16
      %v1698 = vrot.slane %v1696, 5
      %v1699 = vsel %vm288, %v1694, %v1698
      %v1701 = vshrl.u32 %v1616, 16
      %v1703 = vrot.slane %v1701, 4
      %v1704 = vshll.u32 %v1616, 16
      %v1706 = vrot.slane %v1704, 5
      %v1707 = vor.u32 %v1703, %v1706
      %v1708 = vrot.slane %v1707, 4
      %v1710 = vshll.u32 %v1617, 16
      %v1712 = vrot.slane %v1710, 5
      %v1713 = vsel %vm288, %v1708, %v1712
      %v1714 = vshrl.u32 %v1617, 16
      %v1716 = vrot.slane %v1714, 4
      %v1717 = vor.u32 %v1716, %v1712
      %v1718 = vrot.slane %v1717, 4
      %v1720 = vshll.u32 %v1646, 16
      %v1722 = vrot.slane %v1720, 5
      %v1723 = vsel %vm288, %v1718, %v1722
      %v1725 = vshrl.u32 %v1618, 16
      %v1727 = vrot.slane %v1725, 4
      %v1728 = vshll.u32 %v1618, 16
      %v1730 = vrot.slane %v1728, 5
      %v1731 = vor.u32 %v1727, %v1730
      %v1732 = vrot.slane %v1731, 4
      %v1734 = vshll.u32 %v1619, 16
      %v1736 = vrot.slane %v1734, 5
      %v1737 = vsel %vm288, %v1732, %v1736
      %v1738 = vshrl.u32 %v1619, 16
      %v1740 = vrot.slane %v1738, 4
      %v1741 = vor.u32 %v1740, %v1736
      %v1742 = vrot.slane %v1741, 4
      %v1744 = vshll.u32 %v1647, 16
      %v1746 = vrot.slane %v1744, 5
      %v1747 = vsel %vm288, %v1742, %v1746
      %v1749 = vshrl.u32 %v1620, 16
      %v1751 = vrot.slane %v1749, 4
      %v1752 = vshll.u32 %v1620, 16
      %v1754 = vrot.slane %v1752, 5
      %v1755 = vor.u32 %v1751, %v1754
      %v1756 = vrot.slane %v1755, 4
      %v1758 = vshll.u32 %v1621, 16
      %v1760 = vrot.slane %v1758, 5
      %v1761 = vsel %vm288, %v1756, %v1760
      %v1762 = vshrl.u32 %v1621, 16
      %v1764 = vrot.slane %v1762, 4
      %v1765 = vor.u32 %v1764, %v1760
      %v1766 = vrot.slane %v1765, 4
      %v1768 = vshll.u32 %v1648, 16
      %v1770 = vrot.slane %v1768, 5
      %v1771 = vsel %vm288, %v1766, %v1770
      %v1773 = vshrl.u32 %v1622, 16
      %v1775 = vrot.slane %v1773, 4
      %v1776 = vshll.u32 %v1622, 16
      %v1778 = vrot.slane %v1776, 5
      %v1779 = vor.u32 %v1775, %v1778
      %v1780 = vrot.slane %v1779, 4
      %v1782 = vshll.u32 %v1623, 16
      %v1784 = vrot.slane %v1782, 5
      %v1785 = vsel %vm288, %v1780, %v1784
      %v1786 = vshrl.u32 %v1623, 16
      %v1788 = vrot.slane %v1786, 4
      %v1789 = vor.u32 %v1788, %v1784
      %v1790 = vrot.slane %v1789, 4
      %v1792 = vshll.u32 %v1649, 16
      %v1794 = vrot.slane %v1792, 5
      %v1795 = vsel %vm288, %v1790, %v1794
      %v1797 = vshrl.u32 %v1624, 16
      %v1799 = vrot.slane %v1797, 4
      %v1800 = vshll.u32 %v1624, 16
      %v1802 = vrot.slane %v1800, 5
      %v1803 = vor.u32 %v1799, %v1802
      %v1804 = vrot.slane %v1803, 4
      %v1806 = vshll.u32 %v1625, 16
      %v1808 = vrot.slane %v1806, 5
      %v1809 = vsel %vm288, %v1804, %v1808
      %v1810 = vshrl.u32 %v1625, 16
      %v1812 = vrot.slane %v1810, 4
      %v1813 = vor.u32 %v1812, %v1808
      %v1814 = vrot.slane %v1813, 4
      %v1816 = vshll.u32 %v1650, 16
      %v1818 = vrot.slane %v1816, 5
      %v1819 = vsel %vm288, %v1814, %v1818
      %v1821 = vshrl.u32 %v1626, 16
      %v1823 = vrot.slane %v1821, 4
      %v1824 = vshll.u32 %v1626, 16
      %v1826 = vrot.slane %v1824, 5
      %v1827 = vor.u32 %v1823, %v1826
      %v1828 = vrot.slane %v1827, 4
      %v1830 = vshll.u32 %v1627, 16
      %v1832 = vrot.slane %v1830, 5
      %v1833 = vsel %vm288, %v1828, %v1832
      %v1834 = vshrl.u32 %v1627, 16
      %v1836 = vrot.slane %v1834, 4
      %v1837 = vor.u32 %v1836, %v1832
      %v1838 = vrot.slane %v1837, 4
      %v1840 = vshll.u32 %v1651, 16
      %v1842 = vrot.slane %v1840, 5
      %v1843 = vsel %vm288, %v1838, %v1842
      %s1844 = scalar_lea.vmem %s3, 64
      %v1845 = vld [vmem:[%s1844] sm:$0xf]
      %v1846 = vld [vmem:[%s1844 + $0x4] sm:$0xf]
      %v1847 = vld [vmem:[%s1844 + $0x8] sm:$0xf]
      %v1848 = vld [vmem:[%s1844 + $0xc] sm:$0xf]
      %v1849 = vld [vmem:[%s1844 + $0x10] sm:$0xf]
      %v1850 = vld [vmem:[%s1844 + $0x14] sm:$0xf]
      %v1851 = vld [vmem:[%s1844 + $0x18] sm:$0xf]
      %v1852 = vld [vmem:[%s1844 + $0x1c] sm:$0xf]
      %v1853 = vld [vmem:[%s1844 + $0x20] sm:$0xf]
      %v1854 = vld [vmem:[%s1844 + $0x24] sm:$0xf]
      %v1855 = vld [vmem:[%s1844 + $0x28] sm:$0xf]
      %v1856 = vld [vmem:[%s1844 + $0x2c] sm:$0xf]
      %v1857 = vld [vmem:[%s1844 + $0x30] sm:$0xf]
      %v1858 = vld [vmem:[%s1844 + $0x34] sm:$0xf]
      %v1859 = vld [vmem:[%s1844 + $0x38] sm:$0xf]
      %v1860 = vld [vmem:[%s1844 + $0x3c] sm:$0xf]
      %v1861 = vunpack.c.l.b16 %v1665
      %v1862 = vunpack.c.l.b16 %v1675
      %v1863 = vunpack.c.l.b16 %v1689
      %v1864 = vunpack.c.l.b16 %v1699
      %v1865 = vunpack.c.l.b16 %v1713
      %v1866 = vunpack.c.l.b16 %v1723
      %v1867 = vunpack.c.l.b16 %v1737
      %v1868 = vunpack.c.l.b16 %v1747
      %v1869 = vunpack.c.l.b16 %v1761
      %v1870 = vunpack.c.l.b16 %v1771
      %v1871 = vunpack.c.l.b16 %v1785
      %v1872 = vunpack.c.l.b16 %v1795
      %v1873 = vunpack.c.l.b16 %v1809
      %v1874 = vunpack.c.l.b16 %v1819
      %v1875 = vunpack.c.l.b16 %v1833
      %v1876 = vunpack.c.l.b16 %v1843
      %v1877 = vpack.c.b16 %v1862, %v1861
      %v1878 = vpack.c.b16 %v1864, %v1863
      %v1879 = vpack.c.b16 %v1866, %v1865
      %v1880 = vpack.c.b16 %v1868, %v1867
      %v1881 = vpack.c.b16 %v1870, %v1869
      %v1882 = vpack.c.b16 %v1872, %v1871
      %v1883 = vpack.c.b16 %v1874, %v1873
      %v1884 = vpack.c.b16 %v1876, %v1875
      %v1909 = vunpack.c.l.b16 %v1845
      %v1910 = vunpack.c.l.b16 %v1846
      %v1911 = vunpack.c.l.b16 %v1847
      %v1912 = vunpack.c.l.b16 %v1848
      %v1913 = vunpack.c.l.b16 %v1849
      %v1914 = vunpack.c.l.b16 %v1850
      %v1915 = vunpack.c.l.b16 %v1851
      %v1916 = vunpack.c.l.b16 %v1852
      %v1917 = vunpack.c.l.b16 %v1853
      %v1918 = vunpack.c.l.b16 %v1854
      %v1919 = vunpack.c.l.b16 %v1855
      %v1920 = vunpack.c.l.b16 %v1856
      %v1921 = vunpack.c.l.b16 %v1857
      %v1922 = vunpack.c.l.b16 %v1858
      %v1923 = vunpack.c.l.b16 %v1859
      %v1924 = vunpack.c.l.b16 %v1860
      %v1925 = vpack.c.b16 %v1910, %v1909
      %v1926 = vpack.c.b16 %v1912, %v1911
      %v1927 = vpack.c.b16 %v1914, %v1913
      %v1928 = vpack.c.b16 %v1916, %v1915
      %v1929 = vpack.c.b16 %v1918, %v1917
      %v1930 = vpack.c.b16 %v1920, %v1919
      %v1931 = vpack.c.b16 %v1922, %v1921
      %v1932 = vpack.c.b16 %v1924, %v1923
      %1941 = vmatpush.bf16.msra.mxu0 %v1932
      %1942 = vmatpush.bf16.msra.mxu0 %v1931
      %1943 = vmatpush.bf16.msra.mxu0 %v1930
      %1944 = vmatpush.bf16.msra.mxu0 %v1929
      %1945 = vmatpush.bf16.msra.mxu0 %v1928
      %1946 = vmatpush.bf16.msra.mxu0 %v1927
      %1947 = vmatpush.bf16.msra.mxu0 %v1926
      %1948 = vmatpush.bf16.msra.mxu0 %v1925
      %1949 = vmatmul.bf16.gmra.mxu0 %v1877
      %v1950 = vpop.f32.mrf.mxu0
      %v1951 = vadd.f32 0.0, %v1950
      %v1952 = vpop.f32.mrf.mxu0
      %v1953 = vadd.f32 0.0, %v1952
      %1954 = vmatmul.bf16.gmra.mxu0 %v1878
      %v1955 = vpop.f32.mrf.mxu0
      %v1956 = vadd.f32 0.0, %v1955
      %v1957 = vpop.f32.mrf.mxu0
      %v1958 = vadd.f32 0.0, %v1957
      %1959 = vmatmul.bf16.gmra.mxu0 %v1879
      %v1960 = vpop.f32.mrf.mxu0
      %v1961 = vadd.f32 0.0, %v1960
      %v1962 = vpop.f32.mrf.mxu0
      %v1963 = vadd.f32 0.0, %v1962
      %1964 = vmatmul.bf16.gmra.mxu0 %v1880
      %v1965 = vpop.f32.mrf.mxu0
      %v1966 = vadd.f32 0.0, %v1965
      %v1967 = vpop.f32.mrf.mxu0
      %v1968 = vadd.f32 0.0, %v1967
      %1969 = vmatmul.bf16.gmra.mxu0 %v1881
      %v1970 = vpop.f32.mrf.mxu0
      %v1971 = vadd.f32 0.0, %v1970
      %v1972 = vpop.f32.mrf.mxu0
      %v1973 = vadd.f32 0.0, %v1972
      %1974 = vmatmul.bf16.gmra.mxu0 %v1882
      %v1975 = vpop.f32.mrf.mxu0
      %v1976 = vadd.f32 0.0, %v1975
      %v1977 = vpop.f32.mrf.mxu0
      %v1978 = vadd.f32 0.0, %v1977
      %1979 = vmatmul.bf16.gmra.mxu0 %v1883
      %v1980 = vpop.f32.mrf.mxu0
      %v1981 = vadd.f32 0.0, %v1980
      %v1982 = vpop.f32.mrf.mxu0
      %v1983 = vadd.f32 0.0, %v1982
      %1984 = vmatmul.bf16.gmra.mxu0 %v1884
      %v1985 = vpop.f32.mrf.mxu0
      %v1986 = vadd.f32 0.0, %v1985
      %v1987 = vpop.f32.mrf.mxu0
      %v1988 = vadd.f32 0.0, %v1987
      %1989 = vdwg.mxu0
      %v2006 = vunpack.c.l.b16 %v1612
      %v2007 = vunpack.c.l.b16 %v1613
      %v2008 = vunpack.c.l.b16 %v1614
      %v2009 = vunpack.c.l.b16 %v1615
      %v2010 = vunpack.c.l.b16 %v1616
      %v2011 = vunpack.c.l.b16 %v1617
      %v2012 = vunpack.c.l.b16 %v1618
      %v2013 = vunpack.c.l.b16 %v1619
      %v2014 = vunpack.c.l.b16 %v1620
      %v2015 = vunpack.c.l.b16 %v1621
      %v2016 = vunpack.c.l.b16 %v1622
      %v2017 = vunpack.c.l.b16 %v1623
      %v2018 = vunpack.c.l.b16 %v1624
      %v2019 = vunpack.c.l.b16 %v1625
      %v2020 = vunpack.c.l.b16 %v1626
      %v2021 = vunpack.c.l.b16 %v1627
      %v2022 = vpack.c.b16 %v2007, %v2006
      %v2023 = vpack.c.b16 %v2009, %v2008
      %v2024 = vpack.c.b16 %v2011, %v2010
      %v2025 = vpack.c.b16 %v2013, %v2012
      %v2026 = vpack.c.b16 %v2015, %v2014
      %v2027 = vpack.c.b16 %v2017, %v2016
      %v2028 = vpack.c.b16 %v2019, %v2018
      %v2029 = vpack.c.b16 %v2021, %v2020
      %v2054 = vunpack.c.l.b16 %v1628
      %v2055 = vunpack.c.l.b16 %v1629
      %v2056 = vunpack.c.l.b16 %v1630
      %v2057 = vunpack.c.l.b16 %v1631
      %v2058 = vunpack.c.l.b16 %v1632
      %v2059 = vunpack.c.l.b16 %v1633
      %v2060 = vunpack.c.l.b16 %v1634
      %v2061 = vunpack.c.l.b16 %v1635
      %v2062 = vunpack.c.l.b16 %v1636
      %v2063 = vunpack.c.l.b16 %v1637
      %v2064 = vunpack.c.l.b16 %v1638
      %v2065 = vunpack.c.l.b16 %v1639
      %v2066 = vunpack.c.l.b16 %v1640
      %v2067 = vunpack.c.l.b16 %v1641
      %v2068 = vunpack.c.l.b16 %v1642
      %v2069 = vunpack.c.l.b16 %v1643
      %v2070 = vpack.c.b16 %v2055, %v2054
      %v2071 = vpack.c.b16 %v2057, %v2056
      %v2072 = vpack.c.b16 %v2059, %v2058
      %v2073 = vpack.c.b16 %v2061, %v2060
      %v2074 = vpack.c.b16 %v2063, %v2062
      %v2075 = vpack.c.b16 %v2065, %v2064
      %v2076 = vpack.c.b16 %v2067, %v2066
      %v2077 = vpack.c.b16 %v2069, %v2068
      %2086 = vmatpush.bf16.msra.mxu0 %v2077
      %2087 = vmatpush.bf16.msra.mxu0 %v2076
      %2088 = vmatpush.bf16.msra.mxu0 %v2075
      %2089 = vmatpush.bf16.msra.mxu0 %v2074
      %2090 = vmatpush.bf16.msra.mxu0 %v2073
      %2091 = vmatpush.bf16.msra.mxu0 %v2072
      %2092 = vmatpush.bf16.msra.mxu0 %v2071
      %2093 = vmatpush.bf16.msra.mxu0 %v2070
      %2094 = vmatmul.bf16.gmra.mxu0 %v2022
      %v2095 = vpop.f32.mrf.mxu0
      %v2096 = vadd.f32 %v1951, %v2095
      %v2097 = vpop.f32.mrf.mxu0
      %v2098 = vadd.f32 %v1953, %v2097
      %2099 = vmatmul.bf16.gmra.mxu0 %v2023
      %v2100 = vpop.f32.mrf.mxu0
      %v2101 = vadd.f32 %v1956, %v2100
      %v2102 = vpop.f32.mrf.mxu0
      %v2103 = vadd.f32 %v1958, %v2102
      %2104 = vmatmul.bf16.gmra.mxu0 %v2024
      %v2105 = vpop.f32.mrf.mxu0
      %v2106 = vadd.f32 %v1961, %v2105
      %v2107 = vpop.f32.mrf.mxu0
      %v2108 = vadd.f32 %v1963, %v2107
      %2109 = vmatmul.bf16.gmra.mxu0 %v2025
      %v2110 = vpop.f32.mrf.mxu0
      %v2111 = vadd.f32 %v1966, %v2110
      %v2112 = vpop.f32.mrf.mxu0
      %v2113 = vadd.f32 %v1968, %v2112
      %2114 = vmatmul.bf16.gmra.mxu0 %v2026
      %v2115 = vpop.f32.mrf.mxu0
      %v2116 = vadd.f32 %v1971, %v2115
      %v2117 = vpop.f32.mrf.mxu0
      %v2118 = vadd.f32 %v1973, %v2117
      %2119 = vmatmul.bf16.gmra.mxu0 %v2027
      %v2120 = vpop.f32.mrf.mxu0
      %v2121 = vadd.f32 %v1976, %v2120
      %v2122 = vpop.f32.mrf.mxu0
      %v2123 = vadd.f32 %v1978, %v2122
      %2124 = vmatmul.bf16.gmra.mxu0 %v2028
      %v2125 = vpop.f32.mrf.mxu0
      %v2126 = vadd.f32 %v1981, %v2125
      %v2127 = vpop.f32.mrf.mxu0
      %v2128 = vadd.f32 %v1983, %v2127
      %2129 = vmatmul.bf16.gmra.mxu0 %v2029
      %v2130 = vpop.f32.mrf.mxu0
      %v2131 = vadd.f32 %v1986, %v2130
      %v2132 = vpop.f32.mrf.mxu0
      %v2133 = vadd.f32 %v1988, %v2132
      %2134 = vdwg.mxu0
      %v2135 = vld [vmem:[#allocation2] sm:$0xe]
      %v2136 = vld [vmem:[#allocation2 + $0xc] sm:$0xe]
      %v2137 = vld [vmem:[#allocation2 + $0x18] sm:$0xe]
      %v2138 = vld [vmem:[#allocation2 + $0x24] sm:$0xe]
      %v2139 = vld [vmem:[#allocation2 + $0x30] sm:$0xe]
      %v2140 = vld [vmem:[#allocation2 + $0x3c] sm:$0xe]
      %v2141 = vld [vmem:[#allocation2 + $0x48] sm:$0xe]
      %v2142 = vld [vmem:[#allocation2 + $0x54] sm:$0xe]
      %v2159 = vrot.slane %v2135, 5
      %v2160 = vrot.slane %v2159, 4
      %v2161 = vrot.slane %v1613, 5
      %v2162 = vsel %vm561, %v2160, %v2161
      %v2163 = vrot.slane %v2161, 4
      %v2164 = vrot.slane %v1644, 5
      %v2165 = vsel %vm561, %v2163, %v2164
      %v2166 = vrot.slane %v2136, 5
      %v2167 = vrot.slane %v2166, 4
      %v2168 = vrot.slane %v1615, 5
      %v2169 = vsel %vm561, %v2167, %v2168
      %v2170 = vrot.slane %v2168, 4
      %v2171 = vrot.slane %v1645, 5
      %v2172 = vsel %vm561, %v2170, %v2171
      %v2173 = vrot.slane %v2137, 5
      %v2174 = vrot.slane %v2173, 4
      %v2175 = vrot.slane %v1617, 5
      %v2176 = vsel %vm561, %v2174, %v2175
      %v2177 = vrot.slane %v2175, 4
      %v2178 = vrot.slane %v1646, 5
      %v2179 = vsel %vm561, %v2177, %v2178
      %v2180 = vrot.slane %v2138, 5
      %v2181 = vrot.slane %v2180, 4
      %v2182 = vrot.slane %v1619, 5
      %v2183 = vsel %vm561, %v2181, %v2182
      %v2184 = vrot.slane %v2182, 4
      %v2185 = vrot.slane %v1647, 5
      %v2186 = vsel %vm561, %v2184, %v2185
      %v2187 = vrot.slane %v2139, 5
      %v2188 = vrot.slane %v2187, 4
      %v2189 = vrot.slane %v1621, 5
      %v2190 = vsel %vm561, %v2188, %v2189
      %v2191 = vrot.slane %v2189, 4
      %v2192 = vrot.slane %v1648, 5
      %v2193 = vsel %vm561, %v2191, %v2192
      %v2194 = vrot.slane %v2140, 5
      %v2195 = vrot.slane %v2194, 4
      %v2196 = vrot.slane %v1623, 5
      %v2197 = vsel %vm561, %v2195, %v2196
      %v2198 = vrot.slane %v2196, 4
      %v2199 = vrot.slane %v1649, 5
      %v2200 = vsel %vm561, %v2198, %v2199
      %v2201 = vrot.slane %v2141, 5
      %v2202 = vrot.slane %v2201, 4
      %v2203 = vrot.slane %v1625, 5
      %v2204 = vsel %vm561, %v2202, %v2203
      %v2205 = vrot.slane %v2203, 4
      %v2206 = vrot.slane %v1650, 5
      %v2207 = vsel %vm561, %v2205, %v2206
      %v2208 = vrot.slane %v2142, 5
      %v2209 = vrot.slane %v2208, 4
      %v2210 = vrot.slane %v1627, 5
      %v2211 = vsel %vm561, %v2209, %v2210
      %v2212 = vrot.slane %v2210, 4
      %v2213 = vrot.slane %v1651, 5
      %v2214 = vsel %vm561, %v2212, %v2213
      %s2215 = scalar_lea.vmem %s3, 128
      %v2216 = vld [vmem:[%s2215] sm:$0xf]
      %v2217 = vld [vmem:[%s2215 + $0x4] sm:$0xf]
      %v2218 = vld [vmem:[%s2215 + $0x8] sm:$0xf]
      %v2219 = vld [vmem:[%s2215 + $0xc] sm:$0xf]
      %v2220 = vld [vmem:[%s2215 + $0x10] sm:$0xf]
      %v2221 = vld [vmem:[%s2215 + $0x14] sm:$0xf]
      %v2222 = vld [vmem:[%s2215 + $0x18] sm:$0xf]
      %v2223 = vld [vmem:[%s2215 + $0x1c] sm:$0xf]
      %v2224 = vld [vmem:[%s2215 + $0x20] sm:$0xf]
      %v2225 = vld [vmem:[%s2215 + $0x24] sm:$0xf]
      %v2226 = vld [vmem:[%s2215 + $0x28] sm:$0xf]
      %v2227 = vld [vmem:[%s2215 + $0x2c] sm:$0xf]
      %v2228 = vld [vmem:[%s2215 + $0x30] sm:$0xf]
      %v2229 = vld [vmem:[%s2215 + $0x34] sm:$0xf]
      %v2230 = vld [vmem:[%s2215 + $0x38] sm:$0xf]
      %v2231 = vld [vmem:[%s2215 + $0x3c] sm:$0xf]
      %v2232 = vunpack.c.l.b16 %v2162
      %v2233 = vunpack.c.l.b16 %v2165
      %v2234 = vunpack.c.l.b16 %v2169
      %v2235 = vunpack.c.l.b16 %v2172
      %v2236 = vunpack.c.l.b16 %v2176
      %v2237 = vunpack.c.l.b16 %v2179
      %v2238 = vunpack.c.l.b16 %v2183
      %v2239 = vunpack.c.l.b16 %v2186
      %v2240 = vunpack.c.l.b16 %v2190
      %v2241 = vunpack.c.l.b16 %v2193
      %v2242 = vunpack.c.l.b16 %v2197
      %v2243 = vunpack.c.l.b16 %v2200
      %v2244 = vunpack.c.l.b16 %v2204
      %v2245 = vunpack.c.l.b16 %v2207
      %v2246 = vunpack.c.l.b16 %v2211
      %v2247 = vunpack.c.l.b16 %v2214
      %v2248 = vpack.c.b16 %v2233, %v2232
      %v2249 = vpack.c.b16 %v2235, %v2234
      %v2250 = vpack.c.b16 %v2237, %v2236
      %v2251 = vpack.c.b16 %v2239, %v2238
      %v2252 = vpack.c.b16 %v2241, %v2240
      %v2253 = vpack.c.b16 %v2243, %v2242
      %v2254 = vpack.c.b16 %v2245, %v2244
      %v2255 = vpack.c.b16 %v2247, %v2246
      %v2280 = vunpack.c.l.b16 %v2216
      %v2281 = vunpack.c.l.b16 %v2217
      %v2282 = vunpack.c.l.b16 %v2218
      %v2283 = vunpack.c.l.b16 %v2219
      %v2284 = vunpack.c.l.b16 %v2220
      %v2285 = vunpack.c.l.b16 %v2221
      %v2286 = vunpack.c.l.b16 %v2222
      %v2287 = vunpack.c.l.b16 %v2223
      %v2288 = vunpack.c.l.b16 %v2224
      %v2289 = vunpack.c.l.b16 %v2225
      %v2290 = vunpack.c.l.b16 %v2226
      %v2291 = vunpack.c.l.b16 %v2227
      %v2292 = vunpack.c.l.b16 %v2228
      %v2293 = vunpack.c.l.b16 %v2229
      %v2294 = vunpack.c.l.b16 %v2230
      %v2295 = vunpack.c.l.b16 %v2231
      %v2296 = vpack.c.b16 %v2281, %v2280
      %v2297 = vpack.c.b16 %v2283, %v2282
      %v2298 = vpack.c.b16 %v2285, %v2284
      %v2299 = vpack.c.b16 %v2287, %v2286
      %v2300 = vpack.c.b16 %v2289, %v2288
      %v2301 = vpack.c.b16 %v2291, %v2290
      %v2302 = vpack.c.b16 %v2293, %v2292
      %v2303 = vpack.c.b16 %v2295, %v2294
      %2312 = vmatpush.bf16.msra.mxu0 %v2303
      %2313 = vmatpush.bf16.msra.mxu0 %v2302
      %2314 = vmatpush.bf16.msra.mxu0 %v2301
      %2315 = vmatpush.bf16.msra.mxu0 %v2300
      %2316 = vmatpush.bf16.msra.mxu0 %v2299
      %2317 = vmatpush.bf16.msra.mxu0 %v2298
      %2318 = vmatpush.bf16.msra.mxu0 %v2297
      %2319 = vmatpush.bf16.msra.mxu0 %v2296
      %2320 = vmatmul.bf16.gmra.mxu0 %v2248
      %v2321 = vpop.f32.mrf.mxu0
      %v2322 = vadd.f32 0.0, %v2321
      %v2323 = vpop.f32.mrf.mxu0
      %v2324 = vadd.f32 0.0, %v2323
      %2325 = vmatmul.bf16.gmra.mxu0 %v2249
      %v2326 = vpop.f32.mrf.mxu0
      %v2327 = vadd.f32 0.0, %v2326
      %v2328 = vpop.f32.mrf.mxu0
      %v2329 = vadd.f32 0.0, %v2328
      %2330 = vmatmul.bf16.gmra.mxu0 %v2250
      %v2331 = vpop.f32.mrf.mxu0
      %v2332 = vadd.f32 0.0, %v2331
      %v2333 = vpop.f32.mrf.mxu0
      %v2334 = vadd.f32 0.0, %v2333
      %2335 = vmatmul.bf16.gmra.mxu0 %v2251
      %v2336 = vpop.f32.mrf.mxu0
      %v2337 = vadd.f32 0.0, %v2336
      %v2338 = vpop.f32.mrf.mxu0
      %v2339 = vadd.f32 0.0, %v2338
      %2340 = vmatmul.bf16.gmra.mxu0 %v2252
      %v2341 = vpop.f32.mrf.mxu0
      %v2342 = vadd.f32 0.0, %v2341
      %v2343 = vpop.f32.mrf.mxu0
      %v2344 = vadd.f32 0.0, %v2343
      %2345 = vmatmul.bf16.gmra.mxu0 %v2253
      %v2346 = vpop.f32.mrf.mxu0
      %v2347 = vadd.f32 0.0, %v2346
      %v2348 = vpop.f32.mrf.mxu0
      %v2349 = vadd.f32 0.0, %v2348
      %2350 = vmatmul.bf16.gmra.mxu0 %v2254
      %v2351 = vpop.f32.mrf.mxu0
      %v2352 = vadd.f32 0.0, %v2351
      %v2353 = vpop.f32.mrf.mxu0
      %v2354 = vadd.f32 0.0, %v2353
      %2355 = vmatmul.bf16.gmra.mxu0 %v2255
      %v2356 = vpop.f32.mrf.mxu0
      %v2357 = vadd.f32 0.0, %v2356
      %v2358 = vpop.f32.mrf.mxu0
      %v2359 = vadd.f32 0.0, %v2358
      %2360 = vdwg.mxu0
      %v2361 = vadd.f32 %v2096, %v2322
      %v2362 = vadd.f32 %v2098, %v2324
      %v2363 = vadd.f32 %v2101, %v2327
      %v2364 = vadd.f32 %v2103, %v2329
      %v2365 = vadd.f32 %v2106, %v2332
      %v2366 = vadd.f32 %v2108, %v2334
      %v2367 = vadd.f32 %v2111, %v2337
      %v2368 = vadd.f32 %v2113, %v2339
      %v2369 = vadd.f32 %v2116, %v2342
      %v2370 = vadd.f32 %v2118, %v2344
      %v2371 = vadd.f32 %v2121, %v2347
      %v2372 = vadd.f32 %v2123, %v2349
      %v2373 = vadd.f32 %v2126, %v2352
      %v2374 = vadd.f32 %v2128, %v2354
      %v2375 = vadd.f32 %v2131, %v2357
      %v2376 = vadd.f32 %v2133, %v2359
      %s2377 = scalar_lea.vmem [#allocation2], 12
      %v2378 = vld [vmem:[%s2377] sm:$0xf]
      %v2379 = vld [vmem:[%s2377 + $0x4] sm:$0xf]
      %v2380 = vld [vmem:[%s2377 + $0xc] sm:$0xf]
      %v2381 = vld [vmem:[%s2377 + $0x10] sm:$0xf]
      %v2382 = vld [vmem:[%s2377 + $0x18] sm:$0xf]
      %v2383 = vld [vmem:[%s2377 + $0x1c] sm:$0xf]
      %v2384 = vld [vmem:[%s2377 + $0x24] sm:$0xf]
      %v2385 = vld [vmem:[%s2377 + $0x28] sm:$0xf]
      %v2386 = vld [vmem:[%s2377 + $0x30] sm:$0xf]
      %v2387 = vld [vmem:[%s2377 + $0x34] sm:$0xf]
      %v2388 = vld [vmem:[%s2377 + $0x3c] sm:$0xf]
      %v2389 = vld [vmem:[%s2377 + $0x40] sm:$0xf]
      %v2390 = vld [vmem:[%s2377 + $0x48] sm:$0xf]
      %v2391 = vld [vmem:[%s2377 + $0x4c] sm:$0xf]
      %v2392 = vld [vmem:[%s2377 + $0x54] sm:$0xf]
      %v2393 = vld [vmem:[%s2377 + $0x58] sm:$0xf]
      %s2394 = scalar_lea.vmem %s3, 192
      %v2395 = vld [vmem:[%s2394] sm:$0xf]
      %v2396 = vld [vmem:[%s2394 + $0x4] sm:$0xf]
      %v2397 = vld [vmem:[%s2394 + $0x8] sm:$0xf]
      %v2398 = vld [vmem:[%s2394 + $0xc] sm:$0xf]
      %v2399 = vld [vmem:[%s2394 + $0x10] sm:$0xf]
      %v2400 = vld [vmem:[%s2394 + $0x14] sm:$0xf]
      %v2401 = vld [vmem:[%s2394 + $0x18] sm:$0xf]
      %v2402 = vld [vmem:[%s2394 + $0x1c] sm:$0xf]
      %v2403 = vld [vmem:[%s2394 + $0x20] sm:$0xf]
      %v2404 = vld [vmem:[%s2394 + $0x24] sm:$0xf]
      %v2405 = vld [vmem:[%s2394 + $0x28] sm:$0xf]
      %v2406 = vld [vmem:[%s2394 + $0x2c] sm:$0xf]
      %v2407 = vld [vmem:[%s2394 + $0x30] sm:$0xf]
      %v2408 = vld [vmem:[%s2394 + $0x34] sm:$0xf]
      %v2409 = vld [vmem:[%s2394 + $0x38] sm:$0xf]
      %v2410 = vld [vmem:[%s2394 + $0x3c] sm:$0xf]
      %v2427 = vunpack.c.l.b16 %v2378
      %v2428 = vunpack.c.l.b16 %v2379
      %v2429 = vunpack.c.l.b16 %v2380
      %v2430 = vunpack.c.l.b16 %v2381
      %v2431 = vunpack.c.l.b16 %v2382
      %v2432 = vunpack.c.l.b16 %v2383
      %v2433 = vunpack.c.l.b16 %v2384
      %v2434 = vunpack.c.l.b16 %v2385
      %v2435 = vunpack.c.l.b16 %v2386
      %v2436 = vunpack.c.l.b16 %v2387
      %v2437 = vunpack.c.l.b16 %v2388
      %v2438 = vunpack.c.l.b16 %v2389
      %v2439 = vunpack.c.l.b16 %v2390
      %v2440 = vunpack.c.l.b16 %v2391
      %v2441 = vunpack.c.l.b16 %v2392
      %v2442 = vunpack.c.l.b16 %v2393
      %v2443 = vpack.c.b16 %v2428, %v2427
      %v2444 = vpack.c.b16 %v2430, %v2429
      %v2445 = vpack.c.b16 %v2432, %v2431
      %v2446 = vpack.c.b16 %v2434, %v2433
      %v2447 = vpack.c.b16 %v2436, %v2435
      %v2448 = vpack.c.b16 %v2438, %v2437
      %v2449 = vpack.c.b16 %v2440, %v2439
      %v2450 = vpack.c.b16 %v2442, %v2441
      %v2475 = vunpack.c.l.b16 %v2395
      %v2476 = vunpack.c.l.b16 %v2396
      %v2477 = vunpack.c.l.b16 %v2397
      %v2478 = vunpack.c.l.b16 %v2398
      %v2479 = vunpack.c.l.b16 %v2399
      %v2480 = vunpack.c.l.b16 %v2400
      %v2481 = vunpack.c.l.b16 %v2401
      %v2482 = vunpack.c.l.b16 %v2402
      %v2483 = vunpack.c.l.b16 %v2403
      %v2484 = vunpack.c.l.b16 %v2404
      %v2485 = vunpack.c.l.b16 %v2405
      %v2486 = vunpack.c.l.b16 %v2406
      %v2487 = vunpack.c.l.b16 %v2407
      %v2488 = vunpack.c.l.b16 %v2408
      %v2489 = vunpack.c.l.b16 %v2409
      %v2490 = vunpack.c.l.b16 %v2410
      %v2491 = vpack.c.b16 %v2476, %v2475
      %v2492 = vpack.c.b16 %v2478, %v2477
      %v2493 = vpack.c.b16 %v2480, %v2479
      %v2494 = vpack.c.b16 %v2482, %v2481
      %v2495 = vpack.c.b16 %v2484, %v2483
      %v2496 = vpack.c.b16 %v2486, %v2485
      %v2497 = vpack.c.b16 %v2488, %v2487
      %v2498 = vpack.c.b16 %v2490, %v2489
      %2507 = vmatpush.bf16.msra.mxu0 %v2498
      %2508 = vmatpush.bf16.msra.mxu0 %v2497
      %2509 = vmatpush.bf16.msra.mxu0 %v2496
      %2510 = vmatpush.bf16.msra.mxu0 %v2495
      %2511 = vmatpush.bf16.msra.mxu0 %v2494
      %2512 = vmatpush.bf16.msra.mxu0 %v2493
      %2513 = vmatpush.bf16.msra.mxu0 %v2492
      %2514 = vmatpush.bf16.msra.mxu0 %v2491
      %2515 = vmatmul.bf16.gmra.mxu0 %v2443
      %v2516 = vpop.f32.mrf.mxu0
      %v2517 = vadd.f32 0.0, %v2516
      %v2518 = vpop.f32.mrf.mxu0
      %v2519 = vadd.f32 0.0, %v2518
      %2520 = vmatmul.bf16.gmra.mxu0 %v2444
      %v2521 = vpop.f32.mrf.mxu0
      %v2522 = vadd.f32 0.0, %v2521
      %v2523 = vpop.f32.mrf.mxu0
      %v2524 = vadd.f32 0.0, %v2523
      %2525 = vmatmul.bf16.gmra.mxu0 %v2445
      %v2526 = vpop.f32.mrf.mxu0
      %v2527 = vadd.f32 0.0, %v2526
      %v2528 = vpop.f32.mrf.mxu0
      %v2529 = vadd.f32 0.0, %v2528
      %2530 = vmatmul.bf16.gmra.mxu0 %v2446
      %v2531 = vpop.f32.mrf.mxu0
      %v2532 = vadd.f32 0.0, %v2531
      %v2533 = vpop.f32.mrf.mxu0
      %v2534 = vadd.f32 0.0, %v2533
      %2535 = vmatmul.bf16.gmra.mxu0 %v2447
      %v2536 = vpop.f32.mrf.mxu0
      %v2537 = vadd.f32 0.0, %v2536
      %v2538 = vpop.f32.mrf.mxu0
      %v2539 = vadd.f32 0.0, %v2538
      %2540 = vmatmul.bf16.gmra.mxu0 %v2448
      %v2541 = vpop.f32.mrf.mxu0
      %v2542 = vadd.f32 0.0, %v2541
      %v2543 = vpop.f32.mrf.mxu0
      %v2544 = vadd.f32 0.0, %v2543
      %2545 = vmatmul.bf16.gmra.mxu0 %v2449
      %v2546 = vpop.f32.mrf.mxu0
      %v2547 = vadd.f32 0.0, %v2546
      %v2548 = vpop.f32.mrf.mxu0
      %v2549 = vadd.f32 0.0, %v2548
      %2550 = vmatmul.bf16.gmra.mxu0 %v2450
      %v2551 = vpop.f32.mrf.mxu0
      %v2552 = vadd.f32 0.0, %v2551
      %v2553 = vpop.f32.mrf.mxu0
      %v2554 = vadd.f32 0.0, %v2553
      %2555 = vdwg.mxu0
      %v2556 = vadd.f32 %v2361, %v2517
      %v2557 = vadd.f32 %v2362, %v2519
      %v2558 = vadd.f32 %v2363, %v2522
      %v2559 = vadd.f32 %v2364, %v2524
      %v2560 = vadd.f32 %v2365, %v2527
      %v2561 = vadd.f32 %v2366, %v2529
      %v2562 = vadd.f32 %v2367, %v2532
      %v2563 = vadd.f32 %v2368, %v2534
      %v2564 = vadd.f32 %v2369, %v2537
      %v2565 = vadd.f32 %v2370, %v2539
      %v2566 = vadd.f32 %v2371, %v2542
      %v2567 = vadd.f32 %v2372, %v2544
      %v2568 = vadd.f32 %v2373, %v2547
      %v2569 = vadd.f32 %v2374, %v2549
      %v2570 = vadd.f32 %v2375, %v2552
      %v2571 = vadd.f32 %v2376, %v2554
      %v2572 = vld [vmem:[%s2377] sm:$0xf]
      %v2573 = vld [vmem:[%s2377 + $0x4] sm:$0xf]
      %v2574 = vld [vmem:[%s2377 + $0x8] sm:$0x1]
      %v2575 = vld [vmem:[%s2377 + $0xc] sm:$0xf]
      %v2576 = vld [vmem:[%s2377 + $0x10] sm:$0xf]
      %v2577 = vld [vmem:[%s2377 + $0x14] sm:$0x1]
      %v2578 = vld [vmem:[%s2377 + $0x18] sm:$0xf]
      %v2579 = vld [vmem:[%s2377 + $0x1c] sm:$0xf]
      %v2580 = vld [vmem:[%s2377 + $0x20] sm:$0x1]
      %v2581 = vld [vmem:[%s2377 + $0x24] sm:$0xf]
      %v2582 = vld [vmem:[%s2377 + $0x28] sm:$0xf]
      %v2583 = vld [vmem:[%s2377 + $0x2c] sm:$0x1]
      %v2584 = vld [vmem:[%s2377 + $0x30] sm:$0xf]
      %v2585 = vld [vmem:[%s2377 + $0x34] sm:$0xf]
      %v2586 = vld [vmem:[%s2377 + $0x38] sm:$0x1]
      %v2587 = vld [vmem:[%s2377 + $0x3c] sm:$0xf]
      %v2588 = vld [vmem:[%s2377 + $0x40] sm:$0xf]
      %v2589 = vld [vmem:[%s2377 + $0x44] sm:$0x1]
      %v2590 = vld [vmem:[%s2377 + $0x48] sm:$0xf]
      %v2591 = vld [vmem:[%s2377 + $0x4c] sm:$0xf]
      %v2592 = vld [vmem:[%s2377 + $0x50] sm:$0x1]
      %v2593 = vld [vmem:[%s2377 + $0x54] sm:$0xf]
      %v2594 = vld [vmem:[%s2377 + $0x58] sm:$0xf]
      %v2595 = vld [vmem:[%s2377 + $0x5c] sm:$0x1]
      %v2597 = vshrl.u32 %v2572, 16
      %v2599 = vrot.slane %v2597, 4
      %v2600 = vshll.u32 %v2572, 16
      %v2602 = vrot.slane %v2600, 5
      %v2603 = vor.u32 %v2599, %v2602
      %v2604 = vrot.slane %v2603, 4
      %v2606 = vshll.u32 %v2573, 16
      %v2608 = vrot.slane %v2606, 5
      %v2609 = vsel %vm288, %v2604, %v2608
      %v2610 = vshrl.u32 %v2573, 16
      %v2612 = vrot.slane %v2610, 4
      %v2613 = vor.u32 %v2612, %v2608
      %v2614 = vrot.slane %v2613, 4
      %v2616 = vshll.u32 %v2574, 16
      %v2618 = vrot.slane %v2616, 5
      %v2619 = vsel %vm288, %v2614, %v2618
      %v2621 = vshrl.u32 %v2575, 16
      %v2623 = vrot.slane %v2621, 4
      %v2624 = vshll.u32 %v2575, 16
      %v2626 = vrot.slane %v2624, 5
      %v2627 = vor.u32 %v2623, %v2626
      %v2628 = vrot.slane %v2627, 4
      %v2630 = vshll.u32 %v2576, 16
      %v2632 = vrot.slane %v2630, 5
      %v2633 = vsel %vm288, %v2628, %v2632
      %v2634 = vshrl.u32 %v2576, 16
      %v2636 = vrot.slane %v2634, 4
      %v2637 = vor.u32 %v2636, %v2632
      %v2638 = vrot.slane %v2637, 4
      %v2640 = vshll.u32 %v2577, 16
      %v2642 = vrot.slane %v2640, 5
      %v2643 = vsel %vm288, %v2638, %v2642
      %v2645 = vshrl.u32 %v2578, 16
      %v2647 = vrot.slane %v2645, 4
      %v2648 = vshll.u32 %v2578, 16
      %v2650 = vrot.slane %v2648, 5
      %v2651 = vor.u32 %v2647, %v2650
      %v2652 = vrot.slane %v2651, 4
      %v2654 = vshll.u32 %v2579, 16
      %v2656 = vrot.slane %v2654, 5
      %v2657 = vsel %vm288, %v2652, %v2656
      %v2658 = vshrl.u32 %v2579, 16
      %v2660 = vrot.slane %v2658, 4
      %v2661 = vor.u32 %v2660, %v2656
      %v2662 = vrot.slane %v2661, 4
      %v2664 = vshll.u32 %v2580, 16
      %v2666 = vrot.slane %v2664, 5
      %v2667 = vsel %vm288, %v2662, %v2666
      %v2669 = vshrl.u32 %v2581, 16
      %v2671 = vrot.slane %v2669, 4
      %v2672 = vshll.u32 %v2581, 16
      %v2674 = vrot.slane %v2672, 5
      %v2675 = vor.u32 %v2671, %v2674
      %v2676 = vrot.slane %v2675, 4
      %v2678 = vshll.u32 %v2582, 16
      %v2680 = vrot.slane %v2678, 5
      %v2681 = vsel %vm288, %v2676, %v2680
      %v2682 = vshrl.u32 %v2582, 16
      %v2684 = vrot.slane %v2682, 4
      %v2685 = vor.u32 %v2684, %v2680
      %v2686 = vrot.slane %v2685, 4
      %v2688 = vshll.u32 %v2583, 16
      %v2690 = vrot.slane %v2688, 5
      %v2691 = vsel %vm288, %v2686, %v2690
      %v2693 = vshrl.u32 %v2584, 16
      %v2695 = vrot.slane %v2693, 4
      %v2696 = vshll.u32 %v2584, 16
      %v2698 = vrot.slane %v2696, 5
      %v2699 = vor.u32 %v2695, %v2698
      %v2700 = vrot.slane %v2699, 4
      %v2702 = vshll.u32 %v2585, 16
      %v2704 = vrot.slane %v2702, 5
      %v2705 = vsel %vm288, %v2700, %v2704
      %v2706 = vshrl.u32 %v2585, 16
      %v2708 = vrot.slane %v2706, 4
      %v2709 = vor.u32 %v2708, %v2704
      %v2710 = vrot.slane %v2709, 4
      %v2712 = vshll.u32 %v2586, 16
      %v2714 = vrot.slane %v2712, 5
      %v2715 = vsel %vm288, %v2710, %v2714
      %v2717 = vshrl.u32 %v2587, 16
      %v2719 = vrot.slane %v2717, 4
      %v2720 = vshll.u32 %v2587, 16
      %v2722 = vrot.slane %v2720, 5
      %v2723 = vor.u32 %v2719, %v2722
      %v2724 = vrot.slane %v2723, 4
      %v2726 = vshll.u32 %v2588, 16
      %v2728 = vrot.slane %v2726, 5
      %v2729 = vsel %vm288, %v2724, %v2728
      %v2730 = vshrl.u32 %v2588, 16
      %v2732 = vrot.slane %v2730, 4
      %v2733 = vor.u32 %v2732, %v2728
      %v2734 = vrot.slane %v2733, 4
      %v2736 = vshll.u32 %v2589, 16
      %v2738 = vrot.slane %v2736, 5
      %v2739 = vsel %vm288, %v2734, %v2738
      %v2741 = vshrl.u32 %v2590, 16
      %v2743 = vrot.slane %v2741, 4
      %v2744 = vshll.u32 %v2590, 16
      %v2746 = vrot.slane %v2744, 5
      %v2747 = vor.u32 %v2743, %v2746
      %v2748 = vrot.slane %v2747, 4
      %v2750 = vshll.u32 %v2591, 16
      %v2752 = vrot.slane %v2750, 5
      %v2753 = vsel %vm288, %v2748, %v2752
      %v2754 = vshrl.u32 %v2591, 16
      %v2756 = vrot.slane %v2754, 4
      %v2757 = vor.u32 %v2756, %v2752
      %v2758 = vrot.slane %v2757, 4
      %v2760 = vshll.u32 %v2592, 16
      %v2762 = vrot.slane %v2760, 5
      %v2763 = vsel %vm288, %v2758, %v2762
      %v2765 = vshrl.u32 %v2593, 16
      %v2767 = vrot.slane %v2765, 4
      %v2768 = vshll.u32 %v2593, 16
      %v2770 = vrot.slane %v2768, 5
      %v2771 = vor.u32 %v2767, %v2770
      %v2772 = vrot.slane %v2771, 4
      %v2774 = vshll.u32 %v2594, 16
      %v2776 = vrot.slane %v2774, 5
      %v2777 = vsel %vm288, %v2772, %v2776
      %v2778 = vshrl.u32 %v2594, 16
      %v2780 = vrot.slane %v2778, 4
      %v2781 = vor.u32 %v2780, %v2776
      %v2782 = vrot.slane %v2781, 4
      %v2784 = vshll.u32 %v2595, 16
      %v2786 = vrot.slane %v2784, 5
      %v2787 = vsel %vm288, %v2782, %v2786
      %s2788 = scalar_lea.vmem %s3, 256
      %v2789 = vld [vmem:[%s2788] sm:$0xf]
      %v2790 = vld [vmem:[%s2788 + $0x4] sm:$0xf]
      %v2791 = vld [vmem:[%s2788 + $0x8] sm:$0xf]
      %v2792 = vld [vmem:[%s2788 + $0xc] sm:$0xf]
      %v2793 = vld [vmem:[%s2788 + $0x10] sm:$0xf]
      %v2794 = vld [vmem:[%s2788 + $0x14] sm:$0xf]
      %v2795 = vld [vmem:[%s2788 + $0x18] sm:$0xf]
      %v2796 = vld [vmem:[%s2788 + $0x1c] sm:$0xf]
      %v2797 = vld [vmem:[%s2788 + $0x20] sm:$0xf]
      %v2798 = vld [vmem:[%s2788 + $0x24] sm:$0xf]
      %v2799 = vld [vmem:[%s2788 + $0x28] sm:$0xf]
      %v2800 = vld [vmem:[%s2788 + $0x2c] sm:$0xf]
      %v2801 = vld [vmem:[%s2788 + $0x30] sm:$0xf]
      %v2802 = vld [vmem:[%s2788 + $0x34] sm:$0xf]
      %v2803 = vld [vmem:[%s2788 + $0x38] sm:$0xf]
      %v2804 = vld [vmem:[%s2788 + $0x3c] sm:$0xf]
      %v2805 = vunpack.c.l.b16 %v2609
      %v2806 = vunpack.c.l.b16 %v2619
      %v2807 = vunpack.c.l.b16 %v2633
      %v2808 = vunpack.c.l.b16 %v2643
      %v2809 = vunpack.c.l.b16 %v2657
      %v2810 = vunpack.c.l.b16 %v2667
      %v2811 = vunpack.c.l.b16 %v2681
      %v2812 = vunpack.c.l.b16 %v2691
      %v2813 = vunpack.c.l.b16 %v2705
      %v2814 = vunpack.c.l.b16 %v2715
      %v2815 = vunpack.c.l.b16 %v2729
      %v2816 = vunpack.c.l.b16 %v2739
      %v2817 = vunpack.c.l.b16 %v2753
      %v2818 = vunpack.c.l.b16 %v2763
      %v2819 = vunpack.c.l.b16 %v2777
      %v2820 = vunpack.c.l.b16 %v2787
      %v2821 = vpack.c.b16 %v2806, %v2805
      %v2822 = vpack.c.b16 %v2808, %v2807
      %v2823 = vpack.c.b16 %v2810, %v2809
      %v2824 = vpack.c.b16 %v2812, %v2811
      %v2825 = vpack.c.b16 %v2814, %v2813
      %v2826 = vpack.c.b16 %v2816, %v2815
      %v2827 = vpack.c.b16 %v2818, %v2817
      %v2828 = vpack.c.b16 %v2820, %v2819
      %v2853 = vunpack.c.l.b16 %v2789
      %v2854 = vunpack.c.l.b16 %v2790
      %v2855 = vunpack.c.l.b16 %v2791
      %v2856 = vunpack.c.l.b16 %v2792
      %v2857 = vunpack.c.l.b16 %v2793
      %v2858 = vunpack.c.l.b16 %v2794
      %v2859 = vunpack.c.l.b16 %v2795
      %v2860 = vunpack.c.l.b16 %v2796
      %v2861 = vunpack.c.l.b16 %v2797
      %v2862 = vunpack.c.l.b16 %v2798
      %v2863 = vunpack.c.l.b16 %v2799
      %v2864 = vunpack.c.l.b16 %v2800
      %v2865 = vunpack.c.l.b16 %v2801
      %v2866 = vunpack.c.l.b16 %v2802
      %v2867 = vunpack.c.l.b16 %v2803
      %v2868 = vunpack.c.l.b16 %v2804
      %v2869 = vpack.c.b16 %v2854, %v2853
      %v2870 = vpack.c.b16 %v2856, %v2855
      %v2871 = vpack.c.b16 %v2858, %v2857
      %v2872 = vpack.c.b16 %v2860, %v2859
      %v2873 = vpack.c.b16 %v2862, %v2861
      %v2874 = vpack.c.b16 %v2864, %v2863
      %v2875 = vpack.c.b16 %v2866, %v2865
      %v2876 = vpack.c.b16 %v2868, %v2867
      %2885 = vmatpush.bf16.msra.mxu0 %v2876
      %2886 = vmatpush.bf16.msra.mxu0 %v2875
      %2887 = vmatpush.bf16.msra.mxu0 %v2874
      %2888 = vmatpush.bf16.msra.mxu0 %v2873
      %2889 = vmatpush.bf16.msra.mxu0 %v2872
      %2890 = vmatpush.bf16.msra.mxu0 %v2871
      %2891 = vmatpush.bf16.msra.mxu0 %v2870
      %2892 = vmatpush.bf16.msra.mxu0 %v2869
      %2893 = vmatmul.bf16.gmra.mxu0 %v2821
      %v2894 = vpop.f32.mrf.mxu0
      %v2895 = vadd.f32 0.0, %v2894
      %v2896 = vpop.f32.mrf.mxu0
      %v2897 = vadd.f32 0.0, %v2896
      %2898 = vmatmul.bf16.gmra.mxu0 %v2822
      %v2899 = vpop.f32.mrf.mxu0
      %v2900 = vadd.f32 0.0, %v2899
      %v2901 = vpop.f32.mrf.mxu0
      %v2902 = vadd.f32 0.0, %v2901
      %2903 = vmatmul.bf16.gmra.mxu0 %v2823
      %v2904 = vpop.f32.mrf.mxu0
      %v2905 = vadd.f32 0.0, %v2904
      %v2906 = vpop.f32.mrf.mxu0
      %v2907 = vadd.f32 0.0, %v2906
      %2908 = vmatmul.bf16.gmra.mxu0 %v2824
      %v2909 = vpop.f32.mrf.mxu0
      %v2910 = vadd.f32 0.0, %v2909
      %v2911 = vpop.f32.mrf.mxu0
      %v2912 = vadd.f32 0.0, %v2911
      %2913 = vmatmul.bf16.gmra.mxu0 %v2825
      %v2914 = vpop.f32.mrf.mxu0
      %v2915 = vadd.f32 0.0, %v2914
      %v2916 = vpop.f32.mrf.mxu0
      %v2917 = vadd.f32 0.0, %v2916
      %2918 = vmatmul.bf16.gmra.mxu0 %v2826
      %v2919 = vpop.f32.mrf.mxu0
      %v2920 = vadd.f32 0.0, %v2919
      %v2921 = vpop.f32.mrf.mxu0
      %v2922 = vadd.f32 0.0, %v2921
      %2923 = vmatmul.bf16.gmra.mxu0 %v2827
      %v2924 = vpop.f32.mrf.mxu0
      %v2925 = vadd.f32 0.0, %v2924
      %v2926 = vpop.f32.mrf.mxu0
      %v2927 = vadd.f32 0.0, %v2926
      %2928 = vmatmul.bf16.gmra.mxu0 %v2828
      %v2929 = vpop.f32.mrf.mxu0
      %v2930 = vadd.f32 0.0, %v2929
      %v2931 = vpop.f32.mrf.mxu0
      %v2932 = vadd.f32 0.0, %v2931
      %2933 = vdwg.mxu0
      %v2934 = vadd.f32 %v2556, %v2895
      %v2935 = vadd.f32 %v2557, %v2897
      %v2936 = vadd.f32 %v2558, %v2900
      %v2937 = vadd.f32 %v2559, %v2902
      %v2938 = vadd.f32 %v2560, %v2905
      %v2939 = vadd.f32 %v2561, %v2907
      %v2940 = vadd.f32 %v2562, %v2910
      %v2941 = vadd.f32 %v2563, %v2912
      %v2942 = vadd.f32 %v2564, %v2915
      %v2943 = vadd.f32 %v2565, %v2917
      %v2944 = vadd.f32 %v2566, %v2920
      %v2945 = vadd.f32 %v2567, %v2922
      %v2946 = vadd.f32 %v2568, %v2925
      %v2947 = vadd.f32 %v2569, %v2927
      %v2948 = vadd.f32 %v2570, %v2930
      %v2949 = vadd.f32 %v2571, %v2932
      %v2950 = vld [vmem:[%s2377] sm:$0xe]
      %v2951 = vld [vmem:[%s2377 + $0xc] sm:$0xe]
      %v2952 = vld [vmem:[%s2377 + $0x18] sm:$0xe]
      %v2953 = vld [vmem:[%s2377 + $0x24] sm:$0xe]
      %v2954 = vld [vmem:[%s2377 + $0x30] sm:$0xe]
      %v2955 = vld [vmem:[%s2377 + $0x3c] sm:$0xe]
      %v2956 = vld [vmem:[%s2377 + $0x48] sm:$0xe]
      %v2957 = vld [vmem:[%s2377 + $0x54] sm:$0xe]
      %v2982 = vrot.slane %v2950, 5
      %v2983 = vrot.slane %v2982, 4
      %v2984 = vrot.slane %v2573, 5
      %v2985 = vsel %vm561, %v2983, %v2984
      %v2986 = vrot.slane %v2984, 4
      %v2987 = vrot.slane %v2574, 5
      %v2988 = vsel %vm561, %v2986, %v2987
      %v2989 = vrot.slane %v2951, 5
      %v2990 = vrot.slane %v2989, 4
      %v2991 = vrot.slane %v2576, 5
      %v2992 = vsel %vm561, %v2990, %v2991
      %v2993 = vrot.slane %v2991, 4
      %v2994 = vrot.slane %v2577, 5
      %v2995 = vsel %vm561, %v2993, %v2994
      %v2996 = vrot.slane %v2952, 5
      %v2997 = vrot.slane %v2996, 4
      %v2998 = vrot.slane %v2579, 5
      %v2999 = vsel %vm561, %v2997, %v2998
      %v3000 = vrot.slane %v2998, 4
      %v3001 = vrot.slane %v2580, 5
      %v3002 = vsel %vm561, %v3000, %v3001
      %v3003 = vrot.slane %v2953, 5
      %v3004 = vrot.slane %v3003, 4
      %v3005 = vrot.slane %v2582, 5
      %v3006 = vsel %vm561, %v3004, %v3005
      %v3007 = vrot.slane %v3005, 4
      %v3008 = vrot.slane %v2583, 5
      %v3009 = vsel %vm561, %v3007, %v3008
      %v3010 = vrot.slane %v2954, 5
      %v3011 = vrot.slane %v3010, 4
      %v3012 = vrot.slane %v2585, 5
      %v3013 = vsel %vm561, %v3011, %v3012
      %v3014 = vrot.slane %v3012, 4
      %v3015 = vrot.slane %v2586, 5
      %v3016 = vsel %vm561, %v3014, %v3015
      %v3017 = vrot.slane %v2955, 5
      %v3018 = vrot.slane %v3017, 4
      %v3019 = vrot.slane %v2588, 5
      %v3020 = vsel %vm561, %v3018, %v3019
      %v3021 = vrot.slane %v3019, 4
      %v3022 = vrot.slane %v2589, 5
      %v3023 = vsel %vm561, %v3021, %v3022
      %v3024 = vrot.slane %v2956, 5
      %v3025 = vrot.slane %v3024, 4
      %v3026 = vrot.slane %v2591, 5
      %v3027 = vsel %vm561, %v3025, %v3026
      %v3028 = vrot.slane %v3026, 4
      %v3029 = vrot.slane %v2592, 5
      %v3030 = vsel %vm561, %v3028, %v3029
      %v3031 = vrot.slane %v2957, 5
      %v3032 = vrot.slane %v3031, 4
      %v3033 = vrot.slane %v2594, 5
      %v3034 = vsel %vm561, %v3032, %v3033
      %v3035 = vrot.slane %v3033, 4
      %v3036 = vrot.slane %v2595, 5
      %v3037 = vsel %vm561, %v3035, %v3036
      %s3038 = scalar_lea.vmem %s3, 320
      %v3039 = vld [vmem:[%s3038] sm:$0xf]
      %v3040 = vld [vmem:[%s3038 + $0x4] sm:$0xf]
      %v3041 = vld [vmem:[%s3038 + $0x8] sm:$0xf]
      %v3042 = vld [vmem:[%s3038 + $0xc] sm:$0xf]
      %v3043 = vld [vmem:[%s3038 + $0x10] sm:$0xf]
      %v3044 = vld [vmem:[%s3038 + $0x14] sm:$0xf]
      %v3045 = vld [vmem:[%s3038 + $0x18] sm:$0xf]
      %v3046 = vld [vmem:[%s3038 + $0x1c] sm:$0xf]
      %v3047 = vld [vmem:[%s3038 + $0x20] sm:$0xf]
      %v3048 = vld [vmem:[%s3038 + $0x24] sm:$0xf]
      %v3049 = vld [vmem:[%s3038 + $0x28] sm:$0xf]
      %v3050 = vld [vmem:[%s3038 + $0x2c] sm:$0xf]
      %v3051 = vld [vmem:[%s3038 + $0x30] sm:$0xf]
      %v3052 = vld [vmem:[%s3038 + $0x34] sm:$0xf]
      %v3053 = vld [vmem:[%s3038 + $0x38] sm:$0xf]
      %v3054 = vld [vmem:[%s3038 + $0x3c] sm:$0xf]
      %v3055 = vunpack.c.l.b16 %v2985
      %v3056 = vunpack.c.l.b16 %v2988
      %v3057 = vunpack.c.l.b16 %v2992
      %v3058 = vunpack.c.l.b16 %v2995
      %v3059 = vunpack.c.l.b16 %v2999
      %v3060 = vunpack.c.l.b16 %v3002
      %v3061 = vunpack.c.l.b16 %v3006
      %v3062 = vunpack.c.l.b16 %v3009
      %v3063 = vunpack.c.l.b16 %v3013
      %v3064 = vunpack.c.l.b16 %v3016
      %v3065 = vunpack.c.l.b16 %v3020
      %v3066 = vunpack.c.l.b16 %v3023
      %v3067 = vunpack.c.l.b16 %v3027
      %v3068 = vunpack.c.l.b16 %v3030
      %v3069 = vunpack.c.l.b16 %v3034
      %v3070 = vunpack.c.l.b16 %v3037
      %v3071 = vpack.c.b16 %v3056, %v3055
      %v3072 = vpack.c.b16 %v3058, %v3057
      %v3073 = vpack.c.b16 %v3060, %v3059
      %v3074 = vpack.c.b16 %v3062, %v3061
      %v3075 = vpack.c.b16 %v3064, %v3063
      %v3076 = vpack.c.b16 %v3066, %v3065
      %v3077 = vpack.c.b16 %v3068, %v3067
      %v3078 = vpack.c.b16 %v3070, %v3069
      %v3103 = vunpack.c.l.b16 %v3039
      %v3104 = vunpack.c.l.b16 %v3040
      %v3105 = vunpack.c.l.b16 %v3041
      %v3106 = vunpack.c.l.b16 %v3042
      %v3107 = vunpack.c.l.b16 %v3043
      %v3108 = vunpack.c.l.b16 %v3044
      %v3109 = vunpack.c.l.b16 %v3045
      %v3110 = vunpack.c.l.b16 %v3046
      %v3111 = vunpack.c.l.b16 %v3047
      %v3112 = vunpack.c.l.b16 %v3048
      %v3113 = vunpack.c.l.b16 %v3049
      %v3114 = vunpack.c.l.b16 %v3050
      %v3115 = vunpack.c.l.b16 %v3051
      %v3116 = vunpack.c.l.b16 %v3052
      %v3117 = vunpack.c.l.b16 %v3053
      %v3118 = vunpack.c.l.b16 %v3054
      %v3119 = vpack.c.b16 %v3104, %v3103
      %v3120 = vpack.c.b16 %v3106, %v3105
      %v3121 = vpack.c.b16 %v3108, %v3107
      %v3122 = vpack.c.b16 %v3110, %v3109
      %v3123 = vpack.c.b16 %v3112, %v3111
      %v3124 = vpack.c.b16 %v3114, %v3113
      %v3125 = vpack.c.b16 %v3116, %v3115
      %v3126 = vpack.c.b16 %v3118, %v3117
      %3135 = vmatpush.bf16.msra.mxu0 %v3126
      %3136 = vmatpush.bf16.msra.mxu0 %v3125
      %3137 = vmatpush.bf16.msra.mxu0 %v3124
      %3138 = vmatpush.bf16.msra.mxu0 %v3123
      %3139 = vmatpush.bf16.msra.mxu0 %v3122
      %3140 = vmatpush.bf16.msra.mxu0 %v3121
      %3141 = vmatpush.bf16.msra.mxu0 %v3120
      %3142 = vmatpush.bf16.msra.mxu0 %v3119
      %3143 = vmatmul.bf16.gmra.mxu0 %v3071
      %v3144 = vpop.f32.mrf.mxu0
      %v3145 = vadd.f32 0.0, %v3144
      %v3146 = vpop.f32.mrf.mxu0
      %v3147 = vadd.f32 0.0, %v3146
      %3148 = vmatmul.bf16.gmra.mxu0 %v3072
      %v3149 = vpop.f32.mrf.mxu0
      %v3150 = vadd.f32 0.0, %v3149
      %v3151 = vpop.f32.mrf.mxu0
      %v3152 = vadd.f32 0.0, %v3151
      %3153 = vmatmul.bf16.gmra.mxu0 %v3073
      %v3154 = vpop.f32.mrf.mxu0
      %v3155 = vadd.f32 0.0, %v3154
      %v3156 = vpop.f32.mrf.mxu0
      %v3157 = vadd.f32 0.0, %v3156
      %3158 = vmatmul.bf16.gmra.mxu0 %v3074
      %v3159 = vpop.f32.mrf.mxu0
      %v3160 = vadd.f32 0.0, %v3159
      %v3161 = vpop.f32.mrf.mxu0
      %v3162 = vadd.f32 0.0, %v3161
      %3163 = vmatmul.bf16.gmra.mxu0 %v3075
      %v3164 = vpop.f32.mrf.mxu0
      %v3165 = vadd.f32 0.0, %v3164
      %v3166 = vpop.f32.mrf.mxu0
      %v3167 = vadd.f32 0.0, %v3166
      %3168 = vmatmul.bf16.gmra.mxu0 %v3076
      %v3169 = vpop.f32.mrf.mxu0
      %v3170 = vadd.f32 0.0, %v3169
      %v3171 = vpop.f32.mrf.mxu0
      %v3172 = vadd.f32 0.0, %v3171
      %3173 = vmatmul.bf16.gmra.mxu0 %v3077
      %v3174 = vpop.f32.mrf.mxu0
      %v3175 = vadd.f32 0.0, %v3174
      %v3176 = vpop.f32.mrf.mxu0
      %v3177 = vadd.f32 0.0, %v3176
      %3178 = vmatmul.bf16.gmra.mxu0 %v3078
      %v3179 = vpop.f32.mrf.mxu0
      %v3180 = vadd.f32 0.0, %v3179
      %v3181 = vpop.f32.mrf.mxu0
      %v3182 = vadd.f32 0.0, %v3181
      %3183 = vdwg.mxu0
      %v3184 = vadd.f32 %v2934, %v3145
      %v3185 = vadd.f32 %v2935, %v3147
      %v3186 = vadd.f32 %v2936, %v3150
      %v3187 = vadd.f32 %v2937, %v3152
      %v3188 = vadd.f32 %v2938, %v3155
      %v3189 = vadd.f32 %v2939, %v3157
      %v3190 = vadd.f32 %v2940, %v3160
      %v3191 = vadd.f32 %v2941, %v3162
      %v3192 = vadd.f32 %v2942, %v3165
      %v3193 = vadd.f32 %v2943, %v3167
      %v3194 = vadd.f32 %v2944, %v3170
      %v3195 = vadd.f32 %v2945, %v3172
      %v3196 = vadd.f32 %v2946, %v3175
      %v3197 = vadd.f32 %v2947, %v3177
      %v3198 = vadd.f32 %v2948, %v3180
      %v3199 = vadd.f32 %v2949, %v3182
      %s3200 = scalar_lea.vmem [#allocation2], 24
      %v3201 = vld [vmem:[%s3200] sm:$0xf]
      %v3202 = vld [vmem:[%s3200 + $0x4] sm:$0xf]
      %v3203 = vld [vmem:[%s3200 + $0xc] sm:$0xf]
      %v3204 = vld [vmem:[%s3200 + $0x10] sm:$0xf]
      %v3205 = vld [vmem:[%s3200 + $0x18] sm:$0xf]
      %v3206 = vld [vmem:[%s3200 + $0x1c] sm:$0xf]
      %v3207 = vld [vmem:[%s3200 + $0x24] sm:$0xf]
      %v3208 = vld [vmem:[%s3200 + $0x28] sm:$0xf]
      %v3209 = vld [vmem:[%s3200 + $0x30] sm:$0xf]
      %v3210 = vld [vmem:[%s3200 + $0x34] sm:$0xf]
      %v3211 = vld [vmem:[%s3200 + $0x3c] sm:$0xf]
      %v3212 = vld [vmem:[%s3200 + $0x40] sm:$0xf]
      %v3213 = vld [vmem:[%s3200 + $0x48] sm:$0xf]
      %v3214 = vld [vmem:[%s3200 + $0x4c] sm:$0xf]
      %v3215 = vld [vmem:[%s3200 + $0x54] sm:$0xf]
      %v3216 = vld [vmem:[%s3200 + $0x58] sm:$0xf]
      %s3217 = scalar_lea.vmem %s3, 384
      %v3218 = vld [vmem:[%s3217] sm:$0xf]
      %v3219 = vld [vmem:[%s3217 + $0x4] sm:$0xf]
      %v3220 = vld [vmem:[%s3217 + $0x8] sm:$0xf]
      %v3221 = vld [vmem:[%s3217 + $0xc] sm:$0xf]
      %v3222 = vld [vmem:[%s3217 + $0x10] sm:$0xf]
      %v3223 = vld [vmem:[%s3217 + $0x14] sm:$0xf]
      %v3224 = vld [vmem:[%s3217 + $0x18] sm:$0xf]
      %v3225 = vld [vmem:[%s3217 + $0x1c] sm:$0xf]
      %v3226 = vld [vmem:[%s3217 + $0x20] sm:$0xf]
      %v3227 = vld [vmem:[%s3217 + $0x24] sm:$0xf]
      %v3228 = vld [vmem:[%s3217 + $0x28] sm:$0xf]
      %v3229 = vld [vmem:[%s3217 + $0x2c] sm:$0xf]
      %v3230 = vld [vmem:[%s3217 + $0x30] sm:$0xf]
      %v3231 = vld [vmem:[%s3217 + $0x34] sm:$0xf]
      %v3232 = vld [vmem:[%s3217 + $0x38] sm:$0xf]
      %v3233 = vld [vmem:[%s3217 + $0x3c] sm:$0xf]
      %v3250 = vunpack.c.l.b16 %v3201
      %v3251 = vunpack.c.l.b16 %v3202
      %v3252 = vunpack.c.l.b16 %v3203
      %v3253 = vunpack.c.l.b16 %v3204
      %v3254 = vunpack.c.l.b16 %v3205
      %v3255 = vunpack.c.l.b16 %v3206
      %v3256 = vunpack.c.l.b16 %v3207
      %v3257 = vunpack.c.l.b16 %v3208
      %v3258 = vunpack.c.l.b16 %v3209
      %v3259 = vunpack.c.l.b16 %v3210
      %v3260 = vunpack.c.l.b16 %v3211
      %v3261 = vunpack.c.l.b16 %v3212
      %v3262 = vunpack.c.l.b16 %v3213
      %v3263 = vunpack.c.l.b16 %v3214
      %v3264 = vunpack.c.l.b16 %v3215
      %v3265 = vunpack.c.l.b16 %v3216
      %v3266 = vpack.c.b16 %v3251, %v3250
      %v3267 = vpack.c.b16 %v3253, %v3252
      %v3268 = vpack.c.b16 %v3255, %v3254
      %v3269 = vpack.c.b16 %v3257, %v3256
      %v3270 = vpack.c.b16 %v3259, %v3258
      %v3271 = vpack.c.b16 %v3261, %v3260
      %v3272 = vpack.c.b16 %v3263, %v3262
      %v3273 = vpack.c.b16 %v3265, %v3264
      %v3298 = vunpack.c.l.b16 %v3218
      %v3299 = vunpack.c.l.b16 %v3219
      %v3300 = vunpack.c.l.b16 %v3220
      %v3301 = vunpack.c.l.b16 %v3221
      %v3302 = vunpack.c.l.b16 %v3222
      %v3303 = vunpack.c.l.b16 %v3223
      %v3304 = vunpack.c.l.b16 %v3224
      %v3305 = vunpack.c.l.b16 %v3225
      %v3306 = vunpack.c.l.b16 %v3226
      %v3307 = vunpack.c.l.b16 %v3227
      %v3308 = vunpack.c.l.b16 %v3228
      %v3309 = vunpack.c.l.b16 %v3229
      %v3310 = vunpack.c.l.b16 %v3230
      %v3311 = vunpack.c.l.b16 %v3231
      %v3312 = vunpack.c.l.b16 %v3232
      %v3313 = vunpack.c.l.b16 %v3233
      %v3314 = vpack.c.b16 %v3299, %v3298
      %v3315 = vpack.c.b16 %v3301, %v3300
      %v3316 = vpack.c.b16 %v3303, %v3302
      %v3317 = vpack.c.b16 %v3305, %v3304
      %v3318 = vpack.c.b16 %v3307, %v3306
      %v3319 = vpack.c.b16 %v3309, %v3308
      %v3320 = vpack.c.b16 %v3311, %v3310
      %v3321 = vpack.c.b16 %v3313, %v3312
      %3330 = vmatpush.bf16.msra.mxu0 %v3321
      %3331 = vmatpush.bf16.msra.mxu0 %v3320
      %3332 = vmatpush.bf16.msra.mxu0 %v3319
      %3333 = vmatpush.bf16.msra.mxu0 %v3318
      %3334 = vmatpush.bf16.msra.mxu0 %v3317
      %3335 = vmatpush.bf16.msra.mxu0 %v3316
      %3336 = vmatpush.bf16.msra.mxu0 %v3315
      %3337 = vmatpush.bf16.msra.mxu0 %v3314
      %3338 = vmatmul.bf16.gmra.mxu0 %v3266
      %v3339 = vpop.f32.mrf.mxu0
      %v3340 = vadd.f32 0.0, %v3339
      %v3341 = vpop.f32.mrf.mxu0
      %v3342 = vadd.f32 0.0, %v3341
      %3343 = vmatmul.bf16.gmra.mxu0 %v3267
      %v3344 = vpop.f32.mrf.mxu0
      %v3345 = vadd.f32 0.0, %v3344
      %v3346 = vpop.f32.mrf.mxu0
      %v3347 = vadd.f32 0.0, %v3346
      %3348 = vmatmul.bf16.gmra.mxu0 %v3268
      %v3349 = vpop.f32.mrf.mxu0
      %v3350 = vadd.f32 0.0, %v3349
      %v3351 = vpop.f32.mrf.mxu0
      %v3352 = vadd.f32 0.0, %v3351
      %3353 = vmatmul.bf16.gmra.mxu0 %v3269
      %v3354 = vpop.f32.mrf.mxu0
      %v3355 = vadd.f32 0.0, %v3354
      %v3356 = vpop.f32.mrf.mxu0
      %v3357 = vadd.f32 0.0, %v3356
      %3358 = vmatmul.bf16.gmra.mxu0 %v3270
      %v3359 = vpop.f32.mrf.mxu0
      %v3360 = vadd.f32 0.0, %v3359
      %v3361 = vpop.f32.mrf.mxu0
      %v3362 = vadd.f32 0.0, %v3361
      %3363 = vmatmul.bf16.gmra.mxu0 %v3271
      %v3364 = vpop.f32.mrf.mxu0
      %v3365 = vadd.f32 0.0, %v3364
      %v3366 = vpop.f32.mrf.mxu0
      %v3367 = vadd.f32 0.0, %v3366
      %3368 = vmatmul.bf16.gmra.mxu0 %v3272
      %v3369 = vpop.f32.mrf.mxu0
      %v3370 = vadd.f32 0.0, %v3369
      %v3371 = vpop.f32.mrf.mxu0
      %v3372 = vadd.f32 0.0, %v3371
      %3373 = vmatmul.bf16.gmra.mxu0 %v3273
      %v3374 = vpop.f32.mrf.mxu0
      %v3375 = vadd.f32 0.0, %v3374
      %v3376 = vpop.f32.mrf.mxu0
      %v3377 = vadd.f32 0.0, %v3376
      %3378 = vdwg.mxu0
      %v3379 = vadd.f32 %v3184, %v3340
      %v3380 = vadd.f32 %v3185, %v3342
      %v3381 = vadd.f32 %v3186, %v3345
      %v3382 = vadd.f32 %v3187, %v3347
      %v3383 = vadd.f32 %v3188, %v3350
      %v3384 = vadd.f32 %v3189, %v3352
      %v3385 = vadd.f32 %v3190, %v3355
      %v3386 = vadd.f32 %v3191, %v3357
      %v3387 = vadd.f32 %v3192, %v3360
      %v3388 = vadd.f32 %v3193, %v3362
      %v3389 = vadd.f32 %v3194, %v3365
      %v3390 = vadd.f32 %v3195, %v3367
      %v3391 = vadd.f32 %v3196, %v3370
      %v3392 = vadd.f32 %v3197, %v3372
      %v3393 = vadd.f32 %v3198, %v3375
      %v3394 = vadd.f32 %v3199, %v3377
      %v3395 = vld [vmem:[%s3200] sm:$0xf]
      %v3396 = vld [vmem:[%s3200 + $0x4] sm:$0xf]
      %v3397 = vld [vmem:[%s3200 + $0x8] sm:$0x1]
      %v3398 = vld [vmem:[%s3200 + $0xc] sm:$0xf]
      %v3399 = vld [vmem:[%s3200 + $0x10] sm:$0xf]
      %v3400 = vld [vmem:[%s3200 + $0x14] sm:$0x1]
      %v3401 = vld [vmem:[%s3200 + $0x18] sm:$0xf]
      %v3402 = vld [vmem:[%s3200 + $0x1c] sm:$0xf]
      %v3403 = vld [vmem:[%s3200 + $0x20] sm:$0x1]
      %v3404 = vld [vmem:[%s3200 + $0x24] sm:$0xf]
      %v3405 = vld [vmem:[%s3200 + $0x28] sm:$0xf]
      %v3406 = vld [vmem:[%s3200 + $0x2c] sm:$0x1]
      %v3407 = vld [vmem:[%s3200 + $0x30] sm:$0xf]
      %v3408 = vld [vmem:[%s3200 + $0x34] sm:$0xf]
      %v3409 = vld [vmem:[%s3200 + $0x38] sm:$0x1]
      %v3410 = vld [vmem:[%s3200 + $0x3c] sm:$0xf]
      %v3411 = vld [vmem:[%s3200 + $0x40] sm:$0xf]
      %v3412 = vld [vmem:[%s3200 + $0x44] sm:$0x1]
      %v3413 = vld [vmem:[%s3200 + $0x48] sm:$0xf]
      %v3414 = vld [vmem:[%s3200 + $0x4c] sm:$0xf]
      %v3415 = vld [vmem:[%s3200 + $0x50] sm:$0x1]
      %v3416 = vld [vmem:[%s3200 + $0x54] sm:$0xf]
      %v3417 = vld [vmem:[%s3200 + $0x58] sm:$0xf]
      %v3418 = vld [vmem:[%s3200 + $0x5c] sm:$0x1]
      %v3420 = vshrl.u32 %v3395, 16
      %v3422 = vrot.slane %v3420, 4
      %v3423 = vshll.u32 %v3395, 16
      %v3425 = vrot.slane %v3423, 5
      %v3426 = vor.u32 %v3422, %v3425
      %v3427 = vrot.slane %v3426, 4
      %v3429 = vshll.u32 %v3396, 16
      %v3431 = vrot.slane %v3429, 5
      %v3432 = vsel %vm288, %v3427, %v3431
      %v3433 = vshrl.u32 %v3396, 16
      %v3435 = vrot.slane %v3433, 4
      %v3436 = vor.u32 %v3435, %v3431
      %v3437 = vrot.slane %v3436, 4
      %v3439 = vshll.u32 %v3397, 16
      %v3441 = vrot.slane %v3439, 5
      %v3442 = vsel %vm288, %v3437, %v3441
      %v3444 = vshrl.u32 %v3398, 16
      %v3446 = vrot.slane %v3444, 4
      %v3447 = vshll.u32 %v3398, 16
      %v3449 = vrot.slane %v3447, 5
      %v3450 = vor.u32 %v3446, %v3449
      %v3451 = vrot.slane %v3450, 4
      %v3453 = vshll.u32 %v3399, 16
      %v3455 = vrot.slane %v3453, 5
      %v3456 = vsel %vm288, %v3451, %v3455
      %v3457 = vshrl.u32 %v3399, 16
      %v3459 = vrot.slane %v3457, 4
      %v3460 = vor.u32 %v3459, %v3455
      %v3461 = vrot.slane %v3460, 4
      %v3463 = vshll.u32 %v3400, 16
      %v3465 = vrot.slane %v3463, 5
      %v3466 = vsel %vm288, %v3461, %v3465
      %v3468 = vshrl.u32 %v3401, 16
      %v3470 = vrot.slane %v3468, 4
      %v3471 = vshll.u32 %v3401, 16
      %v3473 = vrot.slane %v3471, 5
      %v3474 = vor.u32 %v3470, %v3473
      %v3475 = vrot.slane %v3474, 4
      %v3477 = vshll.u32 %v3402, 16
      %v3479 = vrot.slane %v3477, 5
      %v3480 = vsel %vm288, %v3475, %v3479
      %v3481 = vshrl.u32 %v3402, 16
      %v3483 = vrot.slane %v3481, 4
      %v3484 = vor.u32 %v3483, %v3479
      %v3485 = vrot.slane %v3484, 4
      %v3487 = vshll.u32 %v3403, 16
      %v3489 = vrot.slane %v3487, 5
      %v3490 = vsel %vm288, %v3485, %v3489
      %v3492 = vshrl.u32 %v3404, 16
      %v3494 = vrot.slane %v3492, 4
      %v3495 = vshll.u32 %v3404, 16
      %v3497 = vrot.slane %v3495, 5
      %v3498 = vor.u32 %v3494, %v3497
      %v3499 = vrot.slane %v3498, 4
      %v3501 = vshll.u32 %v3405, 16
      %v3503 = vrot.slane %v3501, 5
      %v3504 = vsel %vm288, %v3499, %v3503
      %v3505 = vshrl.u32 %v3405, 16
      %v3507 = vrot.slane %v3505, 4
      %v3508 = vor.u32 %v3507, %v3503
      %v3509 = vrot.slane %v3508, 4
      %v3511 = vshll.u32 %v3406, 16
      %v3513 = vrot.slane %v3511, 5
      %v3514 = vsel %vm288, %v3509, %v3513
      %v3516 = vshrl.u32 %v3407, 16
      %v3518 = vrot.slane %v3516, 4
      %v3519 = vshll.u32 %v3407, 16
      %v3521 = vrot.slane %v3519, 5
      %v3522 = vor.u32 %v3518, %v3521
      %v3523 = vrot.slane %v3522, 4
      %v3525 = vshll.u32 %v3408, 16
      %v3527 = vrot.slane %v3525, 5
      %v3528 = vsel %vm288, %v3523, %v3527
      %v3529 = vshrl.u32 %v3408, 16
      %v3531 = vrot.slane %v3529, 4
      %v3532 = vor.u32 %v3531, %v3527
      %v3533 = vrot.slane %v3532, 4
      %v3535 = vshll.u32 %v3409, 16
      %v3537 = vrot.slane %v3535, 5
      %v3538 = vsel %vm288, %v3533, %v3537
      %v3540 = vshrl.u32 %v3410, 16
      %v3542 = vrot.slane %v3540, 4
      %v3543 = vshll.u32 %v3410, 16
      %v3545 = vrot.slane %v3543, 5
      %v3546 = vor.u32 %v3542, %v3545
      %v3547 = vrot.slane %v3546, 4
      %v3549 = vshll.u32 %v3411, 16
      %v3551 = vrot.slane %v3549, 5
      %v3552 = vsel %vm288, %v3547, %v3551
      %v3553 = vshrl.u32 %v3411, 16
      %v3555 = vrot.slane %v3553, 4
      %v3556 = vor.u32 %v3555, %v3551
      %v3557 = vrot.slane %v3556, 4
      %v3559 = vshll.u32 %v3412, 16
      %v3561 = vrot.slane %v3559, 5
      %v3562 = vsel %vm288, %v3557, %v3561
      %v3564 = vshrl.u32 %v3413, 16
      %v3566 = vrot.slane %v3564, 4
      %v3567 = vshll.u32 %v3413, 16
      %v3569 = vrot.slane %v3567, 5
      %v3570 = vor.u32 %v3566, %v3569
      %v3571 = vrot.slane %v3570, 4
      %v3573 = vshll.u32 %v3414, 16
      %v3575 = vrot.slane %v3573, 5
      %v3576 = vsel %vm288, %v3571, %v3575
      %v3577 = vshrl.u32 %v3414, 16
      %v3579 = vrot.slane %v3577, 4
      %v3580 = vor.u32 %v3579, %v3575
      %v3581 = vrot.slane %v3580, 4
      %v3583 = vshll.u32 %v3415, 16
      %v3585 = vrot.slane %v3583, 5
      %v3586 = vsel %vm288, %v3581, %v3585
      %v3588 = vshrl.u32 %v3416, 16
      %v3590 = vrot.slane %v3588, 4
      %v3591 = vshll.u32 %v3416, 16
      %v3593 = vrot.slane %v3591, 5
      %v3594 = vor.u32 %v3590, %v3593
      %v3595 = vrot.slane %v3594, 4
      %v3597 = vshll.u32 %v3417, 16
      %v3599 = vrot.slane %v3597, 5
      %v3600 = vsel %vm288, %v3595, %v3599
      %v3601 = vshrl.u32 %v3417, 16
      %v3603 = vrot.slane %v3601, 4
      %v3604 = vor.u32 %v3603, %v3599
      %v3605 = vrot.slane %v3604, 4
      %v3607 = vshll.u32 %v3418, 16
      %v3609 = vrot.slane %v3607, 5
      %v3610 = vsel %vm288, %v3605, %v3609
      %s3611 = scalar_lea.vmem %s3, 448
      %v3612 = vld [vmem:[%s3611] sm:$0xf]
      %v3613 = vld [vmem:[%s3611 + $0x4] sm:$0xf]
      %v3614 = vld [vmem:[%s3611 + $0x8] sm:$0xf]
      %v3615 = vld [vmem:[%s3611 + $0xc] sm:$0xf]
      %v3616 = vld [vmem:[%s3611 + $0x10] sm:$0xf]
      %v3617 = vld [vmem:[%s3611 + $0x14] sm:$0xf]
      %v3618 = vld [vmem:[%s3611 + $0x18] sm:$0xf]
      %v3619 = vld [vmem:[%s3611 + $0x1c] sm:$0xf]
      %v3620 = vld [vmem:[%s3611 + $0x20] sm:$0xf]
      %v3621 = vld [vmem:[%s3611 + $0x24] sm:$0xf]
      %v3622 = vld [vmem:[%s3611 + $0x28] sm:$0xf]
      %v3623 = vld [vmem:[%s3611 + $0x2c] sm:$0xf]
      %v3624 = vld [vmem:[%s3611 + $0x30] sm:$0xf]
      %v3625 = vld [vmem:[%s3611 + $0x34] sm:$0xf]
      %v3626 = vld [vmem:[%s3611 + $0x38] sm:$0xf]
      %v3627 = vld [vmem:[%s3611 + $0x3c] sm:$0xf]
      %v3628 = vunpack.c.l.b16 %v3432
      %v3629 = vunpack.c.l.b16 %v3442
      %v3630 = vunpack.c.l.b16 %v3456
      %v3631 = vunpack.c.l.b16 %v3466
      %v3632 = vunpack.c.l.b16 %v3480
      %v3633 = vunpack.c.l.b16 %v3490
      %v3634 = vunpack.c.l.b16 %v3504
      %v3635 = vunpack.c.l.b16 %v3514
      %v3636 = vunpack.c.l.b16 %v3528
      %v3637 = vunpack.c.l.b16 %v3538
      %v3638 = vunpack.c.l.b16 %v3552
      %v3639 = vunpack.c.l.b16 %v3562
      %v3640 = vunpack.c.l.b16 %v3576
      %v3641 = vunpack.c.l.b16 %v3586
      %v3642 = vunpack.c.l.b16 %v3600
      %v3643 = vunpack.c.l.b16 %v3610
      %v3644 = vpack.c.b16 %v3629, %v3628
      %v3645 = vpack.c.b16 %v3631, %v3630
      %v3646 = vpack.c.b16 %v3633, %v3632
      %v3647 = vpack.c.b16 %v3635, %v3634
      %v3648 = vpack.c.b16 %v3637, %v3636
      %v3649 = vpack.c.b16 %v3639, %v3638
      %v3650 = vpack.c.b16 %v3641, %v3640
      %v3651 = vpack.c.b16 %v3643, %v3642
      %v3676 = vunpack.c.l.b16 %v3612
      %v3677 = vunpack.c.l.b16 %v3613
      %v3678 = vunpack.c.l.b16 %v3614
      %v3679 = vunpack.c.l.b16 %v3615
      %v3680 = vunpack.c.l.b16 %v3616
      %v3681 = vunpack.c.l.b16 %v3617
      %v3682 = vunpack.c.l.b16 %v3618
      %v3683 = vunpack.c.l.b16 %v3619
      %v3684 = vunpack.c.l.b16 %v3620
      %v3685 = vunpack.c.l.b16 %v3621
      %v3686 = vunpack.c.l.b16 %v3622
      %v3687 = vunpack.c.l.b16 %v3623
      %v3688 = vunpack.c.l.b16 %v3624
      %v3689 = vunpack.c.l.b16 %v3625
      %v3690 = vunpack.c.l.b16 %v3626
      %v3691 = vunpack.c.l.b16 %v3627
      %v3692 = vpack.c.b16 %v3677, %v3676
      %v3693 = vpack.c.b16 %v3679, %v3678
      %v3694 = vpack.c.b16 %v3681, %v3680
      %v3695 = vpack.c.b16 %v3683, %v3682
      %v3696 = vpack.c.b16 %v3685, %v3684
      %v3697 = vpack.c.b16 %v3687, %v3686
      %v3698 = vpack.c.b16 %v3689, %v3688
      %v3699 = vpack.c.b16 %v3691, %v3690
      %3708 = vmatpush.bf16.msra.mxu0 %v3699
      %3709 = vmatpush.bf16.msra.mxu0 %v3698
      %3710 = vmatpush.bf16.msra.mxu0 %v3697
      %3711 = vmatpush.bf16.msra.mxu0 %v3696
      %3712 = vmatpush.bf16.msra.mxu0 %v3695
      %3713 = vmatpush.bf16.msra.mxu0 %v3694
      %3714 = vmatpush.bf16.msra.mxu0 %v3693
      %3715 = vmatpush.bf16.msra.mxu0 %v3692
      %3716 = vmatmul.bf16.gmra.mxu0 %v3644
      %v3717 = vpop.f32.mrf.mxu0
      %v3718 = vadd.f32 0.0, %v3717
      %v3719 = vpop.f32.mrf.mxu0
      %v3720 = vadd.f32 0.0, %v3719
      %3721 = vmatmul.bf16.gmra.mxu0 %v3645
      %v3722 = vpop.f32.mrf.mxu0
      %v3723 = vadd.f32 0.0, %v3722
      %v3724 = vpop.f32.mrf.mxu0
      %v3725 = vadd.f32 0.0, %v3724
      %3726 = vmatmul.bf16.gmra.mxu0 %v3646
      %v3727 = vpop.f32.mrf.mxu0
      %v3728 = vadd.f32 0.0, %v3727
      %v3729 = vpop.f32.mrf.mxu0
      %v3730 = vadd.f32 0.0, %v3729
      %3731 = vmatmul.bf16.gmra.mxu0 %v3647
      %v3732 = vpop.f32.mrf.mxu0
      %v3733 = vadd.f32 0.0, %v3732
      %v3734 = vpop.f32.mrf.mxu0
      %v3735 = vadd.f32 0.0, %v3734
      %3736 = vmatmul.bf16.gmra.mxu0 %v3648
      %v3737 = vpop.f32.mrf.mxu0
      %v3738 = vadd.f32 0.0, %v3737
      %v3739 = vpop.f32.mrf.mxu0
      %v3740 = vadd.f32 0.0, %v3739
      %3741 = vmatmul.bf16.gmra.mxu0 %v3649
      %v3742 = vpop.f32.mrf.mxu0
      %v3743 = vadd.f32 0.0, %v3742
      %v3744 = vpop.f32.mrf.mxu0
      %v3745 = vadd.f32 0.0, %v3744
      %3746 = vmatmul.bf16.gmra.mxu0 %v3650
      %v3747 = vpop.f32.mrf.mxu0
      %v3748 = vadd.f32 0.0, %v3747
      %v3749 = vpop.f32.mrf.mxu0
      %v3750 = vadd.f32 0.0, %v3749
      %3751 = vmatmul.bf16.gmra.mxu0 %v3651
      %v3752 = vpop.f32.mrf.mxu0
      %v3753 = vadd.f32 0.0, %v3752
      %v3754 = vpop.f32.mrf.mxu0
      %v3755 = vadd.f32 0.0, %v3754
      %3756 = vdwg.mxu0
      %v3757 = vadd.f32 %v3379, %v3718
      %v3758 = vadd.f32 %v3380, %v3720
      %v3759 = vadd.f32 %v3381, %v3723
      %v3760 = vadd.f32 %v3382, %v3725
      %v3761 = vadd.f32 %v3383, %v3728
      %v3762 = vadd.f32 %v3384, %v3730
      %v3763 = vadd.f32 %v3385, %v3733
      %v3764 = vadd.f32 %v3386, %v3735
      %v3765 = vadd.f32 %v3387, %v3738
      %v3766 = vadd.f32 %v3388, %v3740
      %v3767 = vadd.f32 %v3389, %v3743
      %v3768 = vadd.f32 %v3390, %v3745
      %v3769 = vadd.f32 %v3391, %v3748
      %v3770 = vadd.f32 %v3392, %v3750
      %v3771 = vadd.f32 %v3393, %v3753
      %v3772 = vadd.f32 %v3394, %v3755
      %v3773 = vld [vmem:[%s3200] sm:$0xe]
      %v3774 = vld [vmem:[%s3200 + $0xc] sm:$0xe]
      %v3775 = vld [vmem:[%s3200 + $0x18] sm:$0xe]
      %v3776 = vld [vmem:[%s3200 + $0x24] sm:$0xe]
      %v3777 = vld [vmem:[%s3200 + $0x30] sm:$0xe]
      %v3778 = vld [vmem:[%s3200 + $0x3c] sm:$0xe]
      %v3779 = vld [vmem:[%s3200 + $0x48] sm:$0xe]
      %v3780 = vld [vmem:[%s3200 + $0x54] sm:$0xe]
      %v3805 = vrot.slane %v3773, 5
      %v3806 = vrot.slane %v3805, 4
      %v3807 = vrot.slane %v3396, 5
      %v3808 = vsel %vm561, %v3806, %v3807
      %v3809 = vrot.slane %v3807, 4
      %v3810 = vrot.slane %v3397, 5
      %v3811 = vsel %vm561, %v3809, %v3810
      %v3812 = vrot.slane %v3774, 5
      %v3813 = vrot.slane %v3812, 4
      %v3814 = vrot.slane %v3399, 5
      %v3815 = vsel %vm561, %v3813, %v3814
      %v3816 = vrot.slane %v3814, 4
      %v3817 = vrot.slane %v3400, 5
      %v3818 = vsel %vm561, %v3816, %v3817
      %v3819 = vrot.slane %v3775, 5
      %v3820 = vrot.slane %v3819, 4
      %v3821 = vrot.slane %v3402, 5
      %v3822 = vsel %vm561, %v3820, %v3821
      %v3823 = vrot.slane %v3821, 4
      %v3824 = vrot.slane %v3403, 5
      %v3825 = vsel %vm561, %v3823, %v3824
      %v3826 = vrot.slane %v3776, 5
      %v3827 = vrot.slane %v3826, 4
      %v3828 = vrot.slane %v3405, 5
      %v3829 = vsel %vm561, %v3827, %v3828
      %v3830 = vrot.slane %v3828, 4
      %v3831 = vrot.slane %v3406, 5
      %v3832 = vsel %vm561, %v3830, %v3831
      %v3833 = vrot.slane %v3777, 5
      %v3834 = vrot.slane %v3833, 4
      %v3835 = vrot.slane %v3408, 5
      %v3836 = vsel %vm561, %v3834, %v3835
      %v3837 = vrot.slane %v3835, 4
      %v3838 = vrot.slane %v3409, 5
      %v3839 = vsel %vm561, %v3837, %v3838
      %v3840 = vrot.slane %v3778, 5
      %v3841 = vrot.slane %v3840, 4
      %v3842 = vrot.slane %v3411, 5
      %v3843 = vsel %vm561, %v3841, %v3842
      %v3844 = vrot.slane %v3842, 4
      %v3845 = vrot.slane %v3412, 5
      %v3846 = vsel %vm561, %v3844, %v3845
      %v3847 = vrot.slane %v3779, 5
      %v3848 = vrot.slane %v3847, 4
      %v3849 = vrot.slane %v3414, 5
      %v3850 = vsel %vm561, %v3848, %v3849
      %v3851 = vrot.slane %v3849, 4
      %v3852 = vrot.slane %v3415, 5
      %v3853 = vsel %vm561, %v3851, %v3852
      %v3854 = vrot.slane %v3780, 5
      %v3855 = vrot.slane %v3854, 4
      %v3856 = vrot.slane %v3417, 5
      %v3857 = vsel %vm561, %v3855, %v3856
      %v3858 = vrot.slane %v3856, 4
      %v3859 = vrot.slane %v3418, 5
      %v3860 = vsel %vm561, %v3858, %v3859
      %s3861 = scalar_lea.vmem %s3, 512
      %v3862 = vld [vmem:[%s3861] sm:$0xf]
      %v3863 = vld [vmem:[%s3861 + $0x4] sm:$0xf]
      %v3864 = vld [vmem:[%s3861 + $0x8] sm:$0xf]
      %v3865 = vld [vmem:[%s3861 + $0xc] sm:$0xf]
      %v3866 = vld [vmem:[%s3861 + $0x10] sm:$0xf]
      %v3867 = vld [vmem:[%s3861 + $0x14] sm:$0xf]
      %v3868 = vld [vmem:[%s3861 + $0x18] sm:$0xf]
      %v3869 = vld [vmem:[%s3861 + $0x1c] sm:$0xf]
      %v3870 = vld [vmem:[%s3861 + $0x20] sm:$0xf]
      %v3871 = vld [vmem:[%s3861 + $0x24] sm:$0xf]
      %v3872 = vld [vmem:[%s3861 + $0x28] sm:$0xf]
      %v3873 = vld [vmem:[%s3861 + $0x2c] sm:$0xf]
      %v3874 = vld [vmem:[%s3861 + $0x30] sm:$0xf]
      %v3875 = vld [vmem:[%s3861 + $0x34] sm:$0xf]
      %v3876 = vld [vmem:[%s3861 + $0x38] sm:$0xf]
      %v3877 = vld [vmem:[%s3861 + $0x3c] sm:$0xf]
      %v3878 = vunpack.c.l.b16 %v3808
      %v3879 = vunpack.c.l.b16 %v3811
      %v3880 = vunpack.c.l.b16 %v3815
      %v3881 = vunpack.c.l.b16 %v3818
      %v3882 = vunpack.c.l.b16 %v3822
      %v3883 = vunpack.c.l.b16 %v3825
      %v3884 = vunpack.c.l.b16 %v3829
      %v3885 = vunpack.c.l.b16 %v3832
      %v3886 = vunpack.c.l.b16 %v3836
      %v3887 = vunpack.c.l.b16 %v3839
      %v3888 = vunpack.c.l.b16 %v3843
      %v3889 = vunpack.c.l.b16 %v3846
      %v3890 = vunpack.c.l.b16 %v3850
      %v3891 = vunpack.c.l.b16 %v3853
      %v3892 = vunpack.c.l.b16 %v3857
      %v3893 = vunpack.c.l.b16 %v3860
      %v3894 = vpack.c.b16 %v3879, %v3878
      %v3895 = vpack.c.b16 %v3881, %v3880
      %v3896 = vpack.c.b16 %v3883, %v3882
      %v3897 = vpack.c.b16 %v3885, %v3884
      %v3898 = vpack.c.b16 %v3887, %v3886
      %v3899 = vpack.c.b16 %v3889, %v3888
      %v3900 = vpack.c.b16 %v3891, %v3890
      %v3901 = vpack.c.b16 %v3893, %v3892
      %v3926 = vunpack.c.l.b16 %v3862
      %v3927 = vunpack.c.l.b16 %v3863
      %v3928 = vunpack.c.l.b16 %v3864
      %v3929 = vunpack.c.l.b16 %v3865
      %v3930 = vunpack.c.l.b16 %v3866
      %v3931 = vunpack.c.l.b16 %v3867
      %v3932 = vunpack.c.l.b16 %v3868
      %v3933 = vunpack.c.l.b16 %v3869
      %v3934 = vunpack.c.l.b16 %v3870
      %v3935 = vunpack.c.l.b16 %v3871
      %v3936 = vunpack.c.l.b16 %v3872
      %v3937 = vunpack.c.l.b16 %v3873
      %v3938 = vunpack.c.l.b16 %v3874
      %v3939 = vunpack.c.l.b16 %v3875
      %v3940 = vunpack.c.l.b16 %v3876
      %v3941 = vunpack.c.l.b16 %v3877
      %v3942 = vpack.c.b16 %v3927, %v3926
      %v3943 = vpack.c.b16 %v3929, %v3928
      %v3944 = vpack.c.b16 %v3931, %v3930
      %v3945 = vpack.c.b16 %v3933, %v3932
      %v3946 = vpack.c.b16 %v3935, %v3934
      %v3947 = vpack.c.b16 %v3937, %v3936
      %v3948 = vpack.c.b16 %v3939, %v3938
      %v3949 = vpack.c.b16 %v3941, %v3940
      %3958 = vmatpush.bf16.msra.mxu0 %v3949
      %3959 = vmatpush.bf16.msra.mxu0 %v3948
      %3960 = vmatpush.bf16.msra.mxu0 %v3947
      %3961 = vmatpush.bf16.msra.mxu0 %v3946
      %3962 = vmatpush.bf16.msra.mxu0 %v3945
      %3963 = vmatpush.bf16.msra.mxu0 %v3944
      %3964 = vmatpush.bf16.msra.mxu0 %v3943
      %3965 = vmatpush.bf16.msra.mxu0 %v3942
      %3966 = vmatmul.bf16.gmra.mxu0 %v3894
      %v3967 = vpop.f32.mrf.mxu0
      %v3968 = vadd.f32 0.0, %v3967
      %v3969 = vpop.f32.mrf.mxu0
      %v3970 = vadd.f32 0.0, %v3969
      %3971 = vmatmul.bf16.gmra.mxu0 %v3895
      %v3972 = vpop.f32.mrf.mxu0
      %v3973 = vadd.f32 0.0, %v3972
      %v3974 = vpop.f32.mrf.mxu0
      %v3975 = vadd.f32 0.0, %v3974
      %3976 = vmatmul.bf16.gmra.mxu0 %v3896
      %v3977 = vpop.f32.mrf.mxu0
      %v3978 = vadd.f32 0.0, %v3977
      %v3979 = vpop.f32.mrf.mxu0
      %v3980 = vadd.f32 0.0, %v3979
      %3981 = vmatmul.bf16.gmra.mxu0 %v3897
      %v3982 = vpop.f32.mrf.mxu0
      %v3983 = vadd.f32 0.0, %v3982
      %v3984 = vpop.f32.mrf.mxu0
      %v3985 = vadd.f32 0.0, %v3984
      %3986 = vmatmul.bf16.gmra.mxu0 %v3898
      %v3987 = vpop.f32.mrf.mxu0
      %v3988 = vadd.f32 0.0, %v3987
      %v3989 = vpop.f32.mrf.mxu0
      %v3990 = vadd.f32 0.0, %v3989
      %3991 = vmatmul.bf16.gmra.mxu0 %v3899
      %v3992 = vpop.f32.mrf.mxu0
      %v3993 = vadd.f32 0.0, %v3992
      %v3994 = vpop.f32.mrf.mxu0
      %v3995 = vadd.f32 0.0, %v3994
      %3996 = vmatmul.bf16.gmra.mxu0 %v3900
      %v3997 = vpop.f32.mrf.mxu0
      %v3998 = vadd.f32 0.0, %v3997
      %v3999 = vpop.f32.mrf.mxu0
      %v4000 = vadd.f32 0.0, %v3999
      %4001 = vmatmul.bf16.gmra.mxu0 %v3901
      %v4002 = vpop.f32.mrf.mxu0
      %v4003 = vadd.f32 0.0, %v4002
      %v4004 = vpop.f32.mrf.mxu0
      %v4005 = vadd.f32 0.0, %v4004
      %4006 = vdwg.mxu0
      %v4007 = vadd.f32 %v3757, %v3968
      %v4008 = vadd.f32 %v3758, %v3970
      %v4009 = vadd.f32 %v3759, %v3973
      %v4010 = vadd.f32 %v3760, %v3975
      %v4011 = vadd.f32 %v3761, %v3978
      %v4012 = vadd.f32 %v3762, %v3980
      %v4013 = vadd.f32 %v3763, %v3983
      %v4014 = vadd.f32 %v3764, %v3985
      %v4015 = vadd.f32 %v3765, %v3988
      %v4016 = vadd.f32 %v3766, %v3990
      %v4017 = vadd.f32 %v3767, %v3993
      %v4018 = vadd.f32 %v3768, %v3995
      %v4019 = vadd.f32 %v3769, %v3998
      %v4020 = vadd.f32 %v3770, %v4000
      %v4021 = vadd.f32 %v3771, %v4003
      %v4022 = vadd.f32 %v3772, %v4005
      %v4023 = vld [vmem:[%s4] sm:$0x1]
      %v4025 = vperm.slane %v4023, 0
      %v4027 = vadd.f32 %v4007, %v4025
      %v4028 = vadd.f32 %v4008, %v4025
      %v4029 = vadd.f32 %v4009, %v4025
      %v4030 = vadd.f32 %v4010, %v4025
      %v4031 = vadd.f32 %v4011, %v4025
      %v4032 = vadd.f32 %v4012, %v4025
      %v4033 = vadd.f32 %v4013, %v4025
      %v4034 = vadd.f32 %v4014, %v4025
      %v4035 = vadd.f32 %v4015, %v4025
      %v4036 = vadd.f32 %v4016, %v4025
      %v4037 = vadd.f32 %v4017, %v4025
      %v4038 = vadd.f32 %v4018, %v4025
      %v4039 = vadd.f32 %v4019, %v4025
      %v4040 = vadd.f32 %v4020, %v4025
      %v4041 = vadd.f32 %v4021, %v4025
      %v4042 = vadd.f32 %v4022, %v4025
      %v4043 = vmax.f32 %v4027, 0.0
      %v4044 = vmax.f32 %v4028, 0.0
      %v4045 = vmax.f32 %v4029, 0.0
      %v4046 = vmax.f32 %v4030, 0.0
      %v4047 = vmax.f32 %v4031, 0.0
      %v4048 = vmax.f32 %v4032, 0.0
      %v4049 = vmax.f32 %v4033, 0.0
      %v4050 = vmax.f32 %v4034, 0.0
      %v4051 = vmax.f32 %v4035, 0.0
      %v4052 = vmax.f32 %v4036, 0.0
      %v4053 = vmax.f32 %v4037, 0.0
      %v4054 = vmax.f32 %v4038, 0.0
      %v4055 = vmax.f32 %v4039, 0.0
      %v4056 = vmax.f32 %v4040, 0.0
      %v4057 = vmax.f32 %v4041, 0.0
      %v4058 = vmax.f32 %v4042, 0.0
      %4059 = vxpose.xlu0.b32.start [1/16] %v4043, 128
      %4060 = vxpose.xlu0.b32.cont [2/16] %v4044, 128
      %4061 = vxpose.xlu0.b32.cont [3/16] %v4045, 128
      %4062 = vxpose.xlu0.b32.cont [4/16] %v4046, 128
      %4063 = vxpose.xlu0.b32.cont [5/16] %v4047, 128
      %4064 = vxpose.xlu0.b32.cont [6/16] %v4048, 128
      %4065 = vxpose.xlu0.b32.cont [7/16] %v4049, 128
      %4066 = vxpose.xlu0.b32.cont [8/16] %v4050, 128
      %4067 = vxpose.xlu0.b32.cont [9/16] %v4051, 128
      %4068 = vxpose.xlu0.b32.cont [10/16] %v4052, 128
      %4069 = vxpose.xlu0.b32.cont [11/16] %v4053, 128
      %4070 = vxpose.xlu0.b32.cont [12/16] %v4054, 128
      %4071 = vxpose.xlu0.b32.cont [13/16] %v4055, 128
      %4072 = vxpose.xlu0.b32.cont [14/16] %v4056, 128
      %4073 = vxpose.xlu0.b32.cont [15/16] %v4057, 128
      %4074 = vxpose.xlu0.b32.end [16/16] %v4058, 128
      %v4075 = vpop.trf.xlu0
      %v4076 = vpop.trf.xlu0
      %v4077 = vpop.trf.xlu0
      %v4078 = vpop.trf.xlu0
      %v4079 = vpop.trf.xlu0
      %v4080 = vpop.trf.xlu0
      %v4081 = vpop.trf.xlu0
      %v4082 = vpop.trf.xlu0
      %v4083 = vpop.trf.xlu0
      %v4084 = vpop.trf.xlu0
      %v4085 = vpop.trf.xlu0
      %v4086 = vpop.trf.xlu0
      %v4087 = vpop.trf.xlu0
      %v4088 = vpop.trf.xlu0
      %v4089 = vpop.trf.xlu0
      %v4090 = vpop.trf.xlu0
      %4091 = vst [vmem:[%s244] sm:$0xff] %v4075
      %p4092 = scmp.lt.s32.totalorder %s20, 1
      %s4093 = scalar_select %p4092, %s20, 1
      %p4094 = scmp.lt.s32.totalorder %s21, 1
      %s4095 = scalar_select %p4094, %s21, 1
      %s4096 = smul.addr %s4093, 2
      %s4097 = sadd.s32 %s4095, %s4096
      %s4098 = smul.addr %s4097, 8
      %s4099 = scalar_lea.vmem %s5, %s4098
      // Predicated region
      $region49: #{_model.1} parent=39 // pred_check
        %p4100 = pneg %p158
      $region50: #{_model.1} parent=39 // pred_check_branch
        %4102 = sbr.rel (%p4100) target = $region52
      $region51: #{_model.1} parent=39 // pred_region
        _
      $region52: #{_model.1} parent=39 // pred_fallthru
        _
    $region40: #{_model.1} parent=5 // pred_fallthru
      _
    %p4103 = scmp.le.s32.totalorder 2, %s11
    // Predicated region
    $region53: #{_model.1} parent=5 // pred_check
      %p4104 = pneg %p4103
    $region54: #{_model.1} parent=5 // pred_check_branch
      %4106 = sbr.rel (%p4104) target = $region56
    $region55: #{_model.1} parent=5 // pred_region
      %s4107 = ssub.s32 %s11, 2
      // Predicated region
      $region57: #{_model.1} parent=55 // pred_check
        %p4108 = pneg %p164
      $region58: #{_model.1} parent=55 // pred_check_branch
        %4110 = sbr.rel (%p4108) target = $region60
      $region59: #{_model.1} parent=55 // pred_region
        %p4111 = scmp.lt.s32.totalorder %s22, 1
        %s4112 = scalar_select %p4111, %s22, 1
        %p4113 = scmp.lt.s32.totalorder %s23, 1
        %s4114 = scalar_select %p4113, %s23, 1
        %s4115 = smul.addr %s4112, 2
        %s4116 = sadd.s32 %s4114, %s4115
        %s4117 = smul.addr %s4116, 8
        %s4118 = scalar_lea.vmem %s5, %s4117
      $region60: #{_model.1} parent=55 // pred_fallthru
        _
    $region56: #{_model.1} parent=5 // pred_fallthru
      _
  $region6: #{_model.1} parent=0 // loop_footer
    %s15 = sadd.s32 1, %s11
  $region7: #{_model.1} parent=0 // loop_footer_branch
    %10 = sbr.rel target = $region3
  $region8: #{_model.1} parent=0 // loop_exit
    _

</llo_original>
